<compile_context>
chip_gen: v5e
topology: v5e:2x2
jax: 0.10.0
libtpu: 0.0.40
codegen_flags: <defaults>
</compile_context>

<pallas_src>
import functools

import jax
import jax.numpy as jnp
from jax import lax
from jax.experimental import pallas as pl
from jax.experimental.pallas import tpu as pltpu


def _vq_kernel(z_ref, et_ref, e_ref, esq_ref, zq_ref, idx_ref, loss_ref, *,
               scale):
    i = pl.program_id(0)
    tm = z_ref.shape[0]
    n = et_ref.shape[1]

    z = z_ref[...].astype(jnp.float32)                                  # (TM, Z)

    # Squared distances up to the per-row constant ||z||^2 term (argmin-invariant):
    #   dist_j = ||e_j||^2 - 2 * z . e_j
    dots = jnp.dot(z, et_ref[...], preferred_element_type=jnp.float32)  # (TM, N)
    dist = esq_ref[...] - 2.0 * dots                                    # (TM, N)

    # argmin over lanes, first occurrence on ties (matches torch.argmin).
    col = lax.broadcasted_iota(jnp.int32, (tm, n), 1)
    min_d = jnp.min(dist, axis=-1, keepdims=True)
    idx = jnp.min(jnp.where(dist == min_d, col, n), axis=-1, keepdims=True)
    idx_ref[...] = idx.astype(jnp.int32)                                # (TM, 1)

    # Embedding lookup as a one-hot matmul -> stays on the MXU.
    onehot = (col == idx).astype(jnp.float32)                           # (TM, N)
    zq = jnp.dot(onehot, e_ref[...], preferred_element_type=jnp.float32)
    zq_ref[...] = zq.astype(zq_ref.dtype)                               # (TM, Z)

    # (1+beta) * mean((z_q - z)^2), accumulated across the grid into the (1,1)
    # output: init at step 0, scale at the last step.
    @pl.when(i == 0)
    def _():
        loss_ref[...] = jnp.zeros_like(loss_ref)

    diff = zq - z
    loss_ref[...] = loss_ref[...] + jnp.sum(diff * diff)

    @pl.when(i == pl.num_programs(0) - 1)
    def _():
        loss_ref[...] = loss_ref[...] * scale


def codebook_forward(z, embedding, beta):
    """Forward of the CodeBook module.

    z:         (B, Z, H, W) float32
    embedding: (N, Z) float32 codebook weights
    returns (z_q (B, Z, H, W), indices (B*H*W,) int32, loss scalar f32)
    """
    b, zd, h, w = z.shape
    n, zd2 = embedding.shape
    assert zd == zd2
    m = b * h * w

    # 'b z h w -> (b h w) z': channels on the lane axis, batch folded into M.
    z_flat = jnp.transpose(z, (0, 2, 3, 1)).reshape(m, zd).astype(jnp.float32)

    e = embedding.astype(jnp.float32)           # (N, Z)  for the one-hot gather
    e_t = e.T                                   # (Z, N)  for the distance matmul
    e_sq = jnp.sum(e * e, axis=1)[None, :]      # (1, N)  precomputed ||e_j||^2

    # Large M tile: amortizes per-grid-step overhead; must divide M.
    tm = m
    for cand in (512, 256, 128, 64, 32, 16, 8):
        if m >= cand and m % cand == 0:
            tm = cand
            break
    assert m % tm == 0
    grid = (m // tm,)

    scale = (1.0 + float(beta)) / float(m * zd)
    kernel = functools.partial(_vq_kernel, scale=scale)

    zq_flat, idx, loss = pl.pallas_call(
        kernel,
        out_shape=(
            jax.ShapeDtypeStruct((m, zd), jnp.float32),   # z_q (flattened)
            jax.ShapeDtypeStruct((m, 1), jnp.int32),      # argmin indices
            jax.ShapeDtypeStruct((1, 1), jnp.float32),    # loss accumulator
        ),
        grid_spec=pltpu.PrefetchScalarGridSpec(
            num_scalar_prefetch=0,
            grid=grid,
            in_specs=[
                pl.BlockSpec((tm, zd), lambda i: (i, 0)),   # z tile
                pl.BlockSpec((zd, n), lambda i: (0, 0)),    # E^T
                pl.BlockSpec((n, zd), lambda i: (0, 0)),    # E
                pl.BlockSpec((1, n), lambda i: (0, 0)),     # ||e||^2 row
            ],
            out_specs=[
                pl.BlockSpec((tm, zd), lambda i: (i, 0)),
                pl.BlockSpec((tm, 1), lambda i: (i, 0)),
                pl.BlockSpec((1, 1), lambda i: (0, 0)),
            ],
        ),
        # The loss output block is revisited every grid step (reduction axis).
        compiler_params=pltpu.CompilerParams(
            dimension_semantics=("arbitrary",)),
    )(z_flat, e_t, e, e_sq)

    z_q = zq_flat.reshape(b, h, w, zd).transpose(0, 3, 1, 2)
    return z_q, idx.reshape(m), loss[0, 0]


# ---------------- pure-JAX reference (for correctness check) ----------------
def _ref_codebook(z, embedding, beta):
    b, zd, h, w = z.shape
    zt = jnp.transpose(z, (0, 2, 3, 1))
    zf = zt.reshape(-1, zd)
    # NOTE: the PyTorch source uses keepdim=True on the embedding-norm sum,
    # which would not broadcast; the intended (1, N) row broadcast is used here.
    dist = (jnp.sum(zf ** 2, axis=1, keepdims=True)
            + jnp.sum(embedding ** 2, axis=1)[None, :]
            - 2.0 * jnp.dot(zf, embedding.T,
                            precision=jax.lax.Precision.HIGHEST))
    idx = jnp.argmin(dist, axis=1).astype(jnp.int32)
    zq = embedding[idx]
    loss = jnp.mean((zq - zf) ** 2) + beta * jnp.mean((zf - zq) ** 2)
    zq_out = zq.reshape(b, h, w, zd).transpose(0, 3, 1, 2)
    return zq_out, idx, loss


if __name__ == "__main__":
    key = jax.random.PRNGKey(0)
    k_codes, k_assign, k_noise = jax.random.split(key, 3)

    B, Z, H, W = 2, 32, 16, 16
    N_CODES = 256
    BETA = 0.25
    M = B * H * W

    # Deterministic test inputs: well-separated codebook, z built as perturbed
    # codebook entries so the nearest-code assignment is numerically unambiguous.
    codes = jax.random.normal(k_codes, (N_CODES, Z), jnp.float32)
    assign = jax.random.randint(k_assign, (M,), 0, N_CODES)
    z_flat = codes[assign] + 0.05 * jax.random.normal(k_noise, (M, Z), jnp.float32)
    z = z_flat.reshape(B, H, W, Z).transpose(0, 3, 1, 2)   # (B, Z, H, W)

    z_q, idx, loss = codebook_forward(z, codes, BETA)
    jax.block_until_ready((z_q, idx, loss))

    z_q_ref, idx_ref, loss_ref = _ref_codebook(z, codes, BETA)

    assert z_q.shape == (B, Z, H, W) and idx.shape == (M,) and loss.shape == ()
    assert jnp.array_equal(idx, idx_ref), int(jnp.sum(idx != idx_ref))
    assert jnp.allclose(z_q, z_q_ref, rtol=1e-4, atol=1e-4), \
        float(jnp.abs(z_q - z_q_ref).max())
    assert jnp.allclose(loss, loss_ref, rtol=1e-4, atol=1e-6), \
        (float(loss), float(loss_ref))
    print("KERNEL_OK")
</pallas_src>

<mosaic_0001>
module attributes {stable_mosaic.version = 11 : i64} {
  func.func @_vq_kernel(%arg0: i32, %arg1: memref<512x32xf32, #tpu.memory_space<vmem>>, %arg2: memref<32x256xf32, #tpu.memory_space<vmem>>, %arg3: memref<256x32xf32, #tpu.memory_space<vmem>>, %arg4: memref<1x256xf32, #tpu.memory_space<vmem>>, %arg5: memref<512x32xf32, #tpu.memory_space<vmem>>, %arg6: memref<512x1xi32, #tpu.memory_space<vmem>>, %arg7: memref<1x1xf32, #tpu.memory_space<vmem>>) attributes {dimension_semantics = [#tpu.dimension_semantics<arbitrary>], iteration_bounds = array<i64: 1>, scalar_prefetch = 0 : i64, scratch_operands = 0 : i64, tpu.core_type = #tpu.core_type<tc>, window_params = [{transform_indices = @transform_0, window_bounds = array<i64: 512, 32>}, {pipeline_mode = #tpu.pipeline_mode<synchronous>, transform_indices = @transform_1, window_bounds = array<i64: 32, 256>}, {pipeline_mode = #tpu.pipeline_mode<synchronous>, transform_indices = @transform_2, window_bounds = array<i64: 256, 32>}, {pipeline_mode = #tpu.pipeline_mode<synchronous>, transform_indices = @transform_3, window_bounds = array<i64: 1, 256>}, {transform_indices = @transform_4, window_bounds = array<i64: 512, 32>}, {transform_indices = @transform_5, window_bounds = array<i64: 512, 1>}, {pipeline_mode = #tpu.pipeline_mode<synchronous>, transform_indices = @transform_6, window_bounds = array<i64: 1, 1>}]} {
    %c0 = arith.constant 0 : index
    %c0_0 = arith.constant 0 : index
    %0 = vector.load %arg1[%c0, %c0_0] : memref<512x32xf32, #tpu.memory_space<vmem>>, vector<512x32xf32>
    %c0_1 = arith.constant 0 : index
    %c0_2 = arith.constant 0 : index
    %1 = vector.load %arg2[%c0_1, %c0_2] : memref<32x256xf32, #tpu.memory_space<vmem>>, vector<32x256xf32>
    %cst = arith.constant dense<0.000000e+00> : vector<512x256xf32>
    %2 = tpu.matmul %0, %1, %cst {dimension_numbers = #tpu.dot_dimension_numbers<[1], [0], [0], [1], [0, 0, 1, 1], [], []>} : vector<512x32xf32>, vector<32x256xf32>, vector<512x256xf32> -> vector<512x256xf32>
    %c0_3 = arith.constant 0 : index
    %c0_4 = arith.constant 0 : index
    %3 = vector.load %arg4[%c0_3, %c0_4] : memref<1x256xf32, #tpu.memory_space<vmem>>, vector<1x256xf32>
    %cst_5 = arith.constant 2.000000e+00 : f32
    %4 = vector.broadcast %cst_5 : f32 to vector<512x256xf32>
    %5 = arith.mulf %4, %2 : vector<512x256xf32>
    %6 = vector.broadcast %3 : vector<1x256xf32> to vector<512x256xf32>
    %7 = arith.subf %6, %5 : vector<512x256xf32>
    %8 = tpu.iota {dimensions = array<i32: 1>} : vector<512x256xi32>
    %cst_6 = arith.constant dense<0x7F800000> : vector<512xf32>
    %9 = vector.multi_reduction <minimumf>, %7, %cst_6 [1] : vector<512x256xf32> to vector<512xf32>
    %10 = vector.shape_cast %9 : vector<512xf32> to vector<512x1xf32>
    %11 = vector.broadcast %10 : vector<512x1xf32> to vector<512x256xf32>
    %12 = arith.cmpf oeq, %7, %11 : vector<512x256xf32>
    %c256_i32 = arith.constant 256 : i32
    %13 = vector.broadcast %c256_i32 : i32 to vector<512x256xi32>
    %14 = arith.select %12, %8, %13 : vector<512x256xi1>, vector<512x256xi32>
    %cst_7 = arith.constant dense<2147483647> : vector<512xi32>
    %15 = vector.multi_reduction <minsi>, %14, %cst_7 [1] : vector<512x256xi32> to vector<512xi32>
    %16 = vector.shape_cast %15 : vector<512xi32> to vector<512x1xi32>
    %c0_8 = arith.constant 0 : index
    %c0_9 = arith.constant 0 : index
    %17 = vector.load %arg6[%c0_8, %c0_9] : memref<512x1xi32, #tpu.memory_space<vmem>>, vector<512x1xi32>
    tpu.vector_store %arg6[%c0_8, %c0_9], %16 {strides = array<i32>} : memref<512x1xi32, #tpu.memory_space<vmem>>, vector<512x1xi32>,
    %18 = vector.broadcast %16 : vector<512x1xi32> to vector<512x256xi32>
    %19 = arith.cmpi eq, %8, %18 : vector<512x256xi32>
    %20 = arith.extui %19 : vector<512x256xi1> to vector<512x256xi32>
    %21 = arith.sitofp %20 : vector<512x256xi32> to vector<512x256xf32>
    %c0_10 = arith.constant 0 : index
    %c0_11 = arith.constant 0 : index
    %22 = vector.load %arg3[%c0_10, %c0_11] : memref<256x32xf32, #tpu.memory_space<vmem>>, vector<256x32xf32>
    %cst_12 = arith.constant dense<0.000000e+00> : vector<512x32xf32>
    %23 = tpu.matmul %21, %22, %cst_12 {dimension_numbers = #tpu.dot_dimension_numbers<[1], [0], [0], [1], [0, 0, 1, 1], [], []>} : vector<512x256xf32>, vector<256x32xf32>, vector<512x32xf32> -> vector<512x32xf32>
    %c0_13 = arith.constant 0 : index
    %c0_14 = arith.constant 0 : index
    %24 = vector.load %arg5[%c0_13, %c0_14] : memref<512x32xf32, #tpu.memory_space<vmem>>, vector<512x32xf32>
    tpu.vector_store %arg5[%c0_13, %c0_14], %23 {strides = array<i32>} : memref<512x32xf32, #tpu.memory_space<vmem>>, vector<512x32xf32>,
    %c0_i32 = arith.constant 0 : i32
    %25 = arith.cmpi eq, %arg0, %c0_i32 : i32
    %26 = arith.extui %25 : i1 to i32
    %c0_i32_15 = arith.constant 0 : i32
    %27 = arith.cmpi ne, %26, %c0_i32_15 : i32
    scf.if %27 {
      %cst_23 = arith.constant 0.000000e+00 : f32
      %41 = vector.broadcast %cst_23 : f32 to vector<1x1xf32>
      %c0_24 = arith.constant 0 : index
      %c0_25 = arith.constant 0 : index
      %42 = vector.load %arg7[%c0_24, %c0_25] : memref<1x1xf32, #tpu.memory_space<vmem>>, vector<1x1xf32>
      tpu.vector_store %arg7[%c0_24, %c0_25], %41 {strides = array<i32>} : memref<1x1xf32, #tpu.memory_space<vmem>>, vector<1x1xf32>,
    } else {
    }
    %28 = arith.subf %23, %0 : vector<512x32xf32>
    %c0_16 = arith.constant 0 : index
    %c0_17 = arith.constant 0 : index
    %29 = vector.load %arg7[%c0_16, %c0_17] : memref<1x1xf32, #tpu.memory_space<vmem>>, vector<1x1xf32>
    %30 = arith.mulf %28, %28 : vector<512x32xf32>
    %31 = vector.shape_cast %30 : vector<512x32xf32> to vector<1x512x32xf32>
    %cst_18 = arith.constant dense<0.000000e+00> : vector<1xf32>
    %32 = vector.multi_reduction <add>, %31, %cst_18 [1, 2] : vector<1x512x32xf32> to vector<1xf32>
    %33 = vector.shape_cast %32 : vector<1xf32> to vector<1x1x1xf32>
    %34 = vector.extract %33[0, 0, 0] : f32 from vector<1x1x1xf32>
    %35 = vector.broadcast %34 : f32 to vector<1x1xf32>
    %36 = arith.addf %29, %35 : vector<1x1xf32>
    %c0_19 = arith.constant 0 : index
    %c0_20 = arith.constant 0 : index
    %37 = vector.load %arg7[%c0_19, %c0_20] : memref<1x1xf32, #tpu.memory_space<vmem>>, vector<1x1xf32>
    tpu.vector_store %arg7[%c0_19, %c0_20], %36 {strides = array<i32>} : memref<1x1xf32, #tpu.memory_space<vmem>>, vector<1x1xf32>,
    %c0_i32_21 = arith.constant 0 : i32
    %38 = arith.cmpi eq, %arg0, %c0_i32_21 : i32
    %39 = arith.extui %38 : i1 to i32
    %c0_i32_22 = arith.constant 0 : i32
    %40 = arith.cmpi ne, %39, %c0_i32_22 : i32
    scf.if %40 {
      %c0_23 = arith.constant 0 : index
      %c0_24 = arith.constant 0 : index
      %41 = vector.load %arg7[%c0_23, %c0_24] : memref<1x1xf32, #tpu.memory_space<vmem>>, vector<1x1xf32>
      %cst_25 = arith.constant 7.62939453E-5 : f32
      %42 = vector.broadcast %cst_25 : f32 to vector<1x1xf32>
      %43 = arith.mulf %41, %42 : vector<1x1xf32>
      %c0_26 = arith.constant 0 : index
      %c0_27 = arith.constant 0 : index
      %44 = vector.load %arg7[%c0_26, %c0_27] : memref<1x1xf32, #tpu.memory_space<vmem>>, vector<1x1xf32>
      tpu.vector_store %arg7[%c0_26, %c0_27], %43 {strides = array<i32>} : memref<1x1xf32, #tpu.memory_space<vmem>>, vector<1x1xf32>,
    } else {
    }
    return
  }
  func.func @transform_0(%arg0: i32) -> (i32, i32) {
    %c0_i32 = arith.constant 0 : i32
    %c0_i32_0 = arith.constant 0 : i32
    return %arg0, %c0_i32 : i32, i32
  }
  func.func @transform_1(%arg0: i32) -> (i32, i32) {
    %c0_i32 = arith.constant 0 : i32
    %c0_i32_0 = arith.constant 0 : i32
    %c0_i32_1 = arith.constant 0 : i32
    return %c0_i32, %c0_i32_0 : i32, i32
  }
  func.func @transform_2(%arg0: i32) -> (i32, i32) {
    %c0_i32 = arith.constant 0 : i32
    %c0_i32_0 = arith.constant 0 : i32
    %c0_i32_1 = arith.constant 0 : i32
    return %c0_i32, %c0_i32_0 : i32, i32
  }
  func.func @transform_3(%arg0: i32) -> (i32, i32) {
    %c0_i32 = arith.constant 0 : i32
    %c0_i32_0 = arith.constant 0 : i32
    %c0_i32_1 = arith.constant 0 : i32
    return %c0_i32, %c0_i32_0 : i32, i32
  }
  func.func @transform_4(%arg0: i32) -> (i32, i32) {
    %c0_i32 = arith.constant 0 : i32
    %c0_i32_0 = arith.constant 0 : i32
    return %arg0, %c0_i32 : i32, i32
  }
  func.func @transform_5(%arg0: i32) -> (i32, i32) {
    %c0_i32 = arith.constant 0 : i32
    %c0_i32_0 = arith.constant 0 : i32
    return %arg0, %c0_i32 : i32, i32
  }
  func.func @transform_6(%arg0: i32) -> (i32, i32) {
    %c0_i32 = arith.constant 0 : i32
    %c0_i32_0 = arith.constant 0 : i32
    %c0_i32_1 = arith.constant 0 : i32
    return %c0_i32, %c0_i32_0 : i32, i32
  }
}

</mosaic_0001>

<llo_original>
// kernel: tpu_custom_call.1
$region0: #{tpu_custom_call.1}
  #allocation0 [shape = 'u32[]', space=smem, size = 0x4, offset = 0x4, fixed_abs, tag = 'smem constant byte address 0x4 - core index']
  #allocation1 [shape = 'u32[72,128]{1,0:T(1,128)}', space=vmem, size = 0x9000, scoped, tag = 'internal scratch']
  %s0 = inlined_call_operand.vmem [shape: f32[512,32], index: 0, kind: input, shape index: {}]
  %s1 = inlined_call_operand.vmem [shape: f32[32,256], index: 1, kind: input, shape index: {}]
  %s2 = inlined_call_operand.vmem [shape: f32[256,32], index: 2, kind: input, shape index: {}]
  %s3 = inlined_call_operand.vmem [shape: f32[1,256], index: 3, kind: input, shape index: {}]
  %s4 = inlined_call_operand.vmem [shape: f32[512,32], index: 4, kind: output, shape index: {0}]
  %s5 = inlined_call_operand.vmem [shape: s32[512,1], index: 5, kind: output, shape index: {1}]
  %s6 = inlined_call_operand.hbm [shape: f32[1,1], index: 6, kind: output, shape index: {2}]
  %7 = xla_tuple %s4, %s5, %s6
  %s8 = sld [smem:[#allocation0]]
  $region50: #{tpu_custom_call.1} parent=0
    _
  %s10 = ssub.s32 1, %s8
  %s11 = scalar_select 0, %s10, %s8
  $region1: #{tpu_custom_call.1} parent=0
    #allocation2 [shape = 'u8[512]{0}', space=vmem, size = 0x400, scoped, tag = 'output window, operand 2, single buffered']
    #allocation3 [shape = 's32[1]{0}', space=sflag, size = 0x4, scoped, tag = 'scoped memory for tpu_custom_call.1']
    %12 = vsyncpa [#allocation3], 0
    // Predicated region
    $region2: #{tpu_custom_call.1} parent=1 // pred_check
      _
    $region3: #{tpu_custom_call.1} parent=1 // pred_check_branch
      %14 = sbr.rel (0) target = $region5
    $region4: #{tpu_custom_call.1} parent=1 // pred_region
      _
    $region5: #{tpu_custom_call.1} parent=1 // pred_fallthru
      _
    // Predicated region
    $region6: #{tpu_custom_call.1} parent=1 // pred_check
      _
    $region7: #{tpu_custom_call.1} parent=1 // pred_check_branch
      %16 = sbr.rel (0) target = $region9
    $region8: #{tpu_custom_call.1} parent=1 // pred_region
      _
    $region9: #{tpu_custom_call.1} parent=1 // pred_fallthru
      _
    // Predicated region
    $region10: #{tpu_custom_call.1} parent=1 // pred_check
      _
    $region11: #{tpu_custom_call.1} parent=1 // pred_check_branch
      %18 = sbr.rel (0) target = $region13
    $region12: #{tpu_custom_call.1} parent=1 // pred_region
      _
    $region13: #{tpu_custom_call.1} parent=1 // pred_fallthru
      _
    // Predicated region
    $region14: #{tpu_custom_call.1} parent=1 // pred_check
      _
    $region15: #{tpu_custom_call.1} parent=1 // pred_check_branch
      %20 = sbr.rel (0) target = $region17
    $region16: #{tpu_custom_call.1} parent=1 // pred_region
      _
    $region17: #{tpu_custom_call.1} parent=1 // pred_fallthru
      _
    %v21 = vld [vmem:[%s0] sm:$0xff]
    %v22 = vld [vmem:[%s0 + $0x8] sm:$0xff]
    %v23 = vld [vmem:[%s0 + $0x10] sm:$0xff]
    %v24 = vld [vmem:[%s0 + $0x18] sm:$0xff]
    %v25 = vld [vmem:[%s0 + $0x20] sm:$0xff]
    %v26 = vld [vmem:[%s0 + $0x28] sm:$0xff]
    %v27 = vld [vmem:[%s0 + $0x30] sm:$0xff]
    %v28 = vld [vmem:[%s0 + $0x38] sm:$0xff]
    %v29 = vld [vmem:[%s0 + $0x40] sm:$0xff]
    %v30 = vld [vmem:[%s0 + $0x48] sm:$0xff]
    %v31 = vld [vmem:[%s0 + $0x50] sm:$0xff]
    %v32 = vld [vmem:[%s0 + $0x58] sm:$0xff]
    %v33 = vld [vmem:[%s0 + $0x60] sm:$0xff]
    %v34 = vld [vmem:[%s0 + $0x68] sm:$0xff]
    %v35 = vld [vmem:[%s0 + $0x70] sm:$0xff]
    %v36 = vld [vmem:[%s0 + $0x78] sm:$0xff]
    %v37 = vld [vmem:[%s0 + $0x80] sm:$0xff]
    %v38 = vld [vmem:[%s0 + $0x88] sm:$0xff]
    %v39 = vld [vmem:[%s0 + $0x90] sm:$0xff]
    %v40 = vld [vmem:[%s0 + $0x98] sm:$0xff]
    %v41 = vld [vmem:[%s0 + $0xa0] sm:$0xff]
    %v42 = vld [vmem:[%s0 + $0xa8] sm:$0xff]
    %v43 = vld [vmem:[%s0 + $0xb0] sm:$0xff]
    %v44 = vld [vmem:[%s0 + $0xb8] sm:$0xff]
    %v45 = vld [vmem:[%s0 + $0xc0] sm:$0xff]
    %v46 = vld [vmem:[%s0 + $0xc8] sm:$0xff]
    %v47 = vld [vmem:[%s0 + $0xd0] sm:$0xff]
    %v48 = vld [vmem:[%s0 + $0xd8] sm:$0xff]
    %v49 = vld [vmem:[%s0 + $0xe0] sm:$0xff]
    %v50 = vld [vmem:[%s0 + $0xe8] sm:$0xff]
    %v51 = vld [vmem:[%s0 + $0xf0] sm:$0xff]
    %v52 = vld [vmem:[%s0 + $0xf8] sm:$0xff]
    %v53 = vld [vmem:[%s0 + $0x100] sm:$0xff]
    %v54 = vld [vmem:[%s0 + $0x108] sm:$0xff]
    %v55 = vld [vmem:[%s0 + $0x110] sm:$0xff]
    %v56 = vld [vmem:[%s0 + $0x118] sm:$0xff]
    %v57 = vld [vmem:[%s0 + $0x120] sm:$0xff]
    %v58 = vld [vmem:[%s0 + $0x128] sm:$0xff]
    %v59 = vld [vmem:[%s0 + $0x130] sm:$0xff]
    %v60 = vld [vmem:[%s0 + $0x138] sm:$0xff]
    %v61 = vld [vmem:[%s0 + $0x140] sm:$0xff]
    %v62 = vld [vmem:[%s0 + $0x148] sm:$0xff]
    %v63 = vld [vmem:[%s0 + $0x150] sm:$0xff]
    %v64 = vld [vmem:[%s0 + $0x158] sm:$0xff]
    %v65 = vld [vmem:[%s0 + $0x160] sm:$0xff]
    %v66 = vld [vmem:[%s0 + $0x168] sm:$0xff]
    %v67 = vld [vmem:[%s0 + $0x170] sm:$0xff]
    %v68 = vld [vmem:[%s0 + $0x178] sm:$0xff]
    %v69 = vld [vmem:[%s0 + $0x180] sm:$0xff]
    %v70 = vld [vmem:[%s0 + $0x188] sm:$0xff]
    %v71 = vld [vmem:[%s0 + $0x190] sm:$0xff]
    %v72 = vld [vmem:[%s0 + $0x198] sm:$0xff]
    %v73 = vld [vmem:[%s0 + $0x1a0] sm:$0xff]
    %v74 = vld [vmem:[%s0 + $0x1a8] sm:$0xff]
    %v75 = vld [vmem:[%s0 + $0x1b0] sm:$0xff]
    %v76 = vld [vmem:[%s0 + $0x1b8] sm:$0xff]
    %v77 = vld [vmem:[%s0 + $0x1c0] sm:$0xff]
    %v78 = vld [vmem:[%s0 + $0x1c8] sm:$0xff]
    %v79 = vld [vmem:[%s0 + $0x1d0] sm:$0xff]
    %v80 = vld [vmem:[%s0 + $0x1d8] sm:$0xff]
    %v81 = vld [vmem:[%s0 + $0x1e0] sm:$0xff]
    %v82 = vld [vmem:[%s0 + $0x1e8] sm:$0xff]
    %v83 = vld [vmem:[%s0 + $0x1f0] sm:$0xff]
    %v84 = vld [vmem:[%s0 + $0x1f8] sm:$0xff]
    %v85 = vld [vmem:[%s1] sm:$0xff]
    %v86 = vld [vmem:[%s1 + $0x8] sm:$0xff]
    %v87 = vld [vmem:[%s1 + $0x10] sm:$0xff]
    %v88 = vld [vmem:[%s1 + $0x18] sm:$0xff]
    %v89 = vld [vmem:[%s1 + $0x20] sm:$0xff]
    %v90 = vld [vmem:[%s1 + $0x28] sm:$0xff]
    %v91 = vld [vmem:[%s1 + $0x30] sm:$0xff]
    %v92 = vld [vmem:[%s1 + $0x38] sm:$0xff]
    %vm93 = vcmask 261120
    %v95 = vsel %vm93, %v21, 0
    %v98 = vsel %vm93, %v22, 0
    %v101 = vsel %vm93, %v23, 0
    %v104 = vsel %vm93, %v24, 0
    %v107 = vsel %vm93, %v25, 0
    %v110 = vsel %vm93, %v26, 0
    %v113 = vsel %vm93, %v27, 0
    %v116 = vsel %vm93, %v28, 0
    %v119 = vsel %vm93, %v29, 0
    %v122 = vsel %vm93, %v30, 0
    %v125 = vsel %vm93, %v31, 0
    %v128 = vsel %vm93, %v32, 0
    %v131 = vsel %vm93, %v33, 0
    %v134 = vsel %vm93, %v34, 0
    %v137 = vsel %vm93, %v35, 0
    %v140 = vsel %vm93, %v36, 0
    %v143 = vsel %vm93, %v37, 0
    %v146 = vsel %vm93, %v38, 0
    %v149 = vsel %vm93, %v39, 0
    %v152 = vsel %vm93, %v40, 0
    %v155 = vsel %vm93, %v41, 0
    %v158 = vsel %vm93, %v42, 0
    %v161 = vsel %vm93, %v43, 0
    %v164 = vsel %vm93, %v44, 0
    %v167 = vsel %vm93, %v45, 0
    %v170 = vsel %vm93, %v46, 0
    %v173 = vsel %vm93, %v47, 0
    %v176 = vsel %vm93, %v48, 0
    %v179 = vsel %vm93, %v49, 0
    %v182 = vsel %vm93, %v50, 0
    %v185 = vsel %vm93, %v51, 0
    %v188 = vsel %vm93, %v52, 0
    %v191 = vsel %vm93, %v53, 0
    %v194 = vsel %vm93, %v54, 0
    %v197 = vsel %vm93, %v55, 0
    %v200 = vsel %vm93, %v56, 0
    %v203 = vsel %vm93, %v57, 0
    %v206 = vsel %vm93, %v58, 0
    %v209 = vsel %vm93, %v59, 0
    %v212 = vsel %vm93, %v60, 0
    %v215 = vsel %vm93, %v61, 0
    %v218 = vsel %vm93, %v62, 0
    %v221 = vsel %vm93, %v63, 0
    %v224 = vsel %vm93, %v64, 0
    %v227 = vsel %vm93, %v65, 0
    %v230 = vsel %vm93, %v66, 0
    %v233 = vsel %vm93, %v67, 0
    %v236 = vsel %vm93, %v68, 0
    %v239 = vsel %vm93, %v69, 0
    %v242 = vsel %vm93, %v70, 0
    %v245 = vsel %vm93, %v71, 0
    %v248 = vsel %vm93, %v72, 0
    %v251 = vsel %vm93, %v73, 0
    %v254 = vsel %vm93, %v74, 0
    %v257 = vsel %vm93, %v75, 0
    %v260 = vsel %vm93, %v76, 0
    %v263 = vsel %vm93, %v77, 0
    %v266 = vsel %vm93, %v78, 0
    %v269 = vsel %vm93, %v79, 0
    %v272 = vsel %vm93, %v80, 0
    %v275 = vsel %vm93, %v81, 0
    %v278 = vsel %vm93, %v82, 0
    %v281 = vsel %vm93, %v83, 0
    %v284 = vsel %vm93, %v84, 0
    %286 = vmatpush.msra.mxu0 0.0
    %287 = vmatpush.msra.mxu0 0.0
    %288 = vmatpush.msra.mxu0 0.0
    %289 = vmatpush.msra.mxu0 0.0
    %290 = vmatpush.msra.mxu0 0.0
    %291 = vmatpush.msra.mxu0 0.0
    %292 = vmatpush.msra.mxu0 0.0
    %293 = vmatpush.msra.mxu0 0.0
    %294 = vmatpush.msra.mxu0 0.0
    %295 = vmatpush.msra.mxu0 0.0
    %296 = vmatpush.msra.mxu0 0.0
    %297 = vmatpush.msra.mxu0 0.0
    %298 = vmatpush.msra.mxu0 %v91
    %299 = vmatpush.msra.mxu0 %v89
    %300 = vmatpush.msra.mxu0 %v87
    %301 = vmatpush.msra.mxu0 %v85
    %302 = vmatmul.f32.gmra.mxu0 %v95
    %v303 = vpop.f32.mrf.mxu0
    %v304 = vadd.f32 0.0, %v303
    %305 = vmatmul.f32.gmra.mxu0 %v98
    %v306 = vpop.f32.mrf.mxu0
    %v307 = vadd.f32 0.0, %v306
    %308 = vmatmul.f32.gmra.mxu0 %v101
    %v309 = vpop.f32.mrf.mxu0
    %v310 = vadd.f32 0.0, %v309
    %311 = vmatmul.f32.gmra.mxu0 %v104
    %v312 = vpop.f32.mrf.mxu0
    %v313 = vadd.f32 0.0, %v312
    %314 = vmatmul.f32.gmra.mxu0 %v107
    %v315 = vpop.f32.mrf.mxu0
    %v316 = vadd.f32 0.0, %v315
    %317 = vmatmul.f32.gmra.mxu0 %v110
    %v318 = vpop.f32.mrf.mxu0
    %v319 = vadd.f32 0.0, %v318
    %320 = vmatmul.f32.gmra.mxu0 %v113
    %v321 = vpop.f32.mrf.mxu0
    %v322 = vadd.f32 0.0, %v321
    %323 = vmatmul.f32.gmra.mxu0 %v116
    %v324 = vpop.f32.mrf.mxu0
    %v325 = vadd.f32 0.0, %v324
    %326 = vmatmul.f32.gmra.mxu0 %v119
    %v327 = vpop.f32.mrf.mxu0
    %v328 = vadd.f32 0.0, %v327
    %329 = vmatmul.f32.gmra.mxu0 %v122
    %v330 = vpop.f32.mrf.mxu0
    %v331 = vadd.f32 0.0, %v330
    %332 = vmatmul.f32.gmra.mxu0 %v125
    %v333 = vpop.f32.mrf.mxu0
    %v334 = vadd.f32 0.0, %v333
    %335 = vmatmul.f32.gmra.mxu0 %v128
    %v336 = vpop.f32.mrf.mxu0
    %v337 = vadd.f32 0.0, %v336
    %338 = vmatmul.f32.gmra.mxu0 %v131
    %v339 = vpop.f32.mrf.mxu0
    %v340 = vadd.f32 0.0, %v339
    %341 = vmatmul.f32.gmra.mxu0 %v134
    %v342 = vpop.f32.mrf.mxu0
    %v343 = vadd.f32 0.0, %v342
    %344 = vmatmul.f32.gmra.mxu0 %v137
    %v345 = vpop.f32.mrf.mxu0
    %v346 = vadd.f32 0.0, %v345
    %347 = vmatmul.f32.gmra.mxu0 %v140
    %v348 = vpop.f32.mrf.mxu0
    %v349 = vadd.f32 0.0, %v348
    %350 = vmatmul.f32.gmra.mxu0 %v143
    %v351 = vpop.f32.mrf.mxu0
    %v352 = vadd.f32 0.0, %v351
    %353 = vmatmul.f32.gmra.mxu0 %v146
    %v354 = vpop.f32.mrf.mxu0
    %v355 = vadd.f32 0.0, %v354
    %356 = vmatmul.f32.gmra.mxu0 %v149
    %v357 = vpop.f32.mrf.mxu0
    %v358 = vadd.f32 0.0, %v357
    %359 = vmatmul.f32.gmra.mxu0 %v152
    %v360 = vpop.f32.mrf.mxu0
    %v361 = vadd.f32 0.0, %v360
    %362 = vmatmul.f32.gmra.mxu0 %v155
    %v363 = vpop.f32.mrf.mxu0
    %v364 = vadd.f32 0.0, %v363
    %365 = vmatmul.f32.gmra.mxu0 %v158
    %v366 = vpop.f32.mrf.mxu0
    %v367 = vadd.f32 0.0, %v366
    %368 = vmatmul.f32.gmra.mxu0 %v161
    %v369 = vpop.f32.mrf.mxu0
    %v370 = vadd.f32 0.0, %v369
    %371 = vmatmul.f32.gmra.mxu0 %v164
    %v372 = vpop.f32.mrf.mxu0
    %v373 = vadd.f32 0.0, %v372
    %374 = vmatmul.f32.gmra.mxu0 %v167
    %v375 = vpop.f32.mrf.mxu0
    %v376 = vadd.f32 0.0, %v375
    %377 = vmatmul.f32.gmra.mxu0 %v170
    %v378 = vpop.f32.mrf.mxu0
    %v379 = vadd.f32 0.0, %v378
    %380 = vmatmul.f32.gmra.mxu0 %v173
    %v381 = vpop.f32.mrf.mxu0
    %v382 = vadd.f32 0.0, %v381
    %383 = vmatmul.f32.gmra.mxu0 %v176
    %v384 = vpop.f32.mrf.mxu0
    %v385 = vadd.f32 0.0, %v384
    %386 = vmatmul.f32.gmra.mxu0 %v179
    %v387 = vpop.f32.mrf.mxu0
    %v388 = vadd.f32 0.0, %v387
    %389 = vmatmul.f32.gmra.mxu0 %v182
    %v390 = vpop.f32.mrf.mxu0
    %v391 = vadd.f32 0.0, %v390
    %392 = vmatmul.f32.gmra.mxu0 %v185
    %v393 = vpop.f32.mrf.mxu0
    %v394 = vadd.f32 0.0, %v393
    %395 = vmatmul.f32.gmra.mxu0 %v188
    %v396 = vpop.f32.mrf.mxu0
    %v397 = vadd.f32 0.0, %v396
    %398 = vmatmul.f32.gmra.mxu0 %v191
    %v399 = vpop.f32.mrf.mxu0
    %v400 = vadd.f32 0.0, %v399
    %401 = vmatmul.f32.gmra.mxu0 %v194
    %v402 = vpop.f32.mrf.mxu0
    %v403 = vadd.f32 0.0, %v402
    %404 = vmatmul.f32.gmra.mxu0 %v197
    %v405 = vpop.f32.mrf.mxu0
    %v406 = vadd.f32 0.0, %v405
    %407 = vmatmul.f32.gmra.mxu0 %v200
    %v408 = vpop.f32.mrf.mxu0
    %v409 = vadd.f32 0.0, %v408
    %410 = vmatmul.f32.gmra.mxu0 %v203
    %v411 = vpop.f32.mrf.mxu0
    %v412 = vadd.f32 0.0, %v411
    %413 = vmatmul.f32.gmra.mxu0 %v206
    %v414 = vpop.f32.mrf.mxu0
    %v415 = vadd.f32 0.0, %v414
    %416 = vmatmul.f32.gmra.mxu0 %v209
    %v417 = vpop.f32.mrf.mxu0
    %v418 = vadd.f32 0.0, %v417
    %419 = vmatmul.f32.gmra.mxu0 %v212
    %v420 = vpop.f32.mrf.mxu0
    %v421 = vadd.f32 0.0, %v420
    %422 = vmatmul.f32.gmra.mxu0 %v215
    %v423 = vpop.f32.mrf.mxu0
    %v424 = vadd.f32 0.0, %v423
    %425 = vmatmul.f32.gmra.mxu0 %v218
    %v426 = vpop.f32.mrf.mxu0
    %v427 = vadd.f32 0.0, %v426
    %428 = vmatmul.f32.gmra.mxu0 %v221
    %v429 = vpop.f32.mrf.mxu0
    %v430 = vadd.f32 0.0, %v429
    %431 = vmatmul.f32.gmra.mxu0 %v224
    %v432 = vpop.f32.mrf.mxu0
    %v433 = vadd.f32 0.0, %v432
    %434 = vmatmul.f32.gmra.mxu0 %v227
    %v435 = vpop.f32.mrf.mxu0
    %v436 = vadd.f32 0.0, %v435
    %437 = vmatmul.f32.gmra.mxu0 %v230
    %v438 = vpop.f32.mrf.mxu0
    %v439 = vadd.f32 0.0, %v438
    %440 = vmatmul.f32.gmra.mxu0 %v233
    %v441 = vpop.f32.mrf.mxu0
    %v442 = vadd.f32 0.0, %v441
    %443 = vmatmul.f32.gmra.mxu0 %v236
    %v444 = vpop.f32.mrf.mxu0
    %v445 = vadd.f32 0.0, %v444
    %446 = vmatmul.f32.gmra.mxu0 %v239
    %v447 = vpop.f32.mrf.mxu0
    %v448 = vadd.f32 0.0, %v447
    %449 = vmatmul.f32.gmra.mxu0 %v242
    %v450 = vpop.f32.mrf.mxu0
    %v451 = vadd.f32 0.0, %v450
    %452 = vmatmul.f32.gmra.mxu0 %v245
    %v453 = vpop.f32.mrf.mxu0
    %v454 = vadd.f32 0.0, %v453
    %455 = vmatmul.f32.gmra.mxu0 %v248
    %v456 = vpop.f32.mrf.mxu0
    %v457 = vadd.f32 0.0, %v456
    %458 = vmatmul.f32.gmra.mxu0 %v251
    %v459 = vpop.f32.mrf.mxu0
    %v460 = vadd.f32 0.0, %v459
    %461 = vmatmul.f32.gmra.mxu0 %v254
    %v462 = vpop.f32.mrf.mxu0
    %v463 = vadd.f32 0.0, %v462
    %464 = vmatmul.f32.gmra.mxu0 %v257
    %v465 = vpop.f32.mrf.mxu0
    %v466 = vadd.f32 0.0, %v465
    %467 = vmatmul.f32.gmra.mxu0 %v260
    %v468 = vpop.f32.mrf.mxu0
    %v469 = vadd.f32 0.0, %v468
    %470 = vmatmul.f32.gmra.mxu0 %v263
    %v471 = vpop.f32.mrf.mxu0
    %v472 = vadd.f32 0.0, %v471
    %473 = vmatmul.f32.gmra.mxu0 %v266
    %v474 = vpop.f32.mrf.mxu0
    %v475 = vadd.f32 0.0, %v474
    %476 = vmatmul.f32.gmra.mxu0 %v269
    %v477 = vpop.f32.mrf.mxu0
    %v478 = vadd.f32 0.0, %v477
    %479 = vmatmul.f32.gmra.mxu0 %v272
    %v480 = vpop.f32.mrf.mxu0
    %v481 = vadd.f32 0.0, %v480
    %482 = vmatmul.f32.gmra.mxu0 %v275
    %v483 = vpop.f32.mrf.mxu0
    %v484 = vadd.f32 0.0, %v483
    %485 = vmatmul.f32.gmra.mxu0 %v278
    %v486 = vpop.f32.mrf.mxu0
    %v487 = vadd.f32 0.0, %v486
    %488 = vmatmul.f32.gmra.mxu0 %v281
    %v489 = vpop.f32.mrf.mxu0
    %v490 = vadd.f32 0.0, %v489
    %491 = vmatmul.f32.gmra.mxu0 %v284
    %v492 = vpop.f32.mrf.mxu0
    %v493 = vadd.f32 0.0, %v492
    %494 = vdwg.mxu0
    %495 = vmatpush.msra.mxu0 0.0
    %496 = vmatpush.msra.mxu0 0.0
    %497 = vmatpush.msra.mxu0 0.0
    %498 = vmatpush.msra.mxu0 0.0
    %499 = vmatpush.msra.mxu0 0.0
    %500 = vmatpush.msra.mxu0 0.0
    %501 = vmatpush.msra.mxu0 0.0
    %502 = vmatpush.msra.mxu0 0.0
    %503 = vmatpush.msra.mxu0 0.0
    %504 = vmatpush.msra.mxu0 0.0
    %505 = vmatpush.msra.mxu0 0.0
    %506 = vmatpush.msra.mxu0 0.0
    %507 = vmatpush.msra.mxu0 %v92
    %508 = vmatpush.msra.mxu0 %v90
    %509 = vmatpush.msra.mxu0 %v88
    %510 = vmatpush.msra.mxu0 %v86
    %511 = vmatmul.f32.gmra.mxu0 %v95
    %v512 = vpop.f32.mrf.mxu0
    %v513 = vadd.f32 0.0, %v512
    %514 = vmatmul.f32.gmra.mxu0 %v98
    %v515 = vpop.f32.mrf.mxu0
    %v516 = vadd.f32 0.0, %v515
    %517 = vmatmul.f32.gmra.mxu0 %v101
    %v518 = vpop.f32.mrf.mxu0
    %v519 = vadd.f32 0.0, %v518
    %520 = vmatmul.f32.gmra.mxu0 %v104
    %v521 = vpop.f32.mrf.mxu0
    %v522 = vadd.f32 0.0, %v521
    %523 = vmatmul.f32.gmra.mxu0 %v107
    %v524 = vpop.f32.mrf.mxu0
    %v525 = vadd.f32 0.0, %v524
    %526 = vmatmul.f32.gmra.mxu0 %v110
    %v527 = vpop.f32.mrf.mxu0
    %v528 = vadd.f32 0.0, %v527
    %529 = vmatmul.f32.gmra.mxu0 %v113
    %v530 = vpop.f32.mrf.mxu0
    %v531 = vadd.f32 0.0, %v530
    %532 = vmatmul.f32.gmra.mxu0 %v116
    %v533 = vpop.f32.mrf.mxu0
    %v534 = vadd.f32 0.0, %v533
    %535 = vmatmul.f32.gmra.mxu0 %v119
    %v536 = vpop.f32.mrf.mxu0
    %v537 = vadd.f32 0.0, %v536
    %538 = vmatmul.f32.gmra.mxu0 %v122
    %v539 = vpop.f32.mrf.mxu0
    %v540 = vadd.f32 0.0, %v539
    %541 = vmatmul.f32.gmra.mxu0 %v125
    %v542 = vpop.f32.mrf.mxu0
    %v543 = vadd.f32 0.0, %v542
    %544 = vmatmul.f32.gmra.mxu0 %v128
    %v545 = vpop.f32.mrf.mxu0
    %v546 = vadd.f32 0.0, %v545
    %547 = vmatmul.f32.gmra.mxu0 %v131
    %v548 = vpop.f32.mrf.mxu0
    %v549 = vadd.f32 0.0, %v548
    %550 = vmatmul.f32.gmra.mxu0 %v134
    %v551 = vpop.f32.mrf.mxu0
    %v552 = vadd.f32 0.0, %v551
    %553 = vmatmul.f32.gmra.mxu0 %v137
    %v554 = vpop.f32.mrf.mxu0
    %v555 = vadd.f32 0.0, %v554
    %556 = vmatmul.f32.gmra.mxu0 %v140
    %v557 = vpop.f32.mrf.mxu0
    %v558 = vadd.f32 0.0, %v557
    %559 = vmatmul.f32.gmra.mxu0 %v143
    %v560 = vpop.f32.mrf.mxu0
    %v561 = vadd.f32 0.0, %v560
    %562 = vmatmul.f32.gmra.mxu0 %v146
    %v563 = vpop.f32.mrf.mxu0
    %v564 = vadd.f32 0.0, %v563
    %565 = vmatmul.f32.gmra.mxu0 %v149
    %v566 = vpop.f32.mrf.mxu0
    %v567 = vadd.f32 0.0, %v566
    %568 = vmatmul.f32.gmra.mxu0 %v152
    %v569 = vpop.f32.mrf.mxu0
    %v570 = vadd.f32 0.0, %v569
    %571 = vmatmul.f32.gmra.mxu0 %v155
    %v572 = vpop.f32.mrf.mxu0
    %v573 = vadd.f32 0.0, %v572
    %574 = vmatmul.f32.gmra.mxu0 %v158
    %v575 = vpop.f32.mrf.mxu0
    %v576 = vadd.f32 0.0, %v575
    %577 = vmatmul.f32.gmra.mxu0 %v161
    %v578 = vpop.f32.mrf.mxu0
    %v579 = vadd.f32 0.0, %v578
    %580 = vmatmul.f32.gmra.mxu0 %v164
    %v581 = vpop.f32.mrf.mxu0
    %v582 = vadd.f32 0.0, %v581
    %583 = vmatmul.f32.gmra.mxu0 %v167
    %v584 = vpop.f32.mrf.mxu0
    %v585 = vadd.f32 0.0, %v584
    %586 = vmatmul.f32.gmra.mxu0 %v170
    %v587 = vpop.f32.mrf.mxu0
    %v588 = vadd.f32 0.0, %v587
    %589 = vmatmul.f32.gmra.mxu0 %v173
    %v590 = vpop.f32.mrf.mxu0
    %v591 = vadd.f32 0.0, %v590
    %592 = vmatmul.f32.gmra.mxu0 %v176
    %v593 = vpop.f32.mrf.mxu0
    %v594 = vadd.f32 0.0, %v593
    %595 = vmatmul.f32.gmra.mxu0 %v179
    %v596 = vpop.f32.mrf.mxu0
    %v597 = vadd.f32 0.0, %v596
    %598 = vmatmul.f32.gmra.mxu0 %v182
    %v599 = vpop.f32.mrf.mxu0
    %v600 = vadd.f32 0.0, %v599
    %601 = vmatmul.f32.gmra.mxu0 %v185
    %v602 = vpop.f32.mrf.mxu0
    %v603 = vadd.f32 0.0, %v602
    %604 = vmatmul.f32.gmra.mxu0 %v188
    %v605 = vpop.f32.mrf.mxu0
    %v606 = vadd.f32 0.0, %v605
    %607 = vmatmul.f32.gmra.mxu0 %v191
    %v608 = vpop.f32.mrf.mxu0
    %v609 = vadd.f32 0.0, %v608
    %610 = vmatmul.f32.gmra.mxu0 %v194
    %v611 = vpop.f32.mrf.mxu0
    %v612 = vadd.f32 0.0, %v611
    %613 = vmatmul.f32.gmra.mxu0 %v197
    %v614 = vpop.f32.mrf.mxu0
    %v615 = vadd.f32 0.0, %v614
    %616 = vmatmul.f32.gmra.mxu0 %v200
    %v617 = vpop.f32.mrf.mxu0
    %v618 = vadd.f32 0.0, %v617
    %619 = vmatmul.f32.gmra.mxu0 %v203
    %v620 = vpop.f32.mrf.mxu0
    %v621 = vadd.f32 0.0, %v620
    %622 = vmatmul.f32.gmra.mxu0 %v206
    %v623 = vpop.f32.mrf.mxu0
    %v624 = vadd.f32 0.0, %v623
    %625 = vmatmul.f32.gmra.mxu0 %v209
    %v626 = vpop.f32.mrf.mxu0
    %v627 = vadd.f32 0.0, %v626
    %628 = vmatmul.f32.gmra.mxu0 %v212
    %v629 = vpop.f32.mrf.mxu0
    %v630 = vadd.f32 0.0, %v629
    %631 = vmatmul.f32.gmra.mxu0 %v215
    %v632 = vpop.f32.mrf.mxu0
    %v633 = vadd.f32 0.0, %v632
    %634 = vmatmul.f32.gmra.mxu0 %v218
    %v635 = vpop.f32.mrf.mxu0
    %v636 = vadd.f32 0.0, %v635
    %637 = vmatmul.f32.gmra.mxu0 %v221
    %v638 = vpop.f32.mrf.mxu0
    %v639 = vadd.f32 0.0, %v638
    %640 = vmatmul.f32.gmra.mxu0 %v224
    %v641 = vpop.f32.mrf.mxu0
    %v642 = vadd.f32 0.0, %v641
    %643 = vmatmul.f32.gmra.mxu0 %v227
    %v644 = vpop.f32.mrf.mxu0
    %v645 = vadd.f32 0.0, %v644
    %646 = vmatmul.f32.gmra.mxu0 %v230
    %v647 = vpop.f32.mrf.mxu0
    %v648 = vadd.f32 0.0, %v647
    %649 = vmatmul.f32.gmra.mxu0 %v233
    %v650 = vpop.f32.mrf.mxu0
    %v651 = vadd.f32 0.0, %v650
    %652 = vmatmul.f32.gmra.mxu0 %v236
    %v653 = vpop.f32.mrf.mxu0
    %v654 = vadd.f32 0.0, %v653
    %655 = vmatmul.f32.gmra.mxu0 %v239
    %v656 = vpop.f32.mrf.mxu0
    %v657 = vadd.f32 0.0, %v656
    %658 = vmatmul.f32.gmra.mxu0 %v242
    %v659 = vpop.f32.mrf.mxu0
    %v660 = vadd.f32 0.0, %v659
    %661 = vmatmul.f32.gmra.mxu0 %v245
    %v662 = vpop.f32.mrf.mxu0
    %v663 = vadd.f32 0.0, %v662
    %664 = vmatmul.f32.gmra.mxu0 %v248
    %v665 = vpop.f32.mrf.mxu0
    %v666 = vadd.f32 0.0, %v665
    %667 = vmatmul.f32.gmra.mxu0 %v251
    %v668 = vpop.f32.mrf.mxu0
    %v669 = vadd.f32 0.0, %v668
    %670 = vmatmul.f32.gmra.mxu0 %v254
    %v671 = vpop.f32.mrf.mxu0
    %v672 = vadd.f32 0.0, %v671
    %673 = vmatmul.f32.gmra.mxu0 %v257
    %v674 = vpop.f32.mrf.mxu0
    %v675 = vadd.f32 0.0, %v674
    %676 = vmatmul.f32.gmra.mxu0 %v260
    %v677 = vpop.f32.mrf.mxu0
    %v678 = vadd.f32 0.0, %v677
    %679 = vmatmul.f32.gmra.mxu0 %v263
    %v680 = vpop.f32.mrf.mxu0
    %v681 = vadd.f32 0.0, %v680
    %682 = vmatmul.f32.gmra.mxu0 %v266
    %v683 = vpop.f32.mrf.mxu0
    %v684 = vadd.f32 0.0, %v683
    %685 = vmatmul.f32.gmra.mxu0 %v269
    %v686 = vpop.f32.mrf.mxu0
    %v687 = vadd.f32 0.0, %v686
    %688 = vmatmul.f32.gmra.mxu0 %v272
    %v689 = vpop.f32.mrf.mxu0
    %v690 = vadd.f32 0.0, %v689
    %691 = vmatmul.f32.gmra.mxu0 %v275
    %v692 = vpop.f32.mrf.mxu0
    %v693 = vadd.f32 0.0, %v692
    %694 = vmatmul.f32.gmra.mxu0 %v278
    %v695 = vpop.f32.mrf.mxu0
    %v696 = vadd.f32 0.0, %v695
    %697 = vmatmul.f32.gmra.mxu0 %v281
    %v698 = vpop.f32.mrf.mxu0
    %v699 = vadd.f32 0.0, %v698
    %700 = vmatmul.f32.gmra.mxu0 %v284
    %v701 = vpop.f32.mrf.mxu0
    %v702 = vadd.f32 0.0, %v701
    %703 = vdwg.mxu0
    %v704 = vld [vmem:[%s3] sm:$0x3]
    %v705 = vmul.f32 %v304, 2.0
    %v706 = vmul.f32 %v513, 2.0
    %v707 = vmul.f32 %v307, 2.0
    %v708 = vmul.f32 %v516, 2.0
    %v709 = vmul.f32 %v310, 2.0
    %v710 = vmul.f32 %v519, 2.0
    %v711 = vmul.f32 %v313, 2.0
    %v712 = vmul.f32 %v522, 2.0
    %v713 = vmul.f32 %v316, 2.0
    %v714 = vmul.f32 %v525, 2.0
    %v715 = vmul.f32 %v319, 2.0
    %v716 = vmul.f32 %v528, 2.0
    %v717 = vmul.f32 %v322, 2.0
    %v718 = vmul.f32 %v531, 2.0
    %v719 = vmul.f32 %v325, 2.0
    %v720 = vmul.f32 %v534, 2.0
    %v721 = vmul.f32 %v328, 2.0
    %v722 = vmul.f32 %v537, 2.0
    %v723 = vmul.f32 %v331, 2.0
    %v724 = vmul.f32 %v540, 2.0
    %v725 = vmul.f32 %v334, 2.0
    %v726 = vmul.f32 %v543, 2.0
    %v727 = vmul.f32 %v337, 2.0
    %v728 = vmul.f32 %v546, 2.0
    %v729 = vmul.f32 %v340, 2.0
    %v730 = vmul.f32 %v549, 2.0
    %v731 = vmul.f32 %v343, 2.0
    %v732 = vmul.f32 %v552, 2.0
    %v733 = vmul.f32 %v346, 2.0
    %v734 = vmul.f32 %v555, 2.0
    %v735 = vmul.f32 %v349, 2.0
    %v736 = vmul.f32 %v558, 2.0
    %v737 = vmul.f32 %v352, 2.0
    %v738 = vmul.f32 %v561, 2.0
    %v739 = vmul.f32 %v355, 2.0
    %v740 = vmul.f32 %v564, 2.0
    %v741 = vmul.f32 %v358, 2.0
    %v742 = vmul.f32 %v567, 2.0
    %v743 = vmul.f32 %v361, 2.0
    %v744 = vmul.f32 %v570, 2.0
    %v745 = vmul.f32 %v364, 2.0
    %v746 = vmul.f32 %v573, 2.0
    %v747 = vmul.f32 %v367, 2.0
    %v748 = vmul.f32 %v576, 2.0
    %v749 = vmul.f32 %v370, 2.0
    %v750 = vmul.f32 %v579, 2.0
    %v751 = vmul.f32 %v373, 2.0
    %v752 = vmul.f32 %v582, 2.0
    %v753 = vmul.f32 %v376, 2.0
    %v754 = vmul.f32 %v585, 2.0
    %v755 = vmul.f32 %v379, 2.0
    %v756 = vmul.f32 %v588, 2.0
    %v757 = vmul.f32 %v382, 2.0
    %v758 = vmul.f32 %v591, 2.0
    %v759 = vmul.f32 %v385, 2.0
    %v760 = vmul.f32 %v594, 2.0
    %v761 = vmul.f32 %v388, 2.0
    %v762 = vmul.f32 %v597, 2.0
    %v763 = vmul.f32 %v391, 2.0
    %v764 = vmul.f32 %v600, 2.0
    %v765 = vmul.f32 %v394, 2.0
    %v766 = vmul.f32 %v603, 2.0
    %v767 = vmul.f32 %v397, 2.0
    %v768 = vmul.f32 %v606, 2.0
    %v769 = vmul.f32 %v400, 2.0
    %v770 = vmul.f32 %v609, 2.0
    %v771 = vmul.f32 %v403, 2.0
    %v772 = vmul.f32 %v612, 2.0
    %v773 = vmul.f32 %v406, 2.0
    %v774 = vmul.f32 %v615, 2.0
    %v775 = vmul.f32 %v409, 2.0
    %v776 = vmul.f32 %v618, 2.0
    %v777 = vmul.f32 %v412, 2.0
    %v778 = vmul.f32 %v621, 2.0
    %v779 = vmul.f32 %v415, 2.0
    %v780 = vmul.f32 %v624, 2.0
    %v781 = vmul.f32 %v418, 2.0
    %v782 = vmul.f32 %v627, 2.0
    %v783 = vmul.f32 %v421, 2.0
    %v784 = vmul.f32 %v630, 2.0
    %v785 = vmul.f32 %v424, 2.0
    %v786 = vmul.f32 %v633, 2.0
    %v787 = vmul.f32 %v427, 2.0
    %v788 = vmul.f32 %v636, 2.0
    %v789 = vmul.f32 %v430, 2.0
    %v790 = vmul.f32 %v639, 2.0
    %v791 = vmul.f32 %v433, 2.0
    %v792 = vmul.f32 %v642, 2.0
    %v793 = vmul.f32 %v436, 2.0
    %v794 = vmul.f32 %v645, 2.0
    %v795 = vmul.f32 %v439, 2.0
    %v796 = vmul.f32 %v648, 2.0
    %v797 = vmul.f32 %v442, 2.0
    %v798 = vmul.f32 %v651, 2.0
    %v799 = vmul.f32 %v445, 2.0
    %v800 = vmul.f32 %v654, 2.0
    %v801 = vmul.f32 %v448, 2.0
    %v802 = vmul.f32 %v657, 2.0
    %v803 = vmul.f32 %v451, 2.0
    %v804 = vmul.f32 %v660, 2.0
    %v805 = vmul.f32 %v454, 2.0
    %v806 = vmul.f32 %v663, 2.0
    %v807 = vmul.f32 %v457, 2.0
    %v808 = vmul.f32 %v666, 2.0
    %v809 = vmul.f32 %v460, 2.0
    %v810 = vmul.f32 %v669, 2.0
    %v811 = vmul.f32 %v463, 2.0
    %v812 = vmul.f32 %v672, 2.0
    %v813 = vmul.f32 %v466, 2.0
    %v814 = vmul.f32 %v675, 2.0
    %v815 = vmul.f32 %v469, 2.0
    %v816 = vmul.f32 %v678, 2.0
    %v817 = vmul.f32 %v472, 2.0
    %v818 = vmul.f32 %v681, 2.0
    %v819 = vmul.f32 %v475, 2.0
    %v820 = vmul.f32 %v684, 2.0
    %v821 = vmul.f32 %v478, 2.0
    %v822 = vmul.f32 %v687, 2.0
    %v823 = vmul.f32 %v481, 2.0
    %v824 = vmul.f32 %v690, 2.0
    %v825 = vmul.f32 %v484, 2.0
    %v826 = vmul.f32 %v693, 2.0
    %v827 = vmul.f32 %v487, 2.0
    %v828 = vmul.f32 %v696, 2.0
    %v829 = vmul.f32 %v490, 2.0
    %v830 = vmul.f32 %v699, 2.0
    %v831 = vmul.f32 %v493, 2.0
    %v832 = vmul.f32 %v702, 2.0
    %v834 = vperm.slane %v704, 0
    %v835 = vperm.slane %v704, 1
    %v838 = vsub.f32 %v834, %v705
    %v839 = vsub.f32 %v835, %v706
    %v840 = vsub.f32 %v834, %v707
    %v841 = vsub.f32 %v835, %v708
    %v842 = vsub.f32 %v834, %v709
    %v843 = vsub.f32 %v835, %v710
    %v844 = vsub.f32 %v834, %v711
    %v845 = vsub.f32 %v835, %v712
    %v846 = vsub.f32 %v834, %v713
    %v847 = vsub.f32 %v835, %v714
    %v848 = vsub.f32 %v834, %v715
    %v849 = vsub.f32 %v835, %v716
    %v850 = vsub.f32 %v834, %v717
    %v851 = vsub.f32 %v835, %v718
    %v852 = vsub.f32 %v834, %v719
    %v853 = vsub.f32 %v835, %v720
    %v854 = vsub.f32 %v834, %v721
    %v855 = vsub.f32 %v835, %v722
    %v856 = vsub.f32 %v834, %v723
    %v857 = vsub.f32 %v835, %v724
    %v858 = vsub.f32 %v834, %v725
    %v859 = vsub.f32 %v835, %v726
    %v860 = vsub.f32 %v834, %v727
    %v861 = vsub.f32 %v835, %v728
    %v862 = vsub.f32 %v834, %v729
    %v863 = vsub.f32 %v835, %v730
    %v864 = vsub.f32 %v834, %v731
    %v865 = vsub.f32 %v835, %v732
    %v866 = vsub.f32 %v834, %v733
    %v867 = vsub.f32 %v835, %v734
    %v868 = vsub.f32 %v834, %v735
    %v869 = vsub.f32 %v835, %v736
    %v870 = vsub.f32 %v834, %v737
    %v871 = vsub.f32 %v835, %v738
    %v872 = vsub.f32 %v834, %v739
    %v873 = vsub.f32 %v835, %v740
    %v874 = vsub.f32 %v834, %v741
    %v875 = vsub.f32 %v835, %v742
    %v876 = vsub.f32 %v834, %v743
    %v877 = vsub.f32 %v835, %v744
    %v878 = vsub.f32 %v834, %v745
    %v879 = vsub.f32 %v835, %v746
    %v880 = vsub.f32 %v834, %v747
    %v881 = vsub.f32 %v835, %v748
    %v882 = vsub.f32 %v834, %v749
    %v883 = vsub.f32 %v835, %v750
    %v884 = vsub.f32 %v834, %v751
    %v885 = vsub.f32 %v835, %v752
    %v886 = vsub.f32 %v834, %v753
    %v887 = vsub.f32 %v835, %v754
    %v888 = vsub.f32 %v834, %v755
    %v889 = vsub.f32 %v835, %v756
    %v890 = vsub.f32 %v834, %v757
    %v891 = vsub.f32 %v835, %v758
    %v892 = vsub.f32 %v834, %v759
    %v893 = vsub.f32 %v835, %v760
    %v894 = vsub.f32 %v834, %v761
    %v895 = vsub.f32 %v835, %v762
    %v896 = vsub.f32 %v834, %v763
    %v897 = vsub.f32 %v835, %v764
    %v898 = vsub.f32 %v834, %v765
    %v899 = vsub.f32 %v835, %v766
    %v900 = vsub.f32 %v834, %v767
    %v901 = vsub.f32 %v835, %v768
    %v902 = vsub.f32 %v834, %v769
    %v903 = vsub.f32 %v835, %v770
    %v904 = vsub.f32 %v834, %v771
    %v905 = vsub.f32 %v835, %v772
    %v906 = vsub.f32 %v834, %v773
    %v907 = vsub.f32 %v835, %v774
    %v908 = vsub.f32 %v834, %v775
    %v909 = vsub.f32 %v835, %v776
    %v910 = vsub.f32 %v834, %v777
    %v911 = vsub.f32 %v835, %v778
    %v912 = vsub.f32 %v834, %v779
    %v913 = vsub.f32 %v835, %v780
    %v914 = vsub.f32 %v834, %v781
    %v915 = vsub.f32 %v835, %v782
    %v916 = vsub.f32 %v834, %v783
    %v917 = vsub.f32 %v835, %v784
    %v918 = vsub.f32 %v834, %v785
    %v919 = vsub.f32 %v835, %v786
    %v920 = vsub.f32 %v834, %v787
    %v921 = vsub.f32 %v835, %v788
    %v922 = vsub.f32 %v834, %v789
    %v923 = vsub.f32 %v835, %v790
    %v924 = vsub.f32 %v834, %v791
    %v925 = vsub.f32 %v835, %v792
    %v926 = vsub.f32 %v834, %v793
    %v927 = vsub.f32 %v835, %v794
    %v928 = vsub.f32 %v834, %v795
    %v929 = vsub.f32 %v835, %v796
    %v930 = vsub.f32 %v834, %v797
    %v931 = vsub.f32 %v835, %v798
    %v932 = vsub.f32 %v834, %v799
    %v933 = vsub.f32 %v835, %v800
    %v934 = vsub.f32 %v834, %v801
    %v935 = vsub.f32 %v835, %v802
    %v936 = vsub.f32 %v834, %v803
    %v937 = vsub.f32 %v835, %v804
    %v938 = vsub.f32 %v834, %v805
    %v939 = vsub.f32 %v835, %v806
    %v940 = vsub.f32 %v834, %v807
    %v941 = vsub.f32 %v835, %v808
    %v942 = vsub.f32 %v834, %v809
    %v943 = vsub.f32 %v835, %v810
    %v944 = vsub.f32 %v834, %v811
    %v945 = vsub.f32 %v835, %v812
    %v946 = vsub.f32 %v834, %v813
    %v947 = vsub.f32 %v835, %v814
    %v948 = vsub.f32 %v834, %v815
    %v949 = vsub.f32 %v835, %v816
    %v950 = vsub.f32 %v834, %v817
    %v951 = vsub.f32 %v835, %v818
    %v952 = vsub.f32 %v834, %v819
    %v953 = vsub.f32 %v835, %v820
    %v954 = vsub.f32 %v834, %v821
    %v955 = vsub.f32 %v835, %v822
    %v956 = vsub.f32 %v834, %v823
    %v957 = vsub.f32 %v835, %v824
    %v958 = vsub.f32 %v834, %v825
    %v959 = vsub.f32 %v835, %v826
    %v960 = vsub.f32 %v834, %v827
    %v961 = vsub.f32 %v835, %v828
    %v962 = vsub.f32 %v834, %v829
    %v963 = vsub.f32 %v835, %v830
    %v964 = vsub.f32 %v834, %v831
    %v965 = vsub.f32 %v835, %v832
    %v966 = vlaneseq
    %v967 = vand.u32 %v966, 127
    %v968 = vadd.s32 %v967, 128
    %v969 = vmin.f32 %v838, %v839
    %970 = vmin.xlane.f32.xlu0 %v969
    %v971 = vpop.xlane.xlu0 %970
    %v972 = vmin.f32 %v840, %v841
    %973 = vmin.xlane.f32.xlu0 %v972
    %v974 = vpop.xlane.xlu0 %973
    %v975 = vmin.f32 %v842, %v843
    %976 = vmin.xlane.f32.xlu0 %v975
    %v977 = vpop.xlane.xlu0 %976
    %v978 = vmin.f32 %v844, %v845
    %979 = vmin.xlane.f32.xlu0 %v978
    %v980 = vpop.xlane.xlu0 %979
    %v981 = vmin.f32 %v846, %v847
    %982 = vmin.xlane.f32.xlu0 %v981
    %v983 = vpop.xlane.xlu0 %982
    %v984 = vmin.f32 %v848, %v849
    %985 = vmin.xlane.f32.xlu0 %v984
    %v986 = vpop.xlane.xlu0 %985
    %v987 = vmin.f32 %v850, %v851
    %988 = vmin.xlane.f32.xlu0 %v987
    %v989 = vpop.xlane.xlu0 %988
    %v990 = vmin.f32 %v852, %v853
    %991 = vmin.xlane.f32.xlu0 %v990
    %v992 = vpop.xlane.xlu0 %991
    %v993 = vmin.f32 %v854, %v855
    %994 = vmin.xlane.f32.xlu0 %v993
    %v995 = vpop.xlane.xlu0 %994
    %v996 = vmin.f32 %v856, %v857
    %997 = vmin.xlane.f32.xlu0 %v996
    %v998 = vpop.xlane.xlu0 %997
    %v999 = vmin.f32 %v858, %v859
    %1000 = vmin.xlane.f32.xlu0 %v999
    %v1001 = vpop.xlane.xlu0 %1000
    %v1002 = vmin.f32 %v860, %v861
    %1003 = vmin.xlane.f32.xlu0 %v1002
    %v1004 = vpop.xlane.xlu0 %1003
    %v1005 = vmin.f32 %v862, %v863
    %1006 = vmin.xlane.f32.xlu0 %v1005
    %v1007 = vpop.xlane.xlu0 %1006
    %v1008 = vmin.f32 %v864, %v865
    %1009 = vmin.xlane.f32.xlu0 %v1008
    %v1010 = vpop.xlane.xlu0 %1009
    %v1011 = vmin.f32 %v866, %v867
    %1012 = vmin.xlane.f32.xlu0 %v1011
    %v1013 = vpop.xlane.xlu0 %1012
    %v1014 = vmin.f32 %v868, %v869
    %1015 = vmin.xlane.f32.xlu0 %v1014
    %v1016 = vpop.xlane.xlu0 %1015
    %v1017 = vmin.f32 %v870, %v871
    %1018 = vmin.xlane.f32.xlu0 %v1017
    %v1019 = vpop.xlane.xlu0 %1018
    %v1020 = vmin.f32 %v872, %v873
    %1021 = vmin.xlane.f32.xlu0 %v1020
    %v1022 = vpop.xlane.xlu0 %1021
    %v1023 = vmin.f32 %v874, %v875
    %1024 = vmin.xlane.f32.xlu0 %v1023
    %v1025 = vpop.xlane.xlu0 %1024
    %v1026 = vmin.f32 %v876, %v877
    %1027 = vmin.xlane.f32.xlu0 %v1026
    %v1028 = vpop.xlane.xlu0 %1027
    %v1029 = vmin.f32 %v878, %v879
    %1030 = vmin.xlane.f32.xlu0 %v1029
    %v1031 = vpop.xlane.xlu0 %1030
    %v1032 = vmin.f32 %v880, %v881
    %1033 = vmin.xlane.f32.xlu0 %v1032
    %v1034 = vpop.xlane.xlu0 %1033
    %v1035 = vmin.f32 %v882, %v883
    %1036 = vmin.xlane.f32.xlu0 %v1035
    %v1037 = vpop.xlane.xlu0 %1036
    %v1038 = vmin.f32 %v884, %v885
    %1039 = vmin.xlane.f32.xlu0 %v1038
    %v1040 = vpop.xlane.xlu0 %1039
    %v1041 = vmin.f32 %v886, %v887
    %1042 = vmin.xlane.f32.xlu0 %v1041
    %v1043 = vpop.xlane.xlu0 %1042
    %v1044 = vmin.f32 %v888, %v889
    %1045 = vmin.xlane.f32.xlu0 %v1044
    %v1046 = vpop.xlane.xlu0 %1045
    %v1047 = vmin.f32 %v890, %v891
    %1048 = vmin.xlane.f32.xlu0 %v1047
    %v1049 = vpop.xlane.xlu0 %1048
    %v1050 = vmin.f32 %v892, %v893
    %1051 = vmin.xlane.f32.xlu0 %v1050
    %v1052 = vpop.xlane.xlu0 %1051
    %v1053 = vmin.f32 %v894, %v895
    %1054 = vmin.xlane.f32.xlu0 %v1053
    %v1055 = vpop.xlane.xlu0 %1054
    %v1056 = vmin.f32 %v896, %v897
    %1057 = vmin.xlane.f32.xlu0 %v1056
    %v1058 = vpop.xlane.xlu0 %1057
    %v1059 = vmin.f32 %v898, %v899
    %1060 = vmin.xlane.f32.xlu0 %v1059
    %v1061 = vpop.xlane.xlu0 %1060
    %v1062 = vmin.f32 %v900, %v901
    %1063 = vmin.xlane.f32.xlu0 %v1062
    %v1064 = vpop.xlane.xlu0 %1063
    %v1065 = vmin.f32 %v902, %v903
    %1066 = vmin.xlane.f32.xlu0 %v1065
    %v1067 = vpop.xlane.xlu0 %1066
    %v1068 = vmin.f32 %v904, %v905
    %1069 = vmin.xlane.f32.xlu0 %v1068
    %v1070 = vpop.xlane.xlu0 %1069
    %v1071 = vmin.f32 %v906, %v907
    %1072 = vmin.xlane.f32.xlu0 %v1071
    %v1073 = vpop.xlane.xlu0 %1072
    %v1074 = vmin.f32 %v908, %v909
    %1075 = vmin.xlane.f32.xlu0 %v1074
    %v1076 = vpop.xlane.xlu0 %1075
    %v1077 = vmin.f32 %v910, %v911
    %1078 = vmin.xlane.f32.xlu0 %v1077
    %v1079 = vpop.xlane.xlu0 %1078
    %v1080 = vmin.f32 %v912, %v913
    %1081 = vmin.xlane.f32.xlu0 %v1080
    %v1082 = vpop.xlane.xlu0 %1081
    %v1083 = vmin.f32 %v914, %v915
    %1084 = vmin.xlane.f32.xlu0 %v1083
    %v1085 = vpop.xlane.xlu0 %1084
    %v1086 = vmin.f32 %v916, %v917
    %1087 = vmin.xlane.f32.xlu0 %v1086
    %v1088 = vpop.xlane.xlu0 %1087
    %v1089 = vmin.f32 %v918, %v919
    %1090 = vmin.xlane.f32.xlu0 %v1089
    %v1091 = vpop.xlane.xlu0 %1090
    %v1092 = vmin.f32 %v920, %v921
    %1093 = vmin.xlane.f32.xlu0 %v1092
    %v1094 = vpop.xlane.xlu0 %1093
    %v1095 = vmin.f32 %v922, %v923
    %1096 = vmin.xlane.f32.xlu0 %v1095
    %v1097 = vpop.xlane.xlu0 %1096
    %v1098 = vmin.f32 %v924, %v925
    %1099 = vmin.xlane.f32.xlu0 %v1098
    %v1100 = vpop.xlane.xlu0 %1099
    %v1101 = vmin.f32 %v926, %v927
    %1102 = vmin.xlane.f32.xlu0 %v1101
    %v1103 = vpop.xlane.xlu0 %1102
    %v1104 = vmin.f32 %v928, %v929
    %1105 = vmin.xlane.f32.xlu0 %v1104
    %v1106 = vpop.xlane.xlu0 %1105
    %v1107 = vmin.f32 %v930, %v931
    %1108 = vmin.xlane.f32.xlu0 %v1107
    %v1109 = vpop.xlane.xlu0 %1108
    %v1110 = vmin.f32 %v932, %v933
    %1111 = vmin.xlane.f32.xlu0 %v1110
    %v1112 = vpop.xlane.xlu0 %1111
    %v1113 = vmin.f32 %v934, %v935
    %1114 = vmin.xlane.f32.xlu0 %v1113
    %v1115 = vpop.xlane.xlu0 %1114
    %v1116 = vmin.f32 %v936, %v937
    %1117 = vmin.xlane.f32.xlu0 %v1116
    %v1118 = vpop.xlane.xlu0 %1117
    %v1119 = vmin.f32 %v938, %v939
    %1120 = vmin.xlane.f32.xlu0 %v1119
    %v1121 = vpop.xlane.xlu0 %1120
    %v1122 = vmin.f32 %v940, %v941
    %1123 = vmin.xlane.f32.xlu0 %v1122
    %v1124 = vpop.xlane.xlu0 %1123
    %v1125 = vmin.f32 %v942, %v943
    %1126 = vmin.xlane.f32.xlu0 %v1125
    %v1127 = vpop.xlane.xlu0 %1126
    %v1128 = vmin.f32 %v944, %v945
    %1129 = vmin.xlane.f32.xlu0 %v1128
    %v1130 = vpop.xlane.xlu0 %1129
    %v1131 = vmin.f32 %v946, %v947
    %1132 = vmin.xlane.f32.xlu0 %v1131
    %v1133 = vpop.xlane.xlu0 %1132
    %v1134 = vmin.f32 %v948, %v949
    %1135 = vmin.xlane.f32.xlu0 %v1134
    %v1136 = vpop.xlane.xlu0 %1135
    %v1137 = vmin.f32 %v950, %v951
    %1138 = vmin.xlane.f32.xlu0 %v1137
    %v1139 = vpop.xlane.xlu0 %1138
    %v1140 = vmin.f32 %v952, %v953
    %1141 = vmin.xlane.f32.xlu0 %v1140
    %v1142 = vpop.xlane.xlu0 %1141
    %v1143 = vmin.f32 %v954, %v955
    %1144 = vmin.xlane.f32.xlu0 %v1143
    %v1145 = vpop.xlane.xlu0 %1144
    %v1146 = vmin.f32 %v956, %v957
    %1147 = vmin.xlane.f32.xlu0 %v1146
    %v1148 = vpop.xlane.xlu0 %1147
    %v1149 = vmin.f32 %v958, %v959
    %1150 = vmin.xlane.f32.xlu0 %v1149
    %v1151 = vpop.xlane.xlu0 %1150
    %v1152 = vmin.f32 %v960, %v961
    %1153 = vmin.xlane.f32.xlu0 %v1152
    %v1154 = vpop.xlane.xlu0 %1153
    %v1155 = vmin.f32 %v962, %v963
    %1156 = vmin.xlane.f32.xlu0 %v1155
    %v1157 = vpop.xlane.xlu0 %1156
    %v1158 = vmin.f32 %v964, %v965
    %1159 = vmin.xlane.f32.xlu0 %v1158
    %v1160 = vpop.xlane.xlu0 %1159
    %vm1161 = vcmp.eq.f32.partialorder %v838, %v971
    %vm1162 = vcmp.eq.f32.partialorder %v839, %v971
    %vm1163 = vcmp.eq.f32.partialorder %v840, %v974
    %vm1164 = vcmp.eq.f32.partialorder %v841, %v974
    %vm1165 = vcmp.eq.f32.partialorder %v842, %v977
    %vm1166 = vcmp.eq.f32.partialorder %v843, %v977
    %vm1167 = vcmp.eq.f32.partialorder %v844, %v980
    %vm1168 = vcmp.eq.f32.partialorder %v845, %v980
    %vm1169 = vcmp.eq.f32.partialorder %v846, %v983
    %vm1170 = vcmp.eq.f32.partialorder %v847, %v983
    %vm1171 = vcmp.eq.f32.partialorder %v848, %v986
    %vm1172 = vcmp.eq.f32.partialorder %v849, %v986
    %vm1173 = vcmp.eq.f32.partialorder %v850, %v989
    %vm1174 = vcmp.eq.f32.partialorder %v851, %v989
    %vm1175 = vcmp.eq.f32.partialorder %v852, %v992
    %vm1176 = vcmp.eq.f32.partialorder %v853, %v992
    %vm1177 = vcmp.eq.f32.partialorder %v854, %v995
    %vm1178 = vcmp.eq.f32.partialorder %v855, %v995
    %vm1179 = vcmp.eq.f32.partialorder %v856, %v998
    %vm1180 = vcmp.eq.f32.partialorder %v857, %v998
    %vm1181 = vcmp.eq.f32.partialorder %v858, %v1001
    %vm1182 = vcmp.eq.f32.partialorder %v859, %v1001
    %vm1183 = vcmp.eq.f32.partialorder %v860, %v1004
    %vm1184 = vcmp.eq.f32.partialorder %v861, %v1004
    %vm1185 = vcmp.eq.f32.partialorder %v862, %v1007
    %vm1186 = vcmp.eq.f32.partialorder %v863, %v1007
    %vm1187 = vcmp.eq.f32.partialorder %v864, %v1010
    %vm1188 = vcmp.eq.f32.partialorder %v865, %v1010
    %vm1189 = vcmp.eq.f32.partialorder %v866, %v1013
    %vm1190 = vcmp.eq.f32.partialorder %v867, %v1013
    %vm1191 = vcmp.eq.f32.partialorder %v868, %v1016
    %vm1192 = vcmp.eq.f32.partialorder %v869, %v1016
    %vm1193 = vcmp.eq.f32.partialorder %v870, %v1019
    %vm1194 = vcmp.eq.f32.partialorder %v871, %v1019
    %vm1195 = vcmp.eq.f32.partialorder %v872, %v1022
    %vm1196 = vcmp.eq.f32.partialorder %v873, %v1022
    %vm1197 = vcmp.eq.f32.partialorder %v874, %v1025
    %vm1198 = vcmp.eq.f32.partialorder %v875, %v1025
    %vm1199 = vcmp.eq.f32.partialorder %v876, %v1028
    %vm1200 = vcmp.eq.f32.partialorder %v877, %v1028
    %vm1201 = vcmp.eq.f32.partialorder %v878, %v1031
    %vm1202 = vcmp.eq.f32.partialorder %v879, %v1031
    %vm1203 = vcmp.eq.f32.partialorder %v880, %v1034
    %vm1204 = vcmp.eq.f32.partialorder %v881, %v1034
    %vm1205 = vcmp.eq.f32.partialorder %v882, %v1037
    %vm1206 = vcmp.eq.f32.partialorder %v883, %v1037
    %vm1207 = vcmp.eq.f32.partialorder %v884, %v1040
    %vm1208 = vcmp.eq.f32.partialorder %v885, %v1040
    %vm1209 = vcmp.eq.f32.partialorder %v886, %v1043
    %vm1210 = vcmp.eq.f32.partialorder %v887, %v1043
    %vm1211 = vcmp.eq.f32.partialorder %v888, %v1046
    %vm1212 = vcmp.eq.f32.partialorder %v889, %v1046
    %vm1213 = vcmp.eq.f32.partialorder %v890, %v1049
    %vm1214 = vcmp.eq.f32.partialorder %v891, %v1049
    %vm1215 = vcmp.eq.f32.partialorder %v892, %v1052
    %vm1216 = vcmp.eq.f32.partialorder %v893, %v1052
    %vm1217 = vcmp.eq.f32.partialorder %v894, %v1055
    %vm1218 = vcmp.eq.f32.partialorder %v895, %v1055
    %vm1219 = vcmp.eq.f32.partialorder %v896, %v1058
    %vm1220 = vcmp.eq.f32.partialorder %v897, %v1058
    %vm1221 = vcmp.eq.f32.partialorder %v898, %v1061
    %vm1222 = vcmp.eq.f32.partialorder %v899, %v1061
    %vm1223 = vcmp.eq.f32.partialorder %v900, %v1064
    %vm1224 = vcmp.eq.f32.partialorder %v901, %v1064
    %vm1225 = vcmp.eq.f32.partialorder %v902, %v1067
    %vm1226 = vcmp.eq.f32.partialorder %v903, %v1067
    %vm1227 = vcmp.eq.f32.partialorder %v904, %v1070
    %vm1228 = vcmp.eq.f32.partialorder %v905, %v1070
    %vm1229 = vcmp.eq.f32.partialorder %v906, %v1073
    %vm1230 = vcmp.eq.f32.partialorder %v907, %v1073
    %vm1231 = vcmp.eq.f32.partialorder %v908, %v1076
    %vm1232 = vcmp.eq.f32.partialorder %v909, %v1076
    %vm1233 = vcmp.eq.f32.partialorder %v910, %v1079
    %vm1234 = vcmp.eq.f32.partialorder %v911, %v1079
    %vm1235 = vcmp.eq.f32.partialorder %v912, %v1082
    %vm1236 = vcmp.eq.f32.partialorder %v913, %v1082
    %vm1237 = vcmp.eq.f32.partialorder %v914, %v1085
    %vm1238 = vcmp.eq.f32.partialorder %v915, %v1085
    %vm1239 = vcmp.eq.f32.partialorder %v916, %v1088
    %vm1240 = vcmp.eq.f32.partialorder %v917, %v1088
    %vm1241 = vcmp.eq.f32.partialorder %v918, %v1091
    %vm1242 = vcmp.eq.f32.partialorder %v919, %v1091
    %vm1243 = vcmp.eq.f32.partialorder %v920, %v1094
    %vm1244 = vcmp.eq.f32.partialorder %v921, %v1094
    %vm1245 = vcmp.eq.f32.partialorder %v922, %v1097
    %vm1246 = vcmp.eq.f32.partialorder %v923, %v1097
    %vm1247 = vcmp.eq.f32.partialorder %v924, %v1100
    %vm1248 = vcmp.eq.f32.partialorder %v925, %v1100
    %vm1249 = vcmp.eq.f32.partialorder %v926, %v1103
    %vm1250 = vcmp.eq.f32.partialorder %v927, %v1103
    %vm1251 = vcmp.eq.f32.partialorder %v928, %v1106
    %vm1252 = vcmp.eq.f32.partialorder %v929, %v1106
    %vm1253 = vcmp.eq.f32.partialorder %v930, %v1109
    %vm1254 = vcmp.eq.f32.partialorder %v931, %v1109
    %vm1255 = vcmp.eq.f32.partialorder %v932, %v1112
    %vm1256 = vcmp.eq.f32.partialorder %v933, %v1112
    %vm1257 = vcmp.eq.f32.partialorder %v934, %v1115
    %vm1258 = vcmp.eq.f32.partialorder %v935, %v1115
    %vm1259 = vcmp.eq.f32.partialorder %v936, %v1118
    %vm1260 = vcmp.eq.f32.partialorder %v937, %v1118
    %vm1261 = vcmp.eq.f32.partialorder %v938, %v1121
    %vm1262 = vcmp.eq.f32.partialorder %v939, %v1121
    %vm1263 = vcmp.eq.f32.partialorder %v940, %v1124
    %vm1264 = vcmp.eq.f32.partialorder %v941, %v1124
    %vm1265 = vcmp.eq.f32.partialorder %v942, %v1127
    %vm1266 = vcmp.eq.f32.partialorder %v943, %v1127
    %vm1267 = vcmp.eq.f32.partialorder %v944, %v1130
    %vm1268 = vcmp.eq.f32.partialorder %v945, %v1130
    %vm1269 = vcmp.eq.f32.partialorder %v946, %v1133
    %vm1270 = vcmp.eq.f32.partialorder %v947, %v1133
    %vm1271 = vcmp.eq.f32.partialorder %v948, %v1136
    %vm1272 = vcmp.eq.f32.partialorder %v949, %v1136
    %vm1273 = vcmp.eq.f32.partialorder %v950, %v1139
    %vm1274 = vcmp.eq.f32.partialorder %v951, %v1139
    %vm1275 = vcmp.eq.f32.partialorder %v952, %v1142
    %vm1276 = vcmp.eq.f32.partialorder %v953, %v1142
    %vm1277 = vcmp.eq.f32.partialorder %v954, %v1145
    %vm1278 = vcmp.eq.f32.partialorder %v955, %v1145
    %vm1279 = vcmp.eq.f32.partialorder %v956, %v1148
    %vm1280 = vcmp.eq.f32.partialorder %v957, %v1148
    %vm1281 = vcmp.eq.f32.partialorder %v958, %v1151
    %vm1282 = vcmp.eq.f32.partialorder %v959, %v1151
    %vm1283 = vcmp.eq.f32.partialorder %v960, %v1154
    %vm1284 = vcmp.eq.f32.partialorder %v961, %v1154
    %vm1285 = vcmp.eq.f32.partialorder %v962, %v1157
    %vm1286 = vcmp.eq.f32.partialorder %v963, %v1157
    %vm1287 = vcmp.eq.f32.partialorder %v964, %v1160
    %vm1288 = vcmp.eq.f32.partialorder %v965, %v1160
    %v1289 = vsel %vm1161, %v967, 256
    %v1290 = vsel %vm1162, %v968, 256
    %v1291 = vsel %vm1163, %v967, 256
    %v1292 = vsel %vm1164, %v968, 256
    %v1293 = vsel %vm1165, %v967, 256
    %v1294 = vsel %vm1166, %v968, 256
    %v1295 = vsel %vm1167, %v967, 256
    %v1296 = vsel %vm1168, %v968, 256
    %v1297 = vsel %vm1169, %v967, 256
    %v1298 = vsel %vm1170, %v968, 256
    %v1299 = vsel %vm1171, %v967, 256
    %v1300 = vsel %vm1172, %v968, 256
    %v1301 = vsel %vm1173, %v967, 256
    %v1302 = vsel %vm1174, %v968, 256
    %v1303 = vsel %vm1175, %v967, 256
    %v1304 = vsel %vm1176, %v968, 256
    %v1305 = vsel %vm1177, %v967, 256
    %v1306 = vsel %vm1178, %v968, 256
    %v1307 = vsel %vm1179, %v967, 256
    %v1308 = vsel %vm1180, %v968, 256
    %v1309 = vsel %vm1181, %v967, 256
    %v1310 = vsel %vm1182, %v968, 256
    %v1311 = vsel %vm1183, %v967, 256
    %v1312 = vsel %vm1184, %v968, 256
    %v1313 = vsel %vm1185, %v967, 256
    %v1314 = vsel %vm1186, %v968, 256
    %v1315 = vsel %vm1187, %v967, 256
    %v1316 = vsel %vm1188, %v968, 256
    %v1317 = vsel %vm1189, %v967, 256
    %v1318 = vsel %vm1190, %v968, 256
    %v1319 = vsel %vm1191, %v967, 256
    %v1320 = vsel %vm1192, %v968, 256
    %v1321 = vsel %vm1193, %v967, 256
    %v1322 = vsel %vm1194, %v968, 256
    %v1323 = vsel %vm1195, %v967, 256
    %v1324 = vsel %vm1196, %v968, 256
    %v1325 = vsel %vm1197, %v967, 256
    %v1326 = vsel %vm1198, %v968, 256
    %v1327 = vsel %vm1199, %v967, 256
    %v1328 = vsel %vm1200, %v968, 256
    %v1329 = vsel %vm1201, %v967, 256
    %v1330 = vsel %vm1202, %v968, 256
    %v1331 = vsel %vm1203, %v967, 256
    %v1332 = vsel %vm1204, %v968, 256
    %v1333 = vsel %vm1205, %v967, 256
    %v1334 = vsel %vm1206, %v968, 256
    %v1335 = vsel %vm1207, %v967, 256
    %v1336 = vsel %vm1208, %v968, 256
    %v1337 = vsel %vm1209, %v967, 256
    %v1338 = vsel %vm1210, %v968, 256
    %v1339 = vsel %vm1211, %v967, 256
    %v1340 = vsel %vm1212, %v968, 256
    %v1341 = vsel %vm1213, %v967, 256
    %v1342 = vsel %vm1214, %v968, 256
    %v1343 = vsel %vm1215, %v967, 256
    %v1344 = vsel %vm1216, %v968, 256
    %v1345 = vsel %vm1217, %v967, 256
    %v1346 = vsel %vm1218, %v968, 256
    %v1347 = vsel %vm1219, %v967, 256
    %v1348 = vsel %vm1220, %v968, 256
    %v1349 = vsel %vm1221, %v967, 256
    %v1350 = vsel %vm1222, %v968, 256
    %v1351 = vsel %vm1223, %v967, 256
    %v1352 = vsel %vm1224, %v968, 256
    %v1353 = vsel %vm1225, %v967, 256
    %v1354 = vsel %vm1226, %v968, 256
    %v1355 = vsel %vm1227, %v967, 256
    %v1356 = vsel %vm1228, %v968, 256
    %v1357 = vsel %vm1229, %v967, 256
    %v1358 = vsel %vm1230, %v968, 256
    %v1359 = vsel %vm1231, %v967, 256
    %v1360 = vsel %vm1232, %v968, 256
    %v1361 = vsel %vm1233, %v967, 256
    %v1362 = vsel %vm1234, %v968, 256
    %v1363 = vsel %vm1235, %v967, 256
    %v1364 = vsel %vm1236, %v968, 256
    %v1365 = vsel %vm1237, %v967, 256
    %v1366 = vsel %vm1238, %v968, 256
    %v1367 = vsel %vm1239, %v967, 256
    %v1368 = vsel %vm1240, %v968, 256
    %v1369 = vsel %vm1241, %v967, 256
    %v1370 = vsel %vm1242, %v968, 256
    %v1371 = vsel %vm1243, %v967, 256
    %v1372 = vsel %vm1244, %v968, 256
    %v1373 = vsel %vm1245, %v967, 256
    %v1374 = vsel %vm1246, %v968, 256
    %v1375 = vsel %vm1247, %v967, 256
    %v1376 = vsel %vm1248, %v968, 256
    %v1377 = vsel %vm1249, %v967, 256
    %v1378 = vsel %vm1250, %v968, 256
    %v1379 = vsel %vm1251, %v967, 256
    %v1380 = vsel %vm1252, %v968, 256
    %v1381 = vsel %vm1253, %v967, 256
    %v1382 = vsel %vm1254, %v968, 256
    %v1383 = vsel %vm1255, %v967, 256
    %v1384 = vsel %vm1256, %v968, 256
    %v1385 = vsel %vm1257, %v967, 256
    %v1386 = vsel %vm1258, %v968, 256
    %v1387 = vsel %vm1259, %v967, 256
    %v1388 = vsel %vm1260, %v968, 256
    %v1389 = vsel %vm1261, %v967, 256
    %v1390 = vsel %vm1262, %v968, 256
    %v1391 = vsel %vm1263, %v967, 256
    %v1392 = vsel %vm1264, %v968, 256
    %v1393 = vsel %vm1265, %v967, 256
    %v1394 = vsel %vm1266, %v968, 256
    %v1395 = vsel %vm1267, %v967, 256
    %v1396 = vsel %vm1268, %v968, 256
    %v1397 = vsel %vm1269, %v967, 256
    %v1398 = vsel %vm1270, %v968, 256
    %v1399 = vsel %vm1271, %v967, 256
    %v1400 = vsel %vm1272, %v968, 256
    %v1401 = vsel %vm1273, %v967, 256
    %v1402 = vsel %vm1274, %v968, 256
    %v1403 = vsel %vm1275, %v967, 256
    %v1404 = vsel %vm1276, %v968, 256
    %v1405 = vsel %vm1277, %v967, 256
    %v1406 = vsel %vm1278, %v968, 256
    %v1407 = vsel %vm1279, %v967, 256
    %v1408 = vsel %vm1280, %v968, 256
    %v1409 = vsel %vm1281, %v967, 256
    %v1410 = vsel %vm1282, %v968, 256
    %v1411 = vsel %vm1283, %v967, 256
    %v1412 = vsel %vm1284, %v968, 256
    %v1413 = vsel %vm1285, %v967, 256
    %v1414 = vsel %vm1286, %v968, 256
    %v1415 = vsel %vm1287, %v967, 256
    %v1416 = vsel %vm1288, %v968, 256
    %vm1417 = vcmp.lt.s32.totalorder %v1289, %v1290
    %v1418 = vsel %vm1417, %v1289, %v1290
    %v1419 = vand.u32 %v1418, 65535
    %v1420 = vshra.s32 %v1418, 16
    %v1421 = vcvt.s32.f32 %v1419
    %v1422 = vcvt.s32.f32 %v1420
    %1423 = vmin.xlane.f32.xlu0 %v1422
    %v1424 = vpop.xlane.xlu0 %1423
    %vm1425 = vcmp.eq.f32.partialorder %v1422, %v1424
    %v1426 = vsel %vm1425, %v1421, inf
    %1427 = vmin.xlane.f32.xlu0 %v1426
    %v1428 = vpop.xlane.xlu0 %1427
    %v1429 = vcvt.f32.s32 %v1428
    %v1430 = vcvt.f32.s32 %v1424
    %v1431 = vshll.u32 %v1430, 16
    %v1432 = vadd.s32 %v1431, %v1429
    %vm1433 = vcmp.lt.s32.totalorder %v1291, %v1292
    %v1434 = vsel %vm1433, %v1291, %v1292
    %v1435 = vand.u32 %v1434, 65535
    %v1436 = vshra.s32 %v1434, 16
    %v1437 = vcvt.s32.f32 %v1435
    %v1438 = vcvt.s32.f32 %v1436
    %1439 = vmin.xlane.f32.xlu0 %v1438
    %v1440 = vpop.xlane.xlu0 %1439
    %vm1441 = vcmp.eq.f32.partialorder %v1438, %v1440
    %v1442 = vsel %vm1441, %v1437, inf
    %1443 = vmin.xlane.f32.xlu0 %v1442
    %v1444 = vpop.xlane.xlu0 %1443
    %v1445 = vcvt.f32.s32 %v1444
    %v1446 = vcvt.f32.s32 %v1440
    %v1447 = vshll.u32 %v1446, 16
    %v1448 = vadd.s32 %v1447, %v1445
    %vm1449 = vcmp.lt.s32.totalorder %v1293, %v1294
    %v1450 = vsel %vm1449, %v1293, %v1294
    %v1451 = vand.u32 %v1450, 65535
    %v1452 = vshra.s32 %v1450, 16
    %v1453 = vcvt.s32.f32 %v1451
    %v1454 = vcvt.s32.f32 %v1452
    %1455 = vmin.xlane.f32.xlu0 %v1454
    %v1456 = vpop.xlane.xlu0 %1455
    %vm1457 = vcmp.eq.f32.partialorder %v1454, %v1456
    %v1458 = vsel %vm1457, %v1453, inf
    %1459 = vmin.xlane.f32.xlu0 %v1458
    %v1460 = vpop.xlane.xlu0 %1459
    %v1461 = vcvt.f32.s32 %v1460
    %v1462 = vcvt.f32.s32 %v1456
    %v1463 = vshll.u32 %v1462, 16
    %v1464 = vadd.s32 %v1463, %v1461
    %vm1465 = vcmp.lt.s32.totalorder %v1295, %v1296
    %v1466 = vsel %vm1465, %v1295, %v1296
    %v1467 = vand.u32 %v1466, 65535
    %v1468 = vshra.s32 %v1466, 16
    %v1469 = vcvt.s32.f32 %v1467
    %v1470 = vcvt.s32.f32 %v1468
    %1471 = vmin.xlane.f32.xlu0 %v1470
    %v1472 = vpop.xlane.xlu0 %1471
    %vm1473 = vcmp.eq.f32.partialorder %v1470, %v1472
    %v1474 = vsel %vm1473, %v1469, inf
    %1475 = vmin.xlane.f32.xlu0 %v1474
    %v1476 = vpop.xlane.xlu0 %1475
    %v1477 = vcvt.f32.s32 %v1476
    %v1478 = vcvt.f32.s32 %v1472
    %v1479 = vshll.u32 %v1478, 16
    %v1480 = vadd.s32 %v1479, %v1477
    %vm1481 = vcmp.lt.s32.totalorder %v1297, %v1298
    %v1482 = vsel %vm1481, %v1297, %v1298
    %v1483 = vand.u32 %v1482, 65535
    %v1484 = vshra.s32 %v1482, 16
    %v1485 = vcvt.s32.f32 %v1483
    %v1486 = vcvt.s32.f32 %v1484
    %1487 = vmin.xlane.f32.xlu0 %v1486
    %v1488 = vpop.xlane.xlu0 %1487
    %vm1489 = vcmp.eq.f32.partialorder %v1486, %v1488
    %v1490 = vsel %vm1489, %v1485, inf
    %1491 = vmin.xlane.f32.xlu0 %v1490
    %v1492 = vpop.xlane.xlu0 %1491
    %v1493 = vcvt.f32.s32 %v1492
    %v1494 = vcvt.f32.s32 %v1488
    %v1495 = vshll.u32 %v1494, 16
    %v1496 = vadd.s32 %v1495, %v1493
    %vm1497 = vcmp.lt.s32.totalorder %v1299, %v1300
    %v1498 = vsel %vm1497, %v1299, %v1300
    %v1499 = vand.u32 %v1498, 65535
    %v1500 = vshra.s32 %v1498, 16
    %v1501 = vcvt.s32.f32 %v1499
    %v1502 = vcvt.s32.f32 %v1500
    %1503 = vmin.xlane.f32.xlu0 %v1502
    %v1504 = vpop.xlane.xlu0 %1503
    %vm1505 = vcmp.eq.f32.partialorder %v1502, %v1504
    %v1506 = vsel %vm1505, %v1501, inf
    %1507 = vmin.xlane.f32.xlu0 %v1506
    %v1508 = vpop.xlane.xlu0 %1507
    %v1509 = vcvt.f32.s32 %v1508
    %v1510 = vcvt.f32.s32 %v1504
    %v1511 = vshll.u32 %v1510, 16
    %v1512 = vadd.s32 %v1511, %v1509
    %vm1513 = vcmp.lt.s32.totalorder %v1301, %v1302
    %v1514 = vsel %vm1513, %v1301, %v1302
    %v1515 = vand.u32 %v1514, 65535
    %v1516 = vshra.s32 %v1514, 16
    %v1517 = vcvt.s32.f32 %v1515
    %v1518 = vcvt.s32.f32 %v1516
    %1519 = vmin.xlane.f32.xlu0 %v1518
    %v1520 = vpop.xlane.xlu0 %1519
    %vm1521 = vcmp.eq.f32.partialorder %v1518, %v1520
    %v1522 = vsel %vm1521, %v1517, inf
    %1523 = vmin.xlane.f32.xlu0 %v1522
    %v1524 = vpop.xlane.xlu0 %1523
    %v1525 = vcvt.f32.s32 %v1524
    %v1526 = vcvt.f32.s32 %v1520
    %v1527 = vshll.u32 %v1526, 16
    %v1528 = vadd.s32 %v1527, %v1525
    %vm1529 = vcmp.lt.s32.totalorder %v1303, %v1304
    %v1530 = vsel %vm1529, %v1303, %v1304
    %v1531 = vand.u32 %v1530, 65535
    %v1532 = vshra.s32 %v1530, 16
    %v1533 = vcvt.s32.f32 %v1531
    %v1534 = vcvt.s32.f32 %v1532
    %1535 = vmin.xlane.f32.xlu0 %v1534
    %v1536 = vpop.xlane.xlu0 %1535
    %vm1537 = vcmp.eq.f32.partialorder %v1534, %v1536
    %v1538 = vsel %vm1537, %v1533, inf
    %1539 = vmin.xlane.f32.xlu0 %v1538
    %v1540 = vpop.xlane.xlu0 %1539
    %v1541 = vcvt.f32.s32 %v1540
    %v1542 = vcvt.f32.s32 %v1536
    %v1543 = vshll.u32 %v1542, 16
    %v1544 = vadd.s32 %v1543, %v1541
    %vm1545 = vcmp.lt.s32.totalorder %v1305, %v1306
    %v1546 = vsel %vm1545, %v1305, %v1306
    %v1547 = vand.u32 %v1546, 65535
    %v1548 = vshra.s32 %v1546, 16
    %v1549 = vcvt.s32.f32 %v1547
    %v1550 = vcvt.s32.f32 %v1548
    %1551 = vmin.xlane.f32.xlu0 %v1550
    %v1552 = vpop.xlane.xlu0 %1551
    %vm1553 = vcmp.eq.f32.partialorder %v1550, %v1552
    %v1554 = vsel %vm1553, %v1549, inf
    %1555 = vmin.xlane.f32.xlu0 %v1554
    %v1556 = vpop.xlane.xlu0 %1555
    %v1557 = vcvt.f32.s32 %v1556
    %v1558 = vcvt.f32.s32 %v1552
    %v1559 = vshll.u32 %v1558, 16
    %v1560 = vadd.s32 %v1559, %v1557
    %vm1561 = vcmp.lt.s32.totalorder %v1307, %v1308
    %v1562 = vsel %vm1561, %v1307, %v1308
    %v1563 = vand.u32 %v1562, 65535
    %v1564 = vshra.s32 %v1562, 16
    %v1565 = vcvt.s32.f32 %v1563
    %v1566 = vcvt.s32.f32 %v1564
    %1567 = vmin.xlane.f32.xlu0 %v1566
    %v1568 = vpop.xlane.xlu0 %1567
    %vm1569 = vcmp.eq.f32.partialorder %v1566, %v1568
    %v1570 = vsel %vm1569, %v1565, inf
    %1571 = vmin.xlane.f32.xlu0 %v1570
    %v1572 = vpop.xlane.xlu0 %1571
    %v1573 = vcvt.f32.s32 %v1572
    %v1574 = vcvt.f32.s32 %v1568
    %v1575 = vshll.u32 %v1574, 16
    %v1576 = vadd.s32 %v1575, %v1573
    %vm1577 = vcmp.lt.s32.totalorder %v1309, %v1310
    %v1578 = vsel %vm1577, %v1309, %v1310
    %v1579 = vand.u32 %v1578, 65535
    %v1580 = vshra.s32 %v1578, 16
    %v1581 = vcvt.s32.f32 %v1579
    %v1582 = vcvt.s32.f32 %v1580
    %1583 = vmin.xlane.f32.xlu0 %v1582
    %v1584 = vpop.xlane.xlu0 %1583
    %vm1585 = vcmp.eq.f32.partialorder %v1582, %v1584
    %v1586 = vsel %vm1585, %v1581, inf
    %1587 = vmin.xlane.f32.xlu0 %v1586
    %v1588 = vpop.xlane.xlu0 %1587
    %v1589 = vcvt.f32.s32 %v1588
    %v1590 = vcvt.f32.s32 %v1584
    %v1591 = vshll.u32 %v1590, 16
    %v1592 = vadd.s32 %v1591, %v1589
    %vm1593 = vcmp.lt.s32.totalorder %v1311, %v1312
    %v1594 = vsel %vm1593, %v1311, %v1312
    %v1595 = vand.u32 %v1594, 65535
    %v1596 = vshra.s32 %v1594, 16
    %v1597 = vcvt.s32.f32 %v1595
    %v1598 = vcvt.s32.f32 %v1596
    %1599 = vmin.xlane.f32.xlu0 %v1598
    %v1600 = vpop.xlane.xlu0 %1599
    %vm1601 = vcmp.eq.f32.partialorder %v1598, %v1600
    %v1602 = vsel %vm1601, %v1597, inf
    %1603 = vmin.xlane.f32.xlu0 %v1602
    %v1604 = vpop.xlane.xlu0 %1603
    %v1605 = vcvt.f32.s32 %v1604
    %v1606 = vcvt.f32.s32 %v1600
    %v1607 = vshll.u32 %v1606, 16
    %v1608 = vadd.s32 %v1607, %v1605
    %vm1609 = vcmp.lt.s32.totalorder %v1313, %v1314
    %v1610 = vsel %vm1609, %v1313, %v1314
    %v1611 = vand.u32 %v1610, 65535
    %v1612 = vshra.s32 %v1610, 16
    %v1613 = vcvt.s32.f32 %v1611
    %v1614 = vcvt.s32.f32 %v1612
    %1615 = vmin.xlane.f32.xlu0 %v1614
    %v1616 = vpop.xlane.xlu0 %1615
    %vm1617 = vcmp.eq.f32.partialorder %v1614, %v1616
    %v1618 = vsel %vm1617, %v1613, inf
    %1619 = vmin.xlane.f32.xlu0 %v1618
    %v1620 = vpop.xlane.xlu0 %1619
    %v1621 = vcvt.f32.s32 %v1620
    %v1622 = vcvt.f32.s32 %v1616
    %v1623 = vshll.u32 %v1622, 16
    %v1624 = vadd.s32 %v1623, %v1621
    %vm1625 = vcmp.lt.s32.totalorder %v1315, %v1316
    %v1626 = vsel %vm1625, %v1315, %v1316
    %v1627 = vand.u32 %v1626, 65535
    %v1628 = vshra.s32 %v1626, 16
    %v1629 = vcvt.s32.f32 %v1627
    %v1630 = vcvt.s32.f32 %v1628
    %1631 = vmin.xlane.f32.xlu0 %v1630
    %v1632 = vpop.xlane.xlu0 %1631
    %vm1633 = vcmp.eq.f32.partialorder %v1630, %v1632
    %v1634 = vsel %vm1633, %v1629, inf
    %1635 = vmin.xlane.f32.xlu0 %v1634
    %v1636 = vpop.xlane.xlu0 %1635
    %v1637 = vcvt.f32.s32 %v1636
    %v1638 = vcvt.f32.s32 %v1632
    %v1639 = vshll.u32 %v1638, 16
    %v1640 = vadd.s32 %v1639, %v1637
    %vm1641 = vcmp.lt.s32.totalorder %v1317, %v1318
    %v1642 = vsel %vm1641, %v1317, %v1318
    %v1643 = vand.u32 %v1642, 65535
    %v1644 = vshra.s32 %v1642, 16
    %v1645 = vcvt.s32.f32 %v1643
    %v1646 = vcvt.s32.f32 %v1644
    %1647 = vmin.xlane.f32.xlu0 %v1646
    %v1648 = vpop.xlane.xlu0 %1647
    %vm1649 = vcmp.eq.f32.partialorder %v1646, %v1648
    %v1650 = vsel %vm1649, %v1645, inf
    %1651 = vmin.xlane.f32.xlu0 %v1650
    %v1652 = vpop.xlane.xlu0 %1651
    %v1653 = vcvt.f32.s32 %v1652
    %v1654 = vcvt.f32.s32 %v1648
    %v1655 = vshll.u32 %v1654, 16
    %v1656 = vadd.s32 %v1655, %v1653
    %vm1657 = vcmp.lt.s32.totalorder %v1319, %v1320
    %v1658 = vsel %vm1657, %v1319, %v1320
    %v1659 = vand.u32 %v1658, 65535
    %v1660 = vshra.s32 %v1658, 16
    %v1661 = vcvt.s32.f32 %v1659
    %v1662 = vcvt.s32.f32 %v1660
    %1663 = vmin.xlane.f32.xlu0 %v1662
    %v1664 = vpop.xlane.xlu0 %1663
    %vm1665 = vcmp.eq.f32.partialorder %v1662, %v1664
    %v1666 = vsel %vm1665, %v1661, inf
    %1667 = vmin.xlane.f32.xlu0 %v1666
    %v1668 = vpop.xlane.xlu0 %1667
    %v1669 = vcvt.f32.s32 %v1668
    %v1670 = vcvt.f32.s32 %v1664
    %v1671 = vshll.u32 %v1670, 16
    %v1672 = vadd.s32 %v1671, %v1669
    %vm1673 = vcmp.lt.s32.totalorder %v1321, %v1322
    %v1674 = vsel %vm1673, %v1321, %v1322
    %v1675 = vand.u32 %v1674, 65535
    %v1676 = vshra.s32 %v1674, 16
    %v1677 = vcvt.s32.f32 %v1675
    %v1678 = vcvt.s32.f32 %v1676
    %1679 = vmin.xlane.f32.xlu0 %v1678
    %v1680 = vpop.xlane.xlu0 %1679
    %vm1681 = vcmp.eq.f32.partialorder %v1678, %v1680
    %v1682 = vsel %vm1681, %v1677, inf
    %1683 = vmin.xlane.f32.xlu0 %v1682
    %v1684 = vpop.xlane.xlu0 %1683
    %v1685 = vcvt.f32.s32 %v1684
    %v1686 = vcvt.f32.s32 %v1680
    %v1687 = vshll.u32 %v1686, 16
    %v1688 = vadd.s32 %v1687, %v1685
    %vm1689 = vcmp.lt.s32.totalorder %v1323, %v1324
    %v1690 = vsel %vm1689, %v1323, %v1324
    %v1691 = vand.u32 %v1690, 65535
    %v1692 = vshra.s32 %v1690, 16
    %v1693 = vcvt.s32.f32 %v1691
    %v1694 = vcvt.s32.f32 %v1692
    %1695 = vmin.xlane.f32.xlu0 %v1694
    %v1696 = vpop.xlane.xlu0 %1695
    %vm1697 = vcmp.eq.f32.partialorder %v1694, %v1696
    %v1698 = vsel %vm1697, %v1693, inf
    %1699 = vmin.xlane.f32.xlu0 %v1698
    %v1700 = vpop.xlane.xlu0 %1699
    %v1701 = vcvt.f32.s32 %v1700
    %v1702 = vcvt.f32.s32 %v1696
    %v1703 = vshll.u32 %v1702, 16
    %v1704 = vadd.s32 %v1703, %v1701
    %vm1705 = vcmp.lt.s32.totalorder %v1325, %v1326
    %v1706 = vsel %vm1705, %v1325, %v1326
    %v1707 = vand.u32 %v1706, 65535
    %v1708 = vshra.s32 %v1706, 16
    %v1709 = vcvt.s32.f32 %v1707
    %v1710 = vcvt.s32.f32 %v1708
    %1711 = vmin.xlane.f32.xlu0 %v1710
    %v1712 = vpop.xlane.xlu0 %1711
    %vm1713 = vcmp.eq.f32.partialorder %v1710, %v1712
    %v1714 = vsel %vm1713, %v1709, inf
    %1715 = vmin.xlane.f32.xlu0 %v1714
    %v1716 = vpop.xlane.xlu0 %1715
    %v1717 = vcvt.f32.s32 %v1716
    %v1718 = vcvt.f32.s32 %v1712
    %v1719 = vshll.u32 %v1718, 16
    %v1720 = vadd.s32 %v1719, %v1717
    %vm1721 = vcmp.lt.s32.totalorder %v1327, %v1328
    %v1722 = vsel %vm1721, %v1327, %v1328
    %v1723 = vand.u32 %v1722, 65535
    %v1724 = vshra.s32 %v1722, 16
    %v1725 = vcvt.s32.f32 %v1723
    %v1726 = vcvt.s32.f32 %v1724
    %1727 = vmin.xlane.f32.xlu0 %v1726
    %v1728 = vpop.xlane.xlu0 %1727
    %vm1729 = vcmp.eq.f32.partialorder %v1726, %v1728
    %v1730 = vsel %vm1729, %v1725, inf
    %1731 = vmin.xlane.f32.xlu0 %v1730
    %v1732 = vpop.xlane.xlu0 %1731
    %v1733 = vcvt.f32.s32 %v1732
    %v1734 = vcvt.f32.s32 %v1728
    %v1735 = vshll.u32 %v1734, 16
    %v1736 = vadd.s32 %v1735, %v1733
    %vm1737 = vcmp.lt.s32.totalorder %v1329, %v1330
    %v1738 = vsel %vm1737, %v1329, %v1330
    %v1739 = vand.u32 %v1738, 65535
    %v1740 = vshra.s32 %v1738, 16
    %v1741 = vcvt.s32.f32 %v1739
    %v1742 = vcvt.s32.f32 %v1740
    %1743 = vmin.xlane.f32.xlu0 %v1742
    %v1744 = vpop.xlane.xlu0 %1743
    %vm1745 = vcmp.eq.f32.partialorder %v1742, %v1744
    %v1746 = vsel %vm1745, %v1741, inf
    %1747 = vmin.xlane.f32.xlu0 %v1746
    %v1748 = vpop.xlane.xlu0 %1747
    %v1749 = vcvt.f32.s32 %v1748
    %v1750 = vcvt.f32.s32 %v1744
    %v1751 = vshll.u32 %v1750, 16
    %v1752 = vadd.s32 %v1751, %v1749
    %vm1753 = vcmp.lt.s32.totalorder %v1331, %v1332
    %v1754 = vsel %vm1753, %v1331, %v1332
    %v1755 = vand.u32 %v1754, 65535
    %v1756 = vshra.s32 %v1754, 16
    %v1757 = vcvt.s32.f32 %v1755
    %v1758 = vcvt.s32.f32 %v1756
    %1759 = vmin.xlane.f32.xlu0 %v1758
    %v1760 = vpop.xlane.xlu0 %1759
    %vm1761 = vcmp.eq.f32.partialorder %v1758, %v1760
    %v1762 = vsel %vm1761, %v1757, inf
    %1763 = vmin.xlane.f32.xlu0 %v1762
    %v1764 = vpop.xlane.xlu0 %1763
    %v1765 = vcvt.f32.s32 %v1764
    %v1766 = vcvt.f32.s32 %v1760
    %v1767 = vshll.u32 %v1766, 16
    %v1768 = vadd.s32 %v1767, %v1765
    %vm1769 = vcmp.lt.s32.totalorder %v1333, %v1334
    %v1770 = vsel %vm1769, %v1333, %v1334
    %v1771 = vand.u32 %v1770, 65535
    %v1772 = vshra.s32 %v1770, 16
    %v1773 = vcvt.s32.f32 %v1771
    %v1774 = vcvt.s32.f32 %v1772
    %1775 = vmin.xlane.f32.xlu0 %v1774
    %v1776 = vpop.xlane.xlu0 %1775
    %vm1777 = vcmp.eq.f32.partialorder %v1774, %v1776
    %v1778 = vsel %vm1777, %v1773, inf
    %1779 = vmin.xlane.f32.xlu0 %v1778
    %v1780 = vpop.xlane.xlu0 %1779
    %v1781 = vcvt.f32.s32 %v1780
    %v1782 = vcvt.f32.s32 %v1776
    %v1783 = vshll.u32 %v1782, 16
    %v1784 = vadd.s32 %v1783, %v1781
    %vm1785 = vcmp.lt.s32.totalorder %v1335, %v1336
    %v1786 = vsel %vm1785, %v1335, %v1336
    %v1787 = vand.u32 %v1786, 65535
    %v1788 = vshra.s32 %v1786, 16
    %v1789 = vcvt.s32.f32 %v1787
    %v1790 = vcvt.s32.f32 %v1788
    %1791 = vmin.xlane.f32.xlu0 %v1790
    %v1792 = vpop.xlane.xlu0 %1791
    %vm1793 = vcmp.eq.f32.partialorder %v1790, %v1792
    %v1794 = vsel %vm1793, %v1789, inf
    %1795 = vmin.xlane.f32.xlu0 %v1794
    %v1796 = vpop.xlane.xlu0 %1795
    %v1797 = vcvt.f32.s32 %v1796
    %v1798 = vcvt.f32.s32 %v1792
    %v1799 = vshll.u32 %v1798, 16
    %v1800 = vadd.s32 %v1799, %v1797
    %vm1801 = vcmp.lt.s32.totalorder %v1337, %v1338
    %v1802 = vsel %vm1801, %v1337, %v1338
    %v1803 = vand.u32 %v1802, 65535
    %v1804 = vshra.s32 %v1802, 16
    %v1805 = vcvt.s32.f32 %v1803
    %v1806 = vcvt.s32.f32 %v1804
    %1807 = vmin.xlane.f32.xlu0 %v1806
    %v1808 = vpop.xlane.xlu0 %1807
    %vm1809 = vcmp.eq.f32.partialorder %v1806, %v1808
    %v1810 = vsel %vm1809, %v1805, inf
    %1811 = vmin.xlane.f32.xlu0 %v1810
    %v1812 = vpop.xlane.xlu0 %1811
    %v1813 = vcvt.f32.s32 %v1812
    %v1814 = vcvt.f32.s32 %v1808
    %v1815 = vshll.u32 %v1814, 16
    %v1816 = vadd.s32 %v1815, %v1813
    %vm1817 = vcmp.lt.s32.totalorder %v1339, %v1340
    %v1818 = vsel %vm1817, %v1339, %v1340
    %v1819 = vand.u32 %v1818, 65535
    %v1820 = vshra.s32 %v1818, 16
    %v1821 = vcvt.s32.f32 %v1819
    %v1822 = vcvt.s32.f32 %v1820
    %1823 = vmin.xlane.f32.xlu0 %v1822
    %v1824 = vpop.xlane.xlu0 %1823
    %vm1825 = vcmp.eq.f32.partialorder %v1822, %v1824
    %v1826 = vsel %vm1825, %v1821, inf
    %1827 = vmin.xlane.f32.xlu0 %v1826
    %v1828 = vpop.xlane.xlu0 %1827
    %v1829 = vcvt.f32.s32 %v1828
    %v1830 = vcvt.f32.s32 %v1824
    %v1831 = vshll.u32 %v1830, 16
    %v1832 = vadd.s32 %v1831, %v1829
    %vm1833 = vcmp.lt.s32.totalorder %v1341, %v1342
    %v1834 = vsel %vm1833, %v1341, %v1342
    %v1835 = vand.u32 %v1834, 65535
    %v1836 = vshra.s32 %v1834, 16
    %v1837 = vcvt.s32.f32 %v1835
    %v1838 = vcvt.s32.f32 %v1836
    %1839 = vmin.xlane.f32.xlu0 %v1838
    %v1840 = vpop.xlane.xlu0 %1839
    %vm1841 = vcmp.eq.f32.partialorder %v1838, %v1840
    %v1842 = vsel %vm1841, %v1837, inf
    %1843 = vmin.xlane.f32.xlu0 %v1842
    %v1844 = vpop.xlane.xlu0 %1843
    %v1845 = vcvt.f32.s32 %v1844
    %v1846 = vcvt.f32.s32 %v1840
    %v1847 = vshll.u32 %v1846, 16
    %v1848 = vadd.s32 %v1847, %v1845
    %vm1849 = vcmp.lt.s32.totalorder %v1343, %v1344
    %v1850 = vsel %vm1849, %v1343, %v1344
    %v1851 = vand.u32 %v1850, 65535
    %v1852 = vshra.s32 %v1850, 16
    %v1853 = vcvt.s32.f32 %v1851
    %v1854 = vcvt.s32.f32 %v1852
    %1855 = vmin.xlane.f32.xlu0 %v1854
    %v1856 = vpop.xlane.xlu0 %1855
    %vm1857 = vcmp.eq.f32.partialorder %v1854, %v1856
    %v1858 = vsel %vm1857, %v1853, inf
    %1859 = vmin.xlane.f32.xlu0 %v1858
    %v1860 = vpop.xlane.xlu0 %1859
    %v1861 = vcvt.f32.s32 %v1860
    %v1862 = vcvt.f32.s32 %v1856
    %v1863 = vshll.u32 %v1862, 16
    %v1864 = vadd.s32 %v1863, %v1861
    %vm1865 = vcmp.lt.s32.totalorder %v1345, %v1346
    %v1866 = vsel %vm1865, %v1345, %v1346
    %v1867 = vand.u32 %v1866, 65535
    %v1868 = vshra.s32 %v1866, 16
    %v1869 = vcvt.s32.f32 %v1867
    %v1870 = vcvt.s32.f32 %v1868
    %1871 = vmin.xlane.f32.xlu0 %v1870
    %v1872 = vpop.xlane.xlu0 %1871
    %vm1873 = vcmp.eq.f32.partialorder %v1870, %v1872
    %v1874 = vsel %vm1873, %v1869, inf
    %1875 = vmin.xlane.f32.xlu0 %v1874
    %v1876 = vpop.xlane.xlu0 %1875
    %v1877 = vcvt.f32.s32 %v1876
    %v1878 = vcvt.f32.s32 %v1872
    %v1879 = vshll.u32 %v1878, 16
    %v1880 = vadd.s32 %v1879, %v1877
    %vm1881 = vcmp.lt.s32.totalorder %v1347, %v1348
    %v1882 = vsel %vm1881, %v1347, %v1348
    %v1883 = vand.u32 %v1882, 65535
    %v1884 = vshra.s32 %v1882, 16
    %v1885 = vcvt.s32.f32 %v1883
    %v1886 = vcvt.s32.f32 %v1884
    %1887 = vmin.xlane.f32.xlu0 %v1886
    %v1888 = vpop.xlane.xlu0 %1887
    %vm1889 = vcmp.eq.f32.partialorder %v1886, %v1888
    %v1890 = vsel %vm1889, %v1885, inf
    %1891 = vmin.xlane.f32.xlu0 %v1890
    %v1892 = vpop.xlane.xlu0 %1891
    %v1893 = vcvt.f32.s32 %v1892
    %v1894 = vcvt.f32.s32 %v1888
    %v1895 = vshll.u32 %v1894, 16
    %v1896 = vadd.s32 %v1895, %v1893
    %vm1897 = vcmp.lt.s32.totalorder %v1349, %v1350
    %v1898 = vsel %vm1897, %v1349, %v1350
    %v1899 = vand.u32 %v1898, 65535
    %v1900 = vshra.s32 %v1898, 16
    %v1901 = vcvt.s32.f32 %v1899
    %v1902 = vcvt.s32.f32 %v1900
    %1903 = vmin.xlane.f32.xlu0 %v1902
    %v1904 = vpop.xlane.xlu0 %1903
    %vm1905 = vcmp.eq.f32.partialorder %v1902, %v1904
    %v1906 = vsel %vm1905, %v1901, inf
    %1907 = vmin.xlane.f32.xlu0 %v1906
    %v1908 = vpop.xlane.xlu0 %1907
    %v1909 = vcvt.f32.s32 %v1908
    %v1910 = vcvt.f32.s32 %v1904
    %v1911 = vshll.u32 %v1910, 16
    %v1912 = vadd.s32 %v1911, %v1909
    %vm1913 = vcmp.lt.s32.totalorder %v1351, %v1352
    %v1914 = vsel %vm1913, %v1351, %v1352
    %v1915 = vand.u32 %v1914, 65535
    %v1916 = vshra.s32 %v1914, 16
    %v1917 = vcvt.s32.f32 %v1915
    %v1918 = vcvt.s32.f32 %v1916
    %1919 = vmin.xlane.f32.xlu0 %v1918
    %v1920 = vpop.xlane.xlu0 %1919
    %vm1921 = vcmp.eq.f32.partialorder %v1918, %v1920
    %v1922 = vsel %vm1921, %v1917, inf
    %1923 = vmin.xlane.f32.xlu0 %v1922
    %v1924 = vpop.xlane.xlu0 %1923
    %v1925 = vcvt.f32.s32 %v1924
    %v1926 = vcvt.f32.s32 %v1920
    %v1927 = vshll.u32 %v1926, 16
    %v1928 = vadd.s32 %v1927, %v1925
    %vm1929 = vcmp.lt.s32.totalorder %v1353, %v1354
    %v1930 = vsel %vm1929, %v1353, %v1354
    %v1931 = vand.u32 %v1930, 65535
    %v1932 = vshra.s32 %v1930, 16
    %v1933 = vcvt.s32.f32 %v1931
    %v1934 = vcvt.s32.f32 %v1932
    %1935 = vmin.xlane.f32.xlu0 %v1934
    %v1936 = vpop.xlane.xlu0 %1935
    %vm1937 = vcmp.eq.f32.partialorder %v1934, %v1936
    %v1938 = vsel %vm1937, %v1933, inf
    %1939 = vmin.xlane.f32.xlu0 %v1938
    %v1940 = vpop.xlane.xlu0 %1939
    %v1941 = vcvt.f32.s32 %v1940
    %v1942 = vcvt.f32.s32 %v1936
    %v1943 = vshll.u32 %v1942, 16
    %v1944 = vadd.s32 %v1943, %v1941
    %vm1945 = vcmp.lt.s32.totalorder %v1355, %v1356
    %v1946 = vsel %vm1945, %v1355, %v1356
    %v1947 = vand.u32 %v1946, 65535
    %v1948 = vshra.s32 %v1946, 16
    %v1949 = vcvt.s32.f32 %v1947
    %v1950 = vcvt.s32.f32 %v1948
    %1951 = vmin.xlane.f32.xlu0 %v1950
    %v1952 = vpop.xlane.xlu0 %1951
    %vm1953 = vcmp.eq.f32.partialorder %v1950, %v1952
    %v1954 = vsel %vm1953, %v1949, inf
    %1955 = vmin.xlane.f32.xlu0 %v1954
    %v1956 = vpop.xlane.xlu0 %1955
    %v1957 = vcvt.f32.s32 %v1956
    %v1958 = vcvt.f32.s32 %v1952
    %v1959 = vshll.u32 %v1958, 16
    %v1960 = vadd.s32 %v1959, %v1957
    %vm1961 = vcmp.lt.s32.totalorder %v1357, %v1358
    %v1962 = vsel %vm1961, %v1357, %v1358
    %v1963 = vand.u32 %v1962, 65535
    %v1964 = vshra.s32 %v1962, 16
    %v1965 = vcvt.s32.f32 %v1963
    %v1966 = vcvt.s32.f32 %v1964
    %1967 = vmin.xlane.f32.xlu0 %v1966
    %v1968 = vpop.xlane.xlu0 %1967
    %vm1969 = vcmp.eq.f32.partialorder %v1966, %v1968
    %v1970 = vsel %vm1969, %v1965, inf
    %1971 = vmin.xlane.f32.xlu0 %v1970
    %v1972 = vpop.xlane.xlu0 %1971
    %v1973 = vcvt.f32.s32 %v1972
    %v1974 = vcvt.f32.s32 %v1968
    %v1975 = vshll.u32 %v1974, 16
    %v1976 = vadd.s32 %v1975, %v1973
    %vm1977 = vcmp.lt.s32.totalorder %v1359, %v1360
    %v1978 = vsel %vm1977, %v1359, %v1360
    %v1979 = vand.u32 %v1978, 65535
    %v1980 = vshra.s32 %v1978, 16
    %v1981 = vcvt.s32.f32 %v1979
    %v1982 = vcvt.s32.f32 %v1980
    %1983 = vmin.xlane.f32.xlu0 %v1982
    %v1984 = vpop.xlane.xlu0 %1983
    %vm1985 = vcmp.eq.f32.partialorder %v1982, %v1984
    %v1986 = vsel %vm1985, %v1981, inf
    %1987 = vmin.xlane.f32.xlu0 %v1986
    %v1988 = vpop.xlane.xlu0 %1987
    %v1989 = vcvt.f32.s32 %v1988
    %v1990 = vcvt.f32.s32 %v1984
    %v1991 = vshll.u32 %v1990, 16
    %v1992 = vadd.s32 %v1991, %v1989
    %vm1993 = vcmp.lt.s32.totalorder %v1361, %v1362
    %v1994 = vsel %vm1993, %v1361, %v1362
    %v1995 = vand.u32 %v1994, 65535
    %v1996 = vshra.s32 %v1994, 16
    %v1997 = vcvt.s32.f32 %v1995
    %v1998 = vcvt.s32.f32 %v1996
    %1999 = vmin.xlane.f32.xlu0 %v1998
    %v2000 = vpop.xlane.xlu0 %1999
    %vm2001 = vcmp.eq.f32.partialorder %v1998, %v2000
    %v2002 = vsel %vm2001, %v1997, inf
    %2003 = vmin.xlane.f32.xlu0 %v2002
    %v2004 = vpop.xlane.xlu0 %2003
    %v2005 = vcvt.f32.s32 %v2004
    %v2006 = vcvt.f32.s32 %v2000
    %v2007 = vshll.u32 %v2006, 16
    %v2008 = vadd.s32 %v2007, %v2005
    %vm2009 = vcmp.lt.s32.totalorder %v1363, %v1364
    %v2010 = vsel %vm2009, %v1363, %v1364
    %v2011 = vand.u32 %v2010, 65535
    %v2012 = vshra.s32 %v2010, 16
    %v2013 = vcvt.s32.f32 %v2011
    %v2014 = vcvt.s32.f32 %v2012
    %2015 = vmin.xlane.f32.xlu0 %v2014
    %v2016 = vpop.xlane.xlu0 %2015
    %vm2017 = vcmp.eq.f32.partialorder %v2014, %v2016
    %v2018 = vsel %vm2017, %v2013, inf
    %2019 = vmin.xlane.f32.xlu0 %v2018
    %v2020 = vpop.xlane.xlu0 %2019
    %v2021 = vcvt.f32.s32 %v2020
    %v2022 = vcvt.f32.s32 %v2016
    %v2023 = vshll.u32 %v2022, 16
    %v2024 = vadd.s32 %v2023, %v2021
    %vm2025 = vcmp.lt.s32.totalorder %v1365, %v1366
    %v2026 = vsel %vm2025, %v1365, %v1366
    %v2027 = vand.u32 %v2026, 65535
    %v2028 = vshra.s32 %v2026, 16
    %v2029 = vcvt.s32.f32 %v2027
    %v2030 = vcvt.s32.f32 %v2028
    %2031 = vmin.xlane.f32.xlu0 %v2030
    %v2032 = vpop.xlane.xlu0 %2031
    %vm2033 = vcmp.eq.f32.partialorder %v2030, %v2032
    %v2034 = vsel %vm2033, %v2029, inf
    %2035 = vmin.xlane.f32.xlu0 %v2034
    %v2036 = vpop.xlane.xlu0 %2035
    %v2037 = vcvt.f32.s32 %v2036
    %v2038 = vcvt.f32.s32 %v2032
    %v2039 = vshll.u32 %v2038, 16
    %v2040 = vadd.s32 %v2039, %v2037
    %vm2041 = vcmp.lt.s32.totalorder %v1367, %v1368
    %v2042 = vsel %vm2041, %v1367, %v1368
    %v2043 = vand.u32 %v2042, 65535
    %v2044 = vshra.s32 %v2042, 16
    %v2045 = vcvt.s32.f32 %v2043
    %v2046 = vcvt.s32.f32 %v2044
    %2047 = vmin.xlane.f32.xlu0 %v2046
    %v2048 = vpop.xlane.xlu0 %2047
    %vm2049 = vcmp.eq.f32.partialorder %v2046, %v2048
    %v2050 = vsel %vm2049, %v2045, inf
    %2051 = vmin.xlane.f32.xlu0 %v2050
    %v2052 = vpop.xlane.xlu0 %2051
    %v2053 = vcvt.f32.s32 %v2052
    %v2054 = vcvt.f32.s32 %v2048
    %v2055 = vshll.u32 %v2054, 16
    %v2056 = vadd.s32 %v2055, %v2053
    %vm2057 = vcmp.lt.s32.totalorder %v1369, %v1370
    %v2058 = vsel %vm2057, %v1369, %v1370
    %v2059 = vand.u32 %v2058, 65535
    %v2060 = vshra.s32 %v2058, 16
    %v2061 = vcvt.s32.f32 %v2059
    %v2062 = vcvt.s32.f32 %v2060
    %2063 = vmin.xlane.f32.xlu0 %v2062
    %v2064 = vpop.xlane.xlu0 %2063
    %vm2065 = vcmp.eq.f32.partialorder %v2062, %v2064
    %v2066 = vsel %vm2065, %v2061, inf
    %2067 = vmin.xlane.f32.xlu0 %v2066
    %v2068 = vpop.xlane.xlu0 %2067
    %v2069 = vcvt.f32.s32 %v2068
    %v2070 = vcvt.f32.s32 %v2064
    %v2071 = vshll.u32 %v2070, 16
    %v2072 = vadd.s32 %v2071, %v2069
    %vm2073 = vcmp.lt.s32.totalorder %v1371, %v1372
    %v2074 = vsel %vm2073, %v1371, %v1372
    %v2075 = vand.u32 %v2074, 65535
    %v2076 = vshra.s32 %v2074, 16
    %v2077 = vcvt.s32.f32 %v2075
    %v2078 = vcvt.s32.f32 %v2076
    %2079 = vmin.xlane.f32.xlu0 %v2078
    %v2080 = vpop.xlane.xlu0 %2079
    %vm2081 = vcmp.eq.f32.partialorder %v2078, %v2080
    %v2082 = vsel %vm2081, %v2077, inf
    %2083 = vmin.xlane.f32.xlu0 %v2082
    %v2084 = vpop.xlane.xlu0 %2083
    %v2085 = vcvt.f32.s32 %v2084
    %v2086 = vcvt.f32.s32 %v2080
    %v2087 = vshll.u32 %v2086, 16
    %v2088 = vadd.s32 %v2087, %v2085
    %vm2089 = vcmp.lt.s32.totalorder %v1373, %v1374
    %v2090 = vsel %vm2089, %v1373, %v1374
    %v2091 = vand.u32 %v2090, 65535
    %v2092 = vshra.s32 %v2090, 16
    %v2093 = vcvt.s32.f32 %v2091
    %v2094 = vcvt.s32.f32 %v2092
    %2095 = vmin.xlane.f32.xlu0 %v2094
    %v2096 = vpop.xlane.xlu0 %2095
    %vm2097 = vcmp.eq.f32.partialorder %v2094, %v2096
    %v2098 = vsel %vm2097, %v2093, inf
    %2099 = vmin.xlane.f32.xlu0 %v2098
    %v2100 = vpop.xlane.xlu0 %2099
    %v2101 = vcvt.f32.s32 %v2100
    %v2102 = vcvt.f32.s32 %v2096
    %v2103 = vshll.u32 %v2102, 16
    %v2104 = vadd.s32 %v2103, %v2101
    %vm2105 = vcmp.lt.s32.totalorder %v1375, %v1376
    %v2106 = vsel %vm2105, %v1375, %v1376
    %v2107 = vand.u32 %v2106, 65535
    %v2108 = vshra.s32 %v2106, 16
    %v2109 = vcvt.s32.f32 %v2107
    %v2110 = vcvt.s32.f32 %v2108
    %2111 = vmin.xlane.f32.xlu0 %v2110
    %v2112 = vpop.xlane.xlu0 %2111
    %vm2113 = vcmp.eq.f32.partialorder %v2110, %v2112
    %v2114 = vsel %vm2113, %v2109, inf
    %2115 = vmin.xlane.f32.xlu0 %v2114
    %v2116 = vpop.xlane.xlu0 %2115
    %v2117 = vcvt.f32.s32 %v2116
    %v2118 = vcvt.f32.s32 %v2112
    %v2119 = vshll.u32 %v2118, 16
    %v2120 = vadd.s32 %v2119, %v2117
    %vm2121 = vcmp.lt.s32.totalorder %v1377, %v1378
    %v2122 = vsel %vm2121, %v1377, %v1378
    %v2123 = vand.u32 %v2122, 65535
    %v2124 = vshra.s32 %v2122, 16
    %v2125 = vcvt.s32.f32 %v2123
    %v2126 = vcvt.s32.f32 %v2124
    %2127 = vmin.xlane.f32.xlu0 %v2126
    %v2128 = vpop.xlane.xlu0 %2127
    %vm2129 = vcmp.eq.f32.partialorder %v2126, %v2128
    %v2130 = vsel %vm2129, %v2125, inf
    %2131 = vmin.xlane.f32.xlu0 %v2130
    %v2132 = vpop.xlane.xlu0 %2131
    %v2133 = vcvt.f32.s32 %v2132
    %v2134 = vcvt.f32.s32 %v2128
    %v2135 = vshll.u32 %v2134, 16
    %v2136 = vadd.s32 %v2135, %v2133
    %vm2137 = vcmp.lt.s32.totalorder %v1379, %v1380
    %v2138 = vsel %vm2137, %v1379, %v1380
    %v2139 = vand.u32 %v2138, 65535
    %v2140 = vshra.s32 %v2138, 16
    %v2141 = vcvt.s32.f32 %v2139
    %v2142 = vcvt.s32.f32 %v2140
    %2143 = vmin.xlane.f32.xlu0 %v2142
    %v2144 = vpop.xlane.xlu0 %2143
    %vm2145 = vcmp.eq.f32.partialorder %v2142, %v2144
    %v2146 = vsel %vm2145, %v2141, inf
    %2147 = vmin.xlane.f32.xlu0 %v2146
    %v2148 = vpop.xlane.xlu0 %2147
    %v2149 = vcvt.f32.s32 %v2148
    %v2150 = vcvt.f32.s32 %v2144
    %v2151 = vshll.u32 %v2150, 16
    %v2152 = vadd.s32 %v2151, %v2149
    %vm2153 = vcmp.lt.s32.totalorder %v1381, %v1382
    %v2154 = vsel %vm2153, %v1381, %v1382
    %v2155 = vand.u32 %v2154, 65535
    %v2156 = vshra.s32 %v2154, 16
    %v2157 = vcvt.s32.f32 %v2155
    %v2158 = vcvt.s32.f32 %v2156
    %2159 = vmin.xlane.f32.xlu0 %v2158
    %v2160 = vpop.xlane.xlu0 %2159
    %vm2161 = vcmp.eq.f32.partialorder %v2158, %v2160
    %v2162 = vsel %vm2161, %v2157, inf
    %2163 = vmin.xlane.f32.xlu0 %v2162
    %v2164 = vpop.xlane.xlu0 %2163
    %v2165 = vcvt.f32.s32 %v2164
    %v2166 = vcvt.f32.s32 %v2160
    %v2167 = vshll.u32 %v2166, 16
    %v2168 = vadd.s32 %v2167, %v2165
    %vm2169 = vcmp.lt.s32.totalorder %v1383, %v1384
    %v2170 = vsel %vm2169, %v1383, %v1384
    %v2171 = vand.u32 %v2170, 65535
    %v2172 = vshra.s32 %v2170, 16
    %v2173 = vcvt.s32.f32 %v2171
    %v2174 = vcvt.s32.f32 %v2172
    %2175 = vmin.xlane.f32.xlu0 %v2174
    %v2176 = vpop.xlane.xlu0 %2175
    %vm2177 = vcmp.eq.f32.partialorder %v2174, %v2176
    %v2178 = vsel %vm2177, %v2173, inf
    %2179 = vmin.xlane.f32.xlu0 %v2178
    %v2180 = vpop.xlane.xlu0 %2179
    %v2181 = vcvt.f32.s32 %v2180
    %v2182 = vcvt.f32.s32 %v2176
    %v2183 = vshll.u32 %v2182, 16
    %v2184 = vadd.s32 %v2183, %v2181
    %vm2185 = vcmp.lt.s32.totalorder %v1385, %v1386
    %v2186 = vsel %vm2185, %v1385, %v1386
    %v2187 = vand.u32 %v2186, 65535
    %v2188 = vshra.s32 %v2186, 16
    %v2189 = vcvt.s32.f32 %v2187
    %v2190 = vcvt.s32.f32 %v2188
    %2191 = vmin.xlane.f32.xlu0 %v2190
    %v2192 = vpop.xlane.xlu0 %2191
    %vm2193 = vcmp.eq.f32.partialorder %v2190, %v2192
    %v2194 = vsel %vm2193, %v2189, inf
    %2195 = vmin.xlane.f32.xlu0 %v2194
    %v2196 = vpop.xlane.xlu0 %2195
    %v2197 = vcvt.f32.s32 %v2196
    %v2198 = vcvt.f32.s32 %v2192
    %v2199 = vshll.u32 %v2198, 16
    %v2200 = vadd.s32 %v2199, %v2197
    %vm2201 = vcmp.lt.s32.totalorder %v1387, %v1388
    %v2202 = vsel %vm2201, %v1387, %v1388
    %v2203 = vand.u32 %v2202, 65535
    %v2204 = vshra.s32 %v2202, 16
    %v2205 = vcvt.s32.f32 %v2203
    %v2206 = vcvt.s32.f32 %v2204
    %2207 = vmin.xlane.f32.xlu0 %v2206
    %v2208 = vpop.xlane.xlu0 %2207
    %vm2209 = vcmp.eq.f32.partialorder %v2206, %v2208
    %v2210 = vsel %vm2209, %v2205, inf
    %2211 = vmin.xlane.f32.xlu0 %v2210
    %v2212 = vpop.xlane.xlu0 %2211
    %v2213 = vcvt.f32.s32 %v2212
    %v2214 = vcvt.f32.s32 %v2208
    %v2215 = vshll.u32 %v2214, 16
    %v2216 = vadd.s32 %v2215, %v2213
    %vm2217 = vcmp.lt.s32.totalorder %v1389, %v1390
    %v2218 = vsel %vm2217, %v1389, %v1390
    %v2219 = vand.u32 %v2218, 65535
    %v2220 = vshra.s32 %v2218, 16
    %v2221 = vcvt.s32.f32 %v2219
    %v2222 = vcvt.s32.f32 %v2220
    %2223 = vmin.xlane.f32.xlu0 %v2222
    %v2224 = vpop.xlane.xlu0 %2223
    %vm2225 = vcmp.eq.f32.partialorder %v2222, %v2224
    %v2226 = vsel %vm2225, %v2221, inf
    %2227 = vmin.xlane.f32.xlu0 %v2226
    %v2228 = vpop.xlane.xlu0 %2227
    %v2229 = vcvt.f32.s32 %v2228
    %v2230 = vcvt.f32.s32 %v2224
    %v2231 = vshll.u32 %v2230, 16
    %v2232 = vadd.s32 %v2231, %v2229
    %vm2233 = vcmp.lt.s32.totalorder %v1391, %v1392
    %v2234 = vsel %vm2233, %v1391, %v1392
    %v2235 = vand.u32 %v2234, 65535
    %v2236 = vshra.s32 %v2234, 16
    %v2237 = vcvt.s32.f32 %v2235
    %v2238 = vcvt.s32.f32 %v2236
    %2239 = vmin.xlane.f32.xlu0 %v2238
    %v2240 = vpop.xlane.xlu0 %2239
    %vm2241 = vcmp.eq.f32.partialorder %v2238, %v2240
    %v2242 = vsel %vm2241, %v2237, inf
    %2243 = vmin.xlane.f32.xlu0 %v2242
    %v2244 = vpop.xlane.xlu0 %2243
    %v2245 = vcvt.f32.s32 %v2244
    %v2246 = vcvt.f32.s32 %v2240
    %v2247 = vshll.u32 %v2246, 16
    %v2248 = vadd.s32 %v2247, %v2245
    %vm2249 = vcmp.lt.s32.totalorder %v1393, %v1394
    %v2250 = vsel %vm2249, %v1393, %v1394
    %v2251 = vand.u32 %v2250, 65535
    %v2252 = vshra.s32 %v2250, 16
    %v2253 = vcvt.s32.f32 %v2251
    %v2254 = vcvt.s32.f32 %v2252
    %2255 = vmin.xlane.f32.xlu0 %v2254
    %v2256 = vpop.xlane.xlu0 %2255
    %vm2257 = vcmp.eq.f32.partialorder %v2254, %v2256
    %v2258 = vsel %vm2257, %v2253, inf
    %2259 = vmin.xlane.f32.xlu0 %v2258
    %v2260 = vpop.xlane.xlu0 %2259
    %v2261 = vcvt.f32.s32 %v2260
    %v2262 = vcvt.f32.s32 %v2256
    %v2263 = vshll.u32 %v2262, 16
    %v2264 = vadd.s32 %v2263, %v2261
    %vm2265 = vcmp.lt.s32.totalorder %v1395, %v1396
    %v2266 = vsel %vm2265, %v1395, %v1396
    %v2267 = vand.u32 %v2266, 65535
    %v2268 = vshra.s32 %v2266, 16
    %v2269 = vcvt.s32.f32 %v2267
    %v2270 = vcvt.s32.f32 %v2268
    %2271 = vmin.xlane.f32.xlu0 %v2270
    %v2272 = vpop.xlane.xlu0 %2271
    %vm2273 = vcmp.eq.f32.partialorder %v2270, %v2272
    %v2274 = vsel %vm2273, %v2269, inf
    %2275 = vmin.xlane.f32.xlu0 %v2274
    %v2276 = vpop.xlane.xlu0 %2275
    %v2277 = vcvt.f32.s32 %v2276
    %v2278 = vcvt.f32.s32 %v2272
    %v2279 = vshll.u32 %v2278, 16
    %v2280 = vadd.s32 %v2279, %v2277
    %vm2281 = vcmp.lt.s32.totalorder %v1397, %v1398
    %v2282 = vsel %vm2281, %v1397, %v1398
    %v2283 = vand.u32 %v2282, 65535
    %v2284 = vshra.s32 %v2282, 16
    %v2285 = vcvt.s32.f32 %v2283
    %v2286 = vcvt.s32.f32 %v2284
    %2287 = vmin.xlane.f32.xlu0 %v2286
    %v2288 = vpop.xlane.xlu0 %2287
    %vm2289 = vcmp.eq.f32.partialorder %v2286, %v2288
    %v2290 = vsel %vm2289, %v2285, inf
    %2291 = vmin.xlane.f32.xlu0 %v2290
    %v2292 = vpop.xlane.xlu0 %2291
    %v2293 = vcvt.f32.s32 %v2292
    %v2294 = vcvt.f32.s32 %v2288
    %v2295 = vshll.u32 %v2294, 16
    %v2296 = vadd.s32 %v2295, %v2293
    %vm2297 = vcmp.lt.s32.totalorder %v1399, %v1400
    %v2298 = vsel %vm2297, %v1399, %v1400
    %v2299 = vand.u32 %v2298, 65535
    %v2300 = vshra.s32 %v2298, 16
    %v2301 = vcvt.s32.f32 %v2299
    %v2302 = vcvt.s32.f32 %v2300
    %2303 = vmin.xlane.f32.xlu0 %v2302
    %v2304 = vpop.xlane.xlu0 %2303
    %vm2305 = vcmp.eq.f32.partialorder %v2302, %v2304
    %v2306 = vsel %vm2305, %v2301, inf
    %2307 = vmin.xlane.f32.xlu0 %v2306
    %v2308 = vpop.xlane.xlu0 %2307
    %v2309 = vcvt.f32.s32 %v2308
    %v2310 = vcvt.f32.s32 %v2304
    %v2311 = vshll.u32 %v2310, 16
    %v2312 = vadd.s32 %v2311, %v2309
    %vm2313 = vcmp.lt.s32.totalorder %v1401, %v1402
    %v2314 = vsel %vm2313, %v1401, %v1402
    %v2315 = vand.u32 %v2314, 65535
    %v2316 = vshra.s32 %v2314, 16
    %v2317 = vcvt.s32.f32 %v2315
    %v2318 = vcvt.s32.f32 %v2316
    %2319 = vmin.xlane.f32.xlu0 %v2318
    %v2320 = vpop.xlane.xlu0 %2319
    %vm2321 = vcmp.eq.f32.partialorder %v2318, %v2320
    %v2322 = vsel %vm2321, %v2317, inf
    %2323 = vmin.xlane.f32.xlu0 %v2322
    %v2324 = vpop.xlane.xlu0 %2323
    %v2325 = vcvt.f32.s32 %v2324
    %v2326 = vcvt.f32.s32 %v2320
    %v2327 = vshll.u32 %v2326, 16
    %v2328 = vadd.s32 %v2327, %v2325
    %vm2329 = vcmp.lt.s32.totalorder %v1403, %v1404
    %v2330 = vsel %vm2329, %v1403, %v1404
    %v2331 = vand.u32 %v2330, 65535
    %v2332 = vshra.s32 %v2330, 16
    %v2333 = vcvt.s32.f32 %v2331
    %v2334 = vcvt.s32.f32 %v2332
    %2335 = vmin.xlane.f32.xlu0 %v2334
    %v2336 = vpop.xlane.xlu0 %2335
    %vm2337 = vcmp.eq.f32.partialorder %v2334, %v2336
    %v2338 = vsel %vm2337, %v2333, inf
    %2339 = vmin.xlane.f32.xlu0 %v2338
    %v2340 = vpop.xlane.xlu0 %2339
    %v2341 = vcvt.f32.s32 %v2340
    %v2342 = vcvt.f32.s32 %v2336
    %v2343 = vshll.u32 %v2342, 16
    %v2344 = vadd.s32 %v2343, %v2341
    %vm2345 = vcmp.lt.s32.totalorder %v1405, %v1406
    %v2346 = vsel %vm2345, %v1405, %v1406
    %v2347 = vand.u32 %v2346, 65535
    %v2348 = vshra.s32 %v2346, 16
    %v2349 = vcvt.s32.f32 %v2347
    %v2350 = vcvt.s32.f32 %v2348
    %2351 = vmin.xlane.f32.xlu0 %v2350
    %v2352 = vpop.xlane.xlu0 %2351
    %vm2353 = vcmp.eq.f32.partialorder %v2350, %v2352
    %v2354 = vsel %vm2353, %v2349, inf
    %2355 = vmin.xlane.f32.xlu0 %v2354
    %v2356 = vpop.xlane.xlu0 %2355
    %v2357 = vcvt.f32.s32 %v2356
    %v2358 = vcvt.f32.s32 %v2352
    %v2359 = vshll.u32 %v2358, 16
    %v2360 = vadd.s32 %v2359, %v2357
    %vm2361 = vcmp.lt.s32.totalorder %v1407, %v1408
    %v2362 = vsel %vm2361, %v1407, %v1408
    %v2363 = vand.u32 %v2362, 65535
    %v2364 = vshra.s32 %v2362, 16
    %v2365 = vcvt.s32.f32 %v2363
    %v2366 = vcvt.s32.f32 %v2364
    %2367 = vmin.xlane.f32.xlu0 %v2366
    %v2368 = vpop.xlane.xlu0 %2367
    %vm2369 = vcmp.eq.f32.partialorder %v2366, %v2368
    %v2370 = vsel %vm2369, %v2365, inf
    %2371 = vmin.xlane.f32.xlu0 %v2370
    %v2372 = vpop.xlane.xlu0 %2371
    %v2373 = vcvt.f32.s32 %v2372
    %v2374 = vcvt.f32.s32 %v2368
    %v2375 = vshll.u32 %v2374, 16
    %v2376 = vadd.s32 %v2375, %v2373
    %vm2377 = vcmp.lt.s32.totalorder %v1409, %v1410
    %v2378 = vsel %vm2377, %v1409, %v1410
    %v2379 = vand.u32 %v2378, 65535
    %v2380 = vshra.s32 %v2378, 16
    %v2381 = vcvt.s32.f32 %v2379
    %v2382 = vcvt.s32.f32 %v2380
    %2383 = vmin.xlane.f32.xlu0 %v2382
    %v2384 = vpop.xlane.xlu0 %2383
    %vm2385 = vcmp.eq.f32.partialorder %v2382, %v2384
    %v2386 = vsel %vm2385, %v2381, inf
    %2387 = vmin.xlane.f32.xlu0 %v2386
    %v2388 = vpop.xlane.xlu0 %2387
    %v2389 = vcvt.f32.s32 %v2388
    %v2390 = vcvt.f32.s32 %v2384
    %v2391 = vshll.u32 %v2390, 16
    %v2392 = vadd.s32 %v2391, %v2389
    %vm2393 = vcmp.lt.s32.totalorder %v1411, %v1412
    %v2394 = vsel %vm2393, %v1411, %v1412
    %v2395 = vand.u32 %v2394, 65535
    %v2396 = vshra.s32 %v2394, 16
    %v2397 = vcvt.s32.f32 %v2395
    %v2398 = vcvt.s32.f32 %v2396
    %2399 = vmin.xlane.f32.xlu0 %v2398
    %v2400 = vpop.xlane.xlu0 %2399
    %vm2401 = vcmp.eq.f32.partialorder %v2398, %v2400
    %v2402 = vsel %vm2401, %v2397, inf
    %2403 = vmin.xlane.f32.xlu0 %v2402
    %v2404 = vpop.xlane.xlu0 %2403
    %v2405 = vcvt.f32.s32 %v2404
    %v2406 = vcvt.f32.s32 %v2400
    %v2407 = vshll.u32 %v2406, 16
    %v2408 = vadd.s32 %v2407, %v2405
    %vm2409 = vcmp.lt.s32.totalorder %v1413, %v1414
    %v2410 = vsel %vm2409, %v1413, %v1414
    %v2411 = vand.u32 %v2410, 65535
    %v2412 = vshra.s32 %v2410, 16
    %v2413 = vcvt.s32.f32 %v2411
    %v2414 = vcvt.s32.f32 %v2412
    %2415 = vmin.xlane.f32.xlu0 %v2414
    %v2416 = vpop.xlane.xlu0 %2415
    %vm2417 = vcmp.eq.f32.partialorder %v2414, %v2416
    %v2418 = vsel %vm2417, %v2413, inf
    %2419 = vmin.xlane.f32.xlu0 %v2418
    %v2420 = vpop.xlane.xlu0 %2419
    %v2421 = vcvt.f32.s32 %v2420
    %v2422 = vcvt.f32.s32 %v2416
    %v2423 = vshll.u32 %v2422, 16
    %v2424 = vadd.s32 %v2423, %v2421
    %vm2425 = vcmp.lt.s32.totalorder %v1415, %v1416
    %v2426 = vsel %vm2425, %v1415, %v1416
    %v2427 = vand.u32 %v2426, 65535
    %v2428 = vshra.s32 %v2426, 16
    %v2429 = vcvt.s32.f32 %v2427
    %v2430 = vcvt.s32.f32 %v2428
    %2431 = vmin.xlane.f32.xlu0 %v2430
    %v2432 = vpop.xlane.xlu0 %2431
    %vm2433 = vcmp.eq.f32.partialorder %v2430, %v2432
    %v2434 = vsel %vm2433, %v2429, inf
    %2435 = vmin.xlane.f32.xlu0 %v2434
    %v2436 = vpop.xlane.xlu0 %2435
    %v2437 = vcvt.f32.s32 %v2436
    %v2438 = vcvt.f32.s32 %v2432
    %v2439 = vshll.u32 %v2438, 16
    %v2440 = vadd.s32 %v2439, %v2437
    %vm2441 = vcmask 7168
    %2442 = vst.msk [vmem:[%s5] sm:$0xff] %vm2441, %v1432
    %2443 = vst.msk [vmem:[%s5 + $0x8] sm:$0xff] %vm2441, %v1448
    %2444 = vst.msk [vmem:[%s5 + $0x10] sm:$0xff] %vm2441, %v1464
    %2445 = vst.msk [vmem:[%s5 + $0x18] sm:$0xff] %vm2441, %v1480
    %2446 = vst.msk [vmem:[%s5 + $0x20] sm:$0xff] %vm2441, %v1496
    %2447 = vst.msk [vmem:[%s5 + $0x28] sm:$0xff] %vm2441, %v1512
    %2448 = vst.msk [vmem:[%s5 + $0x30] sm:$0xff] %vm2441, %v1528
    %2449 = vst.msk [vmem:[%s5 + $0x38] sm:$0xff] %vm2441, %v1544
    %2450 = vst.msk [vmem:[%s5 + $0x40] sm:$0xff] %vm2441, %v1560
    %2451 = vst.msk [vmem:[%s5 + $0x48] sm:$0xff] %vm2441, %v1576
    %2452 = vst.msk [vmem:[%s5 + $0x50] sm:$0xff] %vm2441, %v1592
    %2453 = vst.msk [vmem:[%s5 + $0x58] sm:$0xff] %vm2441, %v1608
    %2454 = vst.msk [vmem:[%s5 + $0x60] sm:$0xff] %vm2441, %v1624
    %2455 = vst.msk [vmem:[%s5 + $0x68] sm:$0xff] %vm2441, %v1640
    %2456 = vst.msk [vmem:[%s5 + $0x70] sm:$0xff] %vm2441, %v1656
    %2457 = vst.msk [vmem:[%s5 + $0x78] sm:$0xff] %vm2441, %v1672
    %2458 = vst.msk [vmem:[%s5 + $0x80] sm:$0xff] %vm2441, %v1688
    %2459 = vst.msk [vmem:[%s5 + $0x88] sm:$0xff] %vm2441, %v1704
    %2460 = vst.msk [vmem:[%s5 + $0x90] sm:$0xff] %vm2441, %v1720
    %2461 = vst.msk [vmem:[%s5 + $0x98] sm:$0xff] %vm2441, %v1736
    %2462 = vst.msk [vmem:[%s5 + $0xa0] sm:$0xff] %vm2441, %v1752
    %2463 = vst.msk [vmem:[%s5 + $0xa8] sm:$0xff] %vm2441, %v1768
    %2464 = vst.msk [vmem:[%s5 + $0xb0] sm:$0xff] %vm2441, %v1784
    %2465 = vst.msk [vmem:[%s5 + $0xb8] sm:$0xff] %vm2441, %v1800
    %2466 = vst.msk [vmem:[%s5 + $0xc0] sm:$0xff] %vm2441, %v1816
    %2467 = vst.msk [vmem:[%s5 + $0xc8] sm:$0xff] %vm2441, %v1832
    %2468 = vst.msk [vmem:[%s5 + $0xd0] sm:$0xff] %vm2441, %v1848
    %2469 = vst.msk [vmem:[%s5 + $0xd8] sm:$0xff] %vm2441, %v1864
    %2470 = vst.msk [vmem:[%s5 + $0xe0] sm:$0xff] %vm2441, %v1880
    %2471 = vst.msk [vmem:[%s5 + $0xe8] sm:$0xff] %vm2441, %v1896
    %2472 = vst.msk [vmem:[%s5 + $0xf0] sm:$0xff] %vm2441, %v1912
    %2473 = vst.msk [vmem:[%s5 + $0xf8] sm:$0xff] %vm2441, %v1928
    %2474 = vst.msk [vmem:[%s5 + $0x100] sm:$0xff] %vm2441, %v1944
    %2475 = vst.msk [vmem:[%s5 + $0x108] sm:$0xff] %vm2441, %v1960
    %2476 = vst.msk [vmem:[%s5 + $0x110] sm:$0xff] %vm2441, %v1976
    %2477 = vst.msk [vmem:[%s5 + $0x118] sm:$0xff] %vm2441, %v1992
    %2478 = vst.msk [vmem:[%s5 + $0x120] sm:$0xff] %vm2441, %v2008
    %2479 = vst.msk [vmem:[%s5 + $0x128] sm:$0xff] %vm2441, %v2024
    %2480 = vst.msk [vmem:[%s5 + $0x130] sm:$0xff] %vm2441, %v2040
    %2481 = vst.msk [vmem:[%s5 + $0x138] sm:$0xff] %vm2441, %v2056
    %2482 = vst.msk [vmem:[%s5 + $0x140] sm:$0xff] %vm2441, %v2072
    %2483 = vst.msk [vmem:[%s5 + $0x148] sm:$0xff] %vm2441, %v2088
    %2484 = vst.msk [vmem:[%s5 + $0x150] sm:$0xff] %vm2441, %v2104
    %2485 = vst.msk [vmem:[%s5 + $0x158] sm:$0xff] %vm2441, %v2120
    %2486 = vst.msk [vmem:[%s5 + $0x160] sm:$0xff] %vm2441, %v2136
    %2487 = vst.msk [vmem:[%s5 + $0x168] sm:$0xff] %vm2441, %v2152
    %2488 = vst.msk [vmem:[%s5 + $0x170] sm:$0xff] %vm2441, %v2168
    %2489 = vst.msk [vmem:[%s5 + $0x178] sm:$0xff] %vm2441, %v2184
    %2490 = vst.msk [vmem:[%s5 + $0x180] sm:$0xff] %vm2441, %v2200
    %2491 = vst.msk [vmem:[%s5 + $0x188] sm:$0xff] %vm2441, %v2216
    %2492 = vst.msk [vmem:[%s5 + $0x190] sm:$0xff] %vm2441, %v2232
    %2493 = vst.msk [vmem:[%s5 + $0x198] sm:$0xff] %vm2441, %v2248
    %2494 = vst.msk [vmem:[%s5 + $0x1a0] sm:$0xff] %vm2441, %v2264
    %2495 = vst.msk [vmem:[%s5 + $0x1a8] sm:$0xff] %vm2441, %v2280
    %2496 = vst.msk [vmem:[%s5 + $0x1b0] sm:$0xff] %vm2441, %v2296
    %2497 = vst.msk [vmem:[%s5 + $0x1b8] sm:$0xff] %vm2441, %v2312
    %2498 = vst.msk [vmem:[%s5 + $0x1c0] sm:$0xff] %vm2441, %v2328
    %2499 = vst.msk [vmem:[%s5 + $0x1c8] sm:$0xff] %vm2441, %v2344
    %2500 = vst.msk [vmem:[%s5 + $0x1d0] sm:$0xff] %vm2441, %v2360
    %2501 = vst.msk [vmem:[%s5 + $0x1d8] sm:$0xff] %vm2441, %v2376
    %2502 = vst.msk [vmem:[%s5 + $0x1e0] sm:$0xff] %vm2441, %v2392
    %2503 = vst.msk [vmem:[%s5 + $0x1e8] sm:$0xff] %vm2441, %v2408
    %2504 = vst.msk [vmem:[%s5 + $0x1f0] sm:$0xff] %vm2441, %v2424
    %2505 = vst.msk [vmem:[%s5 + $0x1f8] sm:$0xff] %vm2441, %v2440
    %vm2506 = vcmp.eq.s32.totalorder %v967, %v1432
    %vm2507 = vcmp.eq.s32.totalorder %v968, %v1432
    %vm2508 = vcmp.eq.s32.totalorder %v967, %v1448
    %vm2509 = vcmp.eq.s32.totalorder %v968, %v1448
    %vm2510 = vcmp.eq.s32.totalorder %v967, %v1464
    %vm2511 = vcmp.eq.s32.totalorder %v968, %v1464
    %vm2512 = vcmp.eq.s32.totalorder %v967, %v1480
    %vm2513 = vcmp.eq.s32.totalorder %v968, %v1480
    %vm2514 = vcmp.eq.s32.totalorder %v967, %v1496
    %vm2515 = vcmp.eq.s32.totalorder %v968, %v1496
    %vm2516 = vcmp.eq.s32.totalorder %v967, %v1512
    %vm2517 = vcmp.eq.s32.totalorder %v968, %v1512
    %vm2518 = vcmp.eq.s32.totalorder %v967, %v1528
    %vm2519 = vcmp.eq.s32.totalorder %v968, %v1528
    %vm2520 = vcmp.eq.s32.totalorder %v967, %v1544
    %vm2521 = vcmp.eq.s32.totalorder %v968, %v1544
    %vm2522 = vcmp.eq.s32.totalorder %v967, %v1560
    %vm2523 = vcmp.eq.s32.totalorder %v968, %v1560
    %vm2524 = vcmp.eq.s32.totalorder %v967, %v1576
    %vm2525 = vcmp.eq.s32.totalorder %v968, %v1576
    %vm2526 = vcmp.eq.s32.totalorder %v967, %v1592
    %vm2527 = vcmp.eq.s32.totalorder %v968, %v1592
    %vm2528 = vcmp.eq.s32.totalorder %v967, %v1608
    %vm2529 = vcmp.eq.s32.totalorder %v968, %v1608
    %vm2530 = vcmp.eq.s32.totalorder %v967, %v1624
    %vm2531 = vcmp.eq.s32.totalorder %v968, %v1624
    %vm2532 = vcmp.eq.s32.totalorder %v967, %v1640
    %vm2533 = vcmp.eq.s32.totalorder %v968, %v1640
    %vm2534 = vcmp.eq.s32.totalorder %v967, %v1656
    %vm2535 = vcmp.eq.s32.totalorder %v968, %v1656
    %vm2536 = vcmp.eq.s32.totalorder %v967, %v1672
    %vm2537 = vcmp.eq.s32.totalorder %v968, %v1672
    %vm2538 = vcmp.eq.s32.totalorder %v967, %v1688
    %vm2539 = vcmp.eq.s32.totalorder %v968, %v1688
    %vm2540 = vcmp.eq.s32.totalorder %v967, %v1704
    %vm2541 = vcmp.eq.s32.totalorder %v968, %v1704
    %vm2542 = vcmp.eq.s32.totalorder %v967, %v1720
    %vm2543 = vcmp.eq.s32.totalorder %v968, %v1720
    %vm2544 = vcmp.eq.s32.totalorder %v967, %v1736
    %vm2545 = vcmp.eq.s32.totalorder %v968, %v1736
    %vm2546 = vcmp.eq.s32.totalorder %v967, %v1752
    %vm2547 = vcmp.eq.s32.totalorder %v968, %v1752
    %vm2548 = vcmp.eq.s32.totalorder %v967, %v1768
    %vm2549 = vcmp.eq.s32.totalorder %v968, %v1768
    %vm2550 = vcmp.eq.s32.totalorder %v967, %v1784
    %vm2551 = vcmp.eq.s32.totalorder %v968, %v1784
    %vm2552 = vcmp.eq.s32.totalorder %v967, %v1800
    %vm2553 = vcmp.eq.s32.totalorder %v968, %v1800
    %vm2554 = vcmp.eq.s32.totalorder %v967, %v1816
    %vm2555 = vcmp.eq.s32.totalorder %v968, %v1816
    %vm2556 = vcmp.eq.s32.totalorder %v967, %v1832
    %vm2557 = vcmp.eq.s32.totalorder %v968, %v1832
    %vm2558 = vcmp.eq.s32.totalorder %v967, %v1848
    %vm2559 = vcmp.eq.s32.totalorder %v968, %v1848
    %vm2560 = vcmp.eq.s32.totalorder %v967, %v1864
    %vm2561 = vcmp.eq.s32.totalorder %v968, %v1864
    %vm2562 = vcmp.eq.s32.totalorder %v967, %v1880
    %vm2563 = vcmp.eq.s32.totalorder %v968, %v1880
    %vm2564 = vcmp.eq.s32.totalorder %v967, %v1896
    %vm2565 = vcmp.eq.s32.totalorder %v968, %v1896
    %vm2566 = vcmp.eq.s32.totalorder %v967, %v1912
    %vm2567 = vcmp.eq.s32.totalorder %v968, %v1912
    %vm2568 = vcmp.eq.s32.totalorder %v967, %v1928
    %vm2569 = vcmp.eq.s32.totalorder %v968, %v1928
    %vm2570 = vcmp.eq.s32.totalorder %v967, %v1944
    %vm2571 = vcmp.eq.s32.totalorder %v968, %v1944
    %vm2572 = vcmp.eq.s32.totalorder %v967, %v1960
    %vm2573 = vcmp.eq.s32.totalorder %v968, %v1960
    %vm2574 = vcmp.eq.s32.totalorder %v967, %v1976
    %vm2575 = vcmp.eq.s32.totalorder %v968, %v1976
    %vm2576 = vcmp.eq.s32.totalorder %v967, %v1992
    %vm2577 = vcmp.eq.s32.totalorder %v968, %v1992
    %vm2578 = vcmp.eq.s32.totalorder %v967, %v2008
    %vm2579 = vcmp.eq.s32.totalorder %v968, %v2008
    %vm2580 = vcmp.eq.s32.totalorder %v967, %v2024
    %vm2581 = vcmp.eq.s32.totalorder %v968, %v2024
    %vm2582 = vcmp.eq.s32.totalorder %v967, %v2040
    %vm2583 = vcmp.eq.s32.totalorder %v968, %v2040
    %vm2584 = vcmp.eq.s32.totalorder %v967, %v2056
    %vm2585 = vcmp.eq.s32.totalorder %v968, %v2056
    %vm2586 = vcmp.eq.s32.totalorder %v967, %v2072
    %vm2587 = vcmp.eq.s32.totalorder %v968, %v2072
    %vm2588 = vcmp.eq.s32.totalorder %v967, %v2088
    %vm2589 = vcmp.eq.s32.totalorder %v968, %v2088
    %vm2590 = vcmp.eq.s32.totalorder %v967, %v2104
    %vm2591 = vcmp.eq.s32.totalorder %v968, %v2104
    %vm2592 = vcmp.eq.s32.totalorder %v967, %v2120
    %vm2593 = vcmp.eq.s32.totalorder %v968, %v2120
    %vm2594 = vcmp.eq.s32.totalorder %v967, %v2136
    %vm2595 = vcmp.eq.s32.totalorder %v968, %v2136
    %vm2596 = vcmp.eq.s32.totalorder %v967, %v2152
    %vm2597 = vcmp.eq.s32.totalorder %v968, %v2152
    %vm2598 = vcmp.eq.s32.totalorder %v967, %v2168
    %vm2599 = vcmp.eq.s32.totalorder %v968, %v2168
    %vm2600 = vcmp.eq.s32.totalorder %v967, %v2184
    %vm2601 = vcmp.eq.s32.totalorder %v968, %v2184
    %vm2602 = vcmp.eq.s32.totalorder %v967, %v2200
    %vm2603 = vcmp.eq.s32.totalorder %v968, %v2200
    %vm2604 = vcmp.eq.s32.totalorder %v967, %v2216
    %vm2605 = vcmp.eq.s32.totalorder %v968, %v2216
    %vm2606 = vcmp.eq.s32.totalorder %v967, %v2232
    %vm2607 = vcmp.eq.s32.totalorder %v968, %v2232
    %vm2608 = vcmp.eq.s32.totalorder %v967, %v2248
    %vm2609 = vcmp.eq.s32.totalorder %v968, %v2248
    %vm2610 = vcmp.eq.s32.totalorder %v967, %v2264
    %vm2611 = vcmp.eq.s32.totalorder %v968, %v2264
    %vm2612 = vcmp.eq.s32.totalorder %v967, %v2280
    %vm2613 = vcmp.eq.s32.totalorder %v968, %v2280
    %vm2614 = vcmp.eq.s32.totalorder %v967, %v2296
    %vm2615 = vcmp.eq.s32.totalorder %v968, %v2296
    %vm2616 = vcmp.eq.s32.totalorder %v967, %v2312
    %vm2617 = vcmp.eq.s32.totalorder %v968, %v2312
    %vm2618 = vcmp.eq.s32.totalorder %v967, %v2328
    %vm2619 = vcmp.eq.s32.totalorder %v968, %v2328
    %vm2620 = vcmp.eq.s32.totalorder %v967, %v2344
    %vm2621 = vcmp.eq.s32.totalorder %v968, %v2344
    %vm2622 = vcmp.eq.s32.totalorder %v967, %v2360
    %vm2623 = vcmp.eq.s32.totalorder %v968, %v2360
    %vm2624 = vcmp.eq.s32.totalorder %v967, %v2376
    %vm2625 = vcmp.eq.s32.totalorder %v968, %v2376
    %vm2626 = vcmp.eq.s32.totalorder %v967, %v2392
    %vm2627 = vcmp.eq.s32.totalorder %v968, %v2392
    %vm2628 = vcmp.eq.s32.totalorder %v967, %v2408
    %vm2629 = vcmp.eq.s32.totalorder %v968, %v2408
    %vm2630 = vcmp.eq.s32.totalorder %v967, %v2424
    %vm2631 = vcmp.eq.s32.totalorder %v968, %v2424
    %vm2632 = vcmp.eq.s32.totalorder %v967, %v2440
    %vm2633 = vcmp.eq.s32.totalorder %v968, %v2440
    %v2634 = vsel %vm2506, 1, 0
    %v2635 = vsel %vm2507, 1, 0
    %v2636 = vsel %vm2508, 1, 0
    %v2637 = vsel %vm2509, 1, 0
    %v2638 = vsel %vm2510, 1, 0
    %v2639 = vsel %vm2511, 1, 0
    %v2640 = vsel %vm2512, 1, 0
    %v2641 = vsel %vm2513, 1, 0
    %v2642 = vsel %vm2514, 1, 0
    %v2643 = vsel %vm2515, 1, 0
    %v2644 = vsel %vm2516, 1, 0
    %v2645 = vsel %vm2517, 1, 0
    %v2646 = vsel %vm2518, 1, 0
    %v2647 = vsel %vm2519, 1, 0
    %v2648 = vsel %vm2520, 1, 0
    %v2649 = vsel %vm2521, 1, 0
    %v2650 = vsel %vm2522, 1, 0
    %v2651 = vsel %vm2523, 1, 0
    %v2652 = vsel %vm2524, 1, 0
    %v2653 = vsel %vm2525, 1, 0
    %v2654 = vsel %vm2526, 1, 0
    %v2655 = vsel %vm2527, 1, 0
    %v2656 = vsel %vm2528, 1, 0
    %v2657 = vsel %vm2529, 1, 0
    %v2658 = vsel %vm2530, 1, 0
    %v2659 = vsel %vm2531, 1, 0
    %v2660 = vsel %vm2532, 1, 0
    %v2661 = vsel %vm2533, 1, 0
    %v2662 = vsel %vm2534, 1, 0
    %v2663 = vsel %vm2535, 1, 0
    %v2664 = vsel %vm2536, 1, 0
    %v2665 = vsel %vm2537, 1, 0
    %v2666 = vsel %vm2538, 1, 0
    %v2667 = vsel %vm2539, 1, 0
    %v2668 = vsel %vm2540, 1, 0
    %v2669 = vsel %vm2541, 1, 0
    %v2670 = vsel %vm2542, 1, 0
    %v2671 = vsel %vm2543, 1, 0
    %v2672 = vsel %vm2544, 1, 0
    %v2673 = vsel %vm2545, 1, 0
    %v2674 = vsel %vm2546, 1, 0
    %v2675 = vsel %vm2547, 1, 0
    %v2676 = vsel %vm2548, 1, 0
    %v2677 = vsel %vm2549, 1, 0
    %v2678 = vsel %vm2550, 1, 0
    %v2679 = vsel %vm2551, 1, 0
    %v2680 = vsel %vm2552, 1, 0
    %v2681 = vsel %vm2553, 1, 0
    %v2682 = vsel %vm2554, 1, 0
    %v2683 = vsel %vm2555, 1, 0
    %v2684 = vsel %vm2556, 1, 0
    %v2685 = vsel %vm2557, 1, 0
    %v2686 = vsel %vm2558, 1, 0
    %v2687 = vsel %vm2559, 1, 0
    %v2688 = vsel %vm2560, 1, 0
    %v2689 = vsel %vm2561, 1, 0
    %v2690 = vsel %vm2562, 1, 0
    %v2691 = vsel %vm2563, 1, 0
    %v2692 = vsel %vm2564, 1, 0
    %v2693 = vsel %vm2565, 1, 0
    %v2694 = vsel %vm2566, 1, 0
    %v2695 = vsel %vm2567, 1, 0
    %v2696 = vsel %vm2568, 1, 0
    %v2697 = vsel %vm2569, 1, 0
    %v2698 = vsel %vm2570, 1, 0
    %v2699 = vsel %vm2571, 1, 0
    %v2700 = vsel %vm2572, 1, 0
    %v2701 = vsel %vm2573, 1, 0
    %v2702 = vsel %vm2574, 1, 0
    %v2703 = vsel %vm2575, 1, 0
    %v2704 = vsel %vm2576, 1, 0
    %v2705 = vsel %vm2577, 1, 0
    %v2706 = vsel %vm2578, 1, 0
    %v2707 = vsel %vm2579, 1, 0
    %v2708 = vsel %vm2580, 1, 0
    %v2709 = vsel %vm2581, 1, 0
    %v2710 = vsel %vm2582, 1, 0
    %v2711 = vsel %vm2583, 1, 0
    %v2712 = vsel %vm2584, 1, 0
    %v2713 = vsel %vm2585, 1, 0
    %v2714 = vsel %vm2586, 1, 0
    %v2715 = vsel %vm2587, 1, 0
    %v2716 = vsel %vm2588, 1, 0
    %v2717 = vsel %vm2589, 1, 0
    %v2718 = vsel %vm2590, 1, 0
    %v2719 = vsel %vm2591, 1, 0
    %v2720 = vsel %vm2592, 1, 0
    %v2721 = vsel %vm2593, 1, 0
    %v2722 = vsel %vm2594, 1, 0
    %v2723 = vsel %vm2595, 1, 0
    %v2724 = vsel %vm2596, 1, 0
    %v2725 = vsel %vm2597, 1, 0
    %v2726 = vsel %vm2598, 1, 0
    %v2727 = vsel %vm2599, 1, 0
    %v2728 = vsel %vm2600, 1, 0
    %v2729 = vsel %vm2601, 1, 0
    %v2730 = vsel %vm2602, 1, 0
    %v2731 = vsel %vm2603, 1, 0
    %v2732 = vsel %vm2604, 1, 0
    %v2733 = vsel %vm2605, 1, 0
    %v2734 = vsel %vm2606, 1, 0
    %v2735 = vsel %vm2607, 1, 0
    %v2736 = vsel %vm2608, 1, 0
    %v2737 = vsel %vm2609, 1, 0
    %v2738 = vsel %vm2610, 1, 0
    %v2739 = vsel %vm2611, 1, 0
    %v2740 = vsel %vm2612, 1, 0
    %v2741 = vsel %vm2613, 1, 0
    %v2742 = vsel %vm2614, 1, 0
    %v2743 = vsel %vm2615, 1, 0
    %v2744 = vsel %vm2616, 1, 0
    %v2745 = vsel %vm2617, 1, 0
    %v2746 = vsel %vm2618, 1, 0
    %v2747 = vsel %vm2619, 1, 0
    %v2748 = vsel %vm2620, 1, 0
    %v2749 = vsel %vm2621, 1, 0
    %v2750 = vsel %vm2622, 1, 0
    %v2751 = vsel %vm2623, 1, 0
    %v2752 = vsel %vm2624, 1, 0
    %v2753 = vsel %vm2625, 1, 0
    %v2754 = vsel %vm2626, 1, 0
    %v2755 = vsel %vm2627, 1, 0
    %v2756 = vsel %vm2628, 1, 0
    %v2757 = vsel %vm2629, 1, 0
    %v2758 = vsel %vm2630, 1, 0
    %v2759 = vsel %vm2631, 1, 0
    %v2760 = vsel %vm2632, 1, 0
    %v2761 = vsel %vm2633, 1, 0
    %v2762 = vcvt.s32.f32 %v2634
    %v2763 = vcvt.s32.f32 %v2635
    %v2764 = vcvt.s32.f32 %v2636
    %v2765 = vcvt.s32.f32 %v2637
    %v2766 = vcvt.s32.f32 %v2638
    %v2767 = vcvt.s32.f32 %v2639
    %v2768 = vcvt.s32.f32 %v2640
    %v2769 = vcvt.s32.f32 %v2641
    %v2770 = vcvt.s32.f32 %v2642
    %v2771 = vcvt.s32.f32 %v2643
    %v2772 = vcvt.s32.f32 %v2644
    %v2773 = vcvt.s32.f32 %v2645
    %v2774 = vcvt.s32.f32 %v2646
    %v2775 = vcvt.s32.f32 %v2647
    %v2776 = vcvt.s32.f32 %v2648
    %v2777 = vcvt.s32.f32 %v2649
    %v2778 = vcvt.s32.f32 %v2650
    %v2779 = vcvt.s32.f32 %v2651
    %v2780 = vcvt.s32.f32 %v2652
    %v2781 = vcvt.s32.f32 %v2653
    %v2782 = vcvt.s32.f32 %v2654
    %v2783 = vcvt.s32.f32 %v2655
    %v2784 = vcvt.s32.f32 %v2656
    %v2785 = vcvt.s32.f32 %v2657
    %v2786 = vcvt.s32.f32 %v2658
    %v2787 = vcvt.s32.f32 %v2659
    %v2788 = vcvt.s32.f32 %v2660
    %v2789 = vcvt.s32.f32 %v2661
    %v2790 = vcvt.s32.f32 %v2662
    %v2791 = vcvt.s32.f32 %v2663
    %v2792 = vcvt.s32.f32 %v2664
    %v2793 = vcvt.s32.f32 %v2665
    %v2794 = vcvt.s32.f32 %v2666
    %v2795 = vcvt.s32.f32 %v2667
    %v2796 = vcvt.s32.f32 %v2668
    %v2797 = vcvt.s32.f32 %v2669
    %v2798 = vcvt.s32.f32 %v2670
    %v2799 = vcvt.s32.f32 %v2671
    %v2800 = vcvt.s32.f32 %v2672
    %v2801 = vcvt.s32.f32 %v2673
    %v2802 = vcvt.s32.f32 %v2674
    %v2803 = vcvt.s32.f32 %v2675
    %v2804 = vcvt.s32.f32 %v2676
    %v2805 = vcvt.s32.f32 %v2677
    %v2806 = vcvt.s32.f32 %v2678
    %v2807 = vcvt.s32.f32 %v2679
    %v2808 = vcvt.s32.f32 %v2680
    %v2809 = vcvt.s32.f32 %v2681
    %v2810 = vcvt.s32.f32 %v2682
    %v2811 = vcvt.s32.f32 %v2683
    %v2812 = vcvt.s32.f32 %v2684
    %v2813 = vcvt.s32.f32 %v2685
    %v2814 = vcvt.s32.f32 %v2686
    %v2815 = vcvt.s32.f32 %v2687
    %v2816 = vcvt.s32.f32 %v2688
    %v2817 = vcvt.s32.f32 %v2689
    %v2818 = vcvt.s32.f32 %v2690
    %v2819 = vcvt.s32.f32 %v2691
    %v2820 = vcvt.s32.f32 %v2692
    %v2821 = vcvt.s32.f32 %v2693
    %v2822 = vcvt.s32.f32 %v2694
    %v2823 = vcvt.s32.f32 %v2695
    %v2824 = vcvt.s32.f32 %v2696
    %v2825 = vcvt.s32.f32 %v2697
    %v2826 = vcvt.s32.f32 %v2698
    %v2827 = vcvt.s32.f32 %v2699
    %v2828 = vcvt.s32.f32 %v2700
    %v2829 = vcvt.s32.f32 %v2701
    %v2830 = vcvt.s32.f32 %v2702
    %v2831 = vcvt.s32.f32 %v2703
    %v2832 = vcvt.s32.f32 %v2704
    %v2833 = vcvt.s32.f32 %v2705
    %v2834 = vcvt.s32.f32 %v2706
    %v2835 = vcvt.s32.f32 %v2707
    %v2836 = vcvt.s32.f32 %v2708
    %v2837 = vcvt.s32.f32 %v2709
    %v2838 = vcvt.s32.f32 %v2710
    %v2839 = vcvt.s32.f32 %v2711
    %v2840 = vcvt.s32.f32 %v2712
    %v2841 = vcvt.s32.f32 %v2713
    %v2842 = vcvt.s32.f32 %v2714
    %v2843 = vcvt.s32.f32 %v2715
    %v2844 = vcvt.s32.f32 %v2716
    %v2845 = vcvt.s32.f32 %v2717
    %v2846 = vcvt.s32.f32 %v2718
    %v2847 = vcvt.s32.f32 %v2719
    %v2848 = vcvt.s32.f32 %v2720
    %v2849 = vcvt.s32.f32 %v2721
    %v2850 = vcvt.s32.f32 %v2722
    %v2851 = vcvt.s32.f32 %v2723
    %v2852 = vcvt.s32.f32 %v2724
    %v2853 = vcvt.s32.f32 %v2725
    %v2854 = vcvt.s32.f32 %v2726
    %v2855 = vcvt.s32.f32 %v2727
    %v2856 = vcvt.s32.f32 %v2728
    %v2857 = vcvt.s32.f32 %v2729
    %v2858 = vcvt.s32.f32 %v2730
    %v2859 = vcvt.s32.f32 %v2731
    %v2860 = vcvt.s32.f32 %v2732
    %v2861 = vcvt.s32.f32 %v2733
    %v2862 = vcvt.s32.f32 %v2734
    %v2863 = vcvt.s32.f32 %v2735
    %v2864 = vcvt.s32.f32 %v2736
    %v2865 = vcvt.s32.f32 %v2737
    %v2866 = vcvt.s32.f32 %v2738
    %v2867 = vcvt.s32.f32 %v2739
    %v2868 = vcvt.s32.f32 %v2740
    %v2869 = vcvt.s32.f32 %v2741
    %v2870 = vcvt.s32.f32 %v2742
    %v2871 = vcvt.s32.f32 %v2743
    %v2872 = vcvt.s32.f32 %v2744
    %v2873 = vcvt.s32.f32 %v2745
    %v2874 = vcvt.s32.f32 %v2746
    %v2875 = vcvt.s32.f32 %v2747
    %v2876 = vcvt.s32.f32 %v2748
    %v2877 = vcvt.s32.f32 %v2749
    %v2878 = vcvt.s32.f32 %v2750
    %v2879 = vcvt.s32.f32 %v2751
    %v2880 = vcvt.s32.f32 %v2752
    %v2881 = vcvt.s32.f32 %v2753
    %v2882 = vcvt.s32.f32 %v2754
    %v2883 = vcvt.s32.f32 %v2755
    %v2884 = vcvt.s32.f32 %v2756
    %v2885 = vcvt.s32.f32 %v2757
    %v2886 = vcvt.s32.f32 %v2758
    %v2887 = vcvt.s32.f32 %v2759
    %v2888 = vcvt.s32.f32 %v2760
    %v2889 = vcvt.s32.f32 %v2761
    %v2890 = vld [vmem:[%s2] sm:$0xff]
    %v2891 = vld [vmem:[%s2 + $0x8] sm:$0xff]
    %v2892 = vld [vmem:[%s2 + $0x10] sm:$0xff]
    %v2893 = vld [vmem:[%s2 + $0x18] sm:$0xff]
    %v2894 = vld [vmem:[%s2 + $0x20] sm:$0xff]
    %v2895 = vld [vmem:[%s2 + $0x28] sm:$0xff]
    %v2896 = vld [vmem:[%s2 + $0x30] sm:$0xff]
    %v2897 = vld [vmem:[%s2 + $0x38] sm:$0xff]
    %v2898 = vld [vmem:[%s2 + $0x40] sm:$0xff]
    %v2899 = vld [vmem:[%s2 + $0x48] sm:$0xff]
    %v2900 = vld [vmem:[%s2 + $0x50] sm:$0xff]
    %v2901 = vld [vmem:[%s2 + $0x58] sm:$0xff]
    %v2902 = vld [vmem:[%s2 + $0x60] sm:$0xff]
    %v2903 = vld [vmem:[%s2 + $0x68] sm:$0xff]
    %v2904 = vld [vmem:[%s2 + $0x70] sm:$0xff]
    %v2905 = vld [vmem:[%s2 + $0x78] sm:$0xff]
    %v2906 = vld [vmem:[%s2 + $0x80] sm:$0xff]
    %v2907 = vld [vmem:[%s2 + $0x88] sm:$0xff]
    %v2908 = vld [vmem:[%s2 + $0x90] sm:$0xff]
    %v2909 = vld [vmem:[%s2 + $0x98] sm:$0xff]
    %v2910 = vld [vmem:[%s2 + $0xa0] sm:$0xff]
    %v2911 = vld [vmem:[%s2 + $0xa8] sm:$0xff]
    %v2912 = vld [vmem:[%s2 + $0xb0] sm:$0xff]
    %v2913 = vld [vmem:[%s2 + $0xb8] sm:$0xff]
    %v2914 = vld [vmem:[%s2 + $0xc0] sm:$0xff]
    %v2915 = vld [vmem:[%s2 + $0xc8] sm:$0xff]
    %v2916 = vld [vmem:[%s2 + $0xd0] sm:$0xff]
    %v2917 = vld [vmem:[%s2 + $0xd8] sm:$0xff]
    %v2918 = vld [vmem:[%s2 + $0xe0] sm:$0xff]
    %v2919 = vld [vmem:[%s2 + $0xe8] sm:$0xff]
    %v2920 = vld [vmem:[%s2 + $0xf0] sm:$0xff]
    %v2921 = vld [vmem:[%s2 + $0xf8] sm:$0xff]
    %2922 = vmatpush.msra.mxu0 %v2905
    %2923 = vmatpush.msra.mxu0 %v2904
    %2924 = vmatpush.msra.mxu0 %v2903
    %2925 = vmatpush.msra.mxu0 %v2902
    %2926 = vmatpush.msra.mxu0 %v2901
    %2927 = vmatpush.msra.mxu0 %v2900
    %2928 = vmatpush.msra.mxu0 %v2899
    %2929 = vmatpush.msra.mxu0 %v2898
    %2930 = vmatpush.msra.mxu0 %v2897
    %2931 = vmatpush.msra.mxu0 %v2896
    %2932 = vmatpush.msra.mxu0 %v2895
    %2933 = vmatpush.msra.mxu0 %v2894
    %2934 = vmatpush.msra.mxu0 %v2893
    %2935 = vmatpush.msra.mxu0 %v2892
    %2936 = vmatpush.msra.mxu0 %v2891
    %2937 = vmatpush.msra.mxu0 %v2890
    %2938 = vmatmul.f32.gmra.mxu0 %v2762
    %v2939 = vpop.f32.mrf.mxu0
    %v2940 = vadd.f32 0.0, %v2939
    %2941 = vmatmul.f32.gmra.mxu0 %v2764
    %v2942 = vpop.f32.mrf.mxu0
    %v2943 = vadd.f32 0.0, %v2942
    %2944 = vmatmul.f32.gmra.mxu0 %v2766
    %v2945 = vpop.f32.mrf.mxu0
    %v2946 = vadd.f32 0.0, %v2945
    %2947 = vmatmul.f32.gmra.mxu0 %v2768
    %v2948 = vpop.f32.mrf.mxu0
    %v2949 = vadd.f32 0.0, %v2948
    %2950 = vmatmul.f32.gmra.mxu0 %v2770
    %v2951 = vpop.f32.mrf.mxu0
    %v2952 = vadd.f32 0.0, %v2951
    %2953 = vmatmul.f32.gmra.mxu0 %v2772
    %v2954 = vpop.f32.mrf.mxu0
    %v2955 = vadd.f32 0.0, %v2954
    %2956 = vmatmul.f32.gmra.mxu0 %v2774
    %v2957 = vpop.f32.mrf.mxu0
    %v2958 = vadd.f32 0.0, %v2957
    %2959 = vmatmul.f32.gmra.mxu0 %v2776
    %v2960 = vpop.f32.mrf.mxu0
    %v2961 = vadd.f32 0.0, %v2960
    %2962 = vmatmul.f32.gmra.mxu0 %v2778
    %v2963 = vpop.f32.mrf.mxu0
    %v2964 = vadd.f32 0.0, %v2963
    %2965 = vmatmul.f32.gmra.mxu0 %v2780
    %v2966 = vpop.f32.mrf.mxu0
    %v2967 = vadd.f32 0.0, %v2966
    %2968 = vmatmul.f32.gmra.mxu0 %v2782
    %v2969 = vpop.f32.mrf.mxu0
    %v2970 = vadd.f32 0.0, %v2969
    %2971 = vmatmul.f32.gmra.mxu0 %v2784
    %v2972 = vpop.f32.mrf.mxu0
    %v2973 = vadd.f32 0.0, %v2972
    %2974 = vmatmul.f32.gmra.mxu0 %v2786
    %v2975 = vpop.f32.mrf.mxu0
    %v2976 = vadd.f32 0.0, %v2975
    %2977 = vmatmul.f32.gmra.mxu0 %v2788
    %v2978 = vpop.f32.mrf.mxu0
    %v2979 = vadd.f32 0.0, %v2978
    %2980 = vmatmul.f32.gmra.mxu0 %v2790
    %v2981 = vpop.f32.mrf.mxu0
    %v2982 = vadd.f32 0.0, %v2981
    %2983 = vmatmul.f32.gmra.mxu0 %v2792
    %v2984 = vpop.f32.mrf.mxu0
    %v2985 = vadd.f32 0.0, %v2984
    %2986 = vmatmul.f32.gmra.mxu0 %v2794
    %v2987 = vpop.f32.mrf.mxu0
    %v2988 = vadd.f32 0.0, %v2987
    %2989 = vmatmul.f32.gmra.mxu0 %v2796
    %v2990 = vpop.f32.mrf.mxu0
    %v2991 = vadd.f32 0.0, %v2990
    %2992 = vmatmul.f32.gmra.mxu0 %v2798
    %v2993 = vpop.f32.mrf.mxu0
    %v2994 = vadd.f32 0.0, %v2993
    %2995 = vmatmul.f32.gmra.mxu0 %v2800
    %v2996 = vpop.f32.mrf.mxu0
    %v2997 = vadd.f32 0.0, %v2996
    %2998 = vmatmul.f32.gmra.mxu0 %v2802
    %v2999 = vpop.f32.mrf.mxu0
    %v3000 = vadd.f32 0.0, %v2999
    %3001 = vmatmul.f32.gmra.mxu0 %v2804
    %v3002 = vpop.f32.mrf.mxu0
    %v3003 = vadd.f32 0.0, %v3002
    %3004 = vmatmul.f32.gmra.mxu0 %v2806
    %v3005 = vpop.f32.mrf.mxu0
    %v3006 = vadd.f32 0.0, %v3005
    %3007 = vmatmul.f32.gmra.mxu0 %v2808
    %v3008 = vpop.f32.mrf.mxu0
    %v3009 = vadd.f32 0.0, %v3008
    %3010 = vmatmul.f32.gmra.mxu0 %v2810
    %v3011 = vpop.f32.mrf.mxu0
    %v3012 = vadd.f32 0.0, %v3011
    %3013 = vmatmul.f32.gmra.mxu0 %v2812
    %v3014 = vpop.f32.mrf.mxu0
    %v3015 = vadd.f32 0.0, %v3014
    %3016 = vmatmul.f32.gmra.mxu0 %v2814
    %v3017 = vpop.f32.mrf.mxu0
    %v3018 = vadd.f32 0.0, %v3017
    %3019 = vmatmul.f32.gmra.mxu0 %v2816
    %v3020 = vpop.f32.mrf.mxu0
    %v3021 = vadd.f32 0.0, %v3020
    %3022 = vmatmul.f32.gmra.mxu0 %v2818
    %v3023 = vpop.f32.mrf.mxu0
    %v3024 = vadd.f32 0.0, %v3023
    %3025 = vmatmul.f32.gmra.mxu0 %v2820
    %v3026 = vpop.f32.mrf.mxu0
    %v3027 = vadd.f32 0.0, %v3026
    %3028 = vmatmul.f32.gmra.mxu0 %v2822
    %v3029 = vpop.f32.mrf.mxu0
    %v3030 = vadd.f32 0.0, %v3029
    %3031 = vmatmul.f32.gmra.mxu0 %v2824
    %v3032 = vpop.f32.mrf.mxu0
    %v3033 = vadd.f32 0.0, %v3032
    %3034 = vmatmul.f32.gmra.mxu0 %v2826
    %v3035 = vpop.f32.mrf.mxu0
    %v3036 = vadd.f32 0.0, %v3035
    %3037 = vmatmul.f32.gmra.mxu0 %v2828
    %v3038 = vpop.f32.mrf.mxu0
    %v3039 = vadd.f32 0.0, %v3038
    %3040 = vmatmul.f32.gmra.mxu0 %v2830
    %v3041 = vpop.f32.mrf.mxu0
    %v3042 = vadd.f32 0.0, %v3041
    %3043 = vmatmul.f32.gmra.mxu0 %v2832
    %v3044 = vpop.f32.mrf.mxu0
    %v3045 = vadd.f32 0.0, %v3044
    %3046 = vmatmul.f32.gmra.mxu0 %v2834
    %v3047 = vpop.f32.mrf.mxu0
    %v3048 = vadd.f32 0.0, %v3047
    %3049 = vmatmul.f32.gmra.mxu0 %v2836
    %v3050 = vpop.f32.mrf.mxu0
    %v3051 = vadd.f32 0.0, %v3050
    %3052 = vmatmul.f32.gmra.mxu0 %v2838
    %v3053 = vpop.f32.mrf.mxu0
    %v3054 = vadd.f32 0.0, %v3053
    %3055 = vmatmul.f32.gmra.mxu0 %v2840
    %v3056 = vpop.f32.mrf.mxu0
    %v3057 = vadd.f32 0.0, %v3056
    %3058 = vmatmul.f32.gmra.mxu0 %v2842
    %v3059 = vpop.f32.mrf.mxu0
    %v3060 = vadd.f32 0.0, %v3059
    %3061 = vmatmul.f32.gmra.mxu0 %v2844
    %v3062 = vpop.f32.mrf.mxu0
    %v3063 = vadd.f32 0.0, %v3062
    %3064 = vmatmul.f32.gmra.mxu0 %v2846
    %v3065 = vpop.f32.mrf.mxu0
    %v3066 = vadd.f32 0.0, %v3065
    %3067 = vmatmul.f32.gmra.mxu0 %v2848
    %v3068 = vpop.f32.mrf.mxu0
    %v3069 = vadd.f32 0.0, %v3068
    %3070 = vmatmul.f32.gmra.mxu0 %v2850
    %v3071 = vpop.f32.mrf.mxu0
    %v3072 = vadd.f32 0.0, %v3071
    %3073 = vmatmul.f32.gmra.mxu0 %v2852
    %v3074 = vpop.f32.mrf.mxu0
    %v3075 = vadd.f32 0.0, %v3074
    %3076 = vmatmul.f32.gmra.mxu0 %v2854
    %v3077 = vpop.f32.mrf.mxu0
    %v3078 = vadd.f32 0.0, %v3077
    %3079 = vmatmul.f32.gmra.mxu0 %v2856
    %v3080 = vpop.f32.mrf.mxu0
    %v3081 = vadd.f32 0.0, %v3080
    %3082 = vmatmul.f32.gmra.mxu0 %v2858
    %v3083 = vpop.f32.mrf.mxu0
    %v3084 = vadd.f32 0.0, %v3083
    %3085 = vmatmul.f32.gmra.mxu0 %v2860
    %v3086 = vpop.f32.mrf.mxu0
    %v3087 = vadd.f32 0.0, %v3086
    %3088 = vmatmul.f32.gmra.mxu0 %v2862
    %v3089 = vpop.f32.mrf.mxu0
    %v3090 = vadd.f32 0.0, %v3089
    %3091 = vmatmul.f32.gmra.mxu0 %v2864
    %v3092 = vpop.f32.mrf.mxu0
    %v3093 = vadd.f32 0.0, %v3092
    %3094 = vmatmul.f32.gmra.mxu0 %v2866
    %v3095 = vpop.f32.mrf.mxu0
    %v3096 = vadd.f32 0.0, %v3095
    %3097 = vmatmul.f32.gmra.mxu0 %v2868
    %v3098 = vpop.f32.mrf.mxu0
    %v3099 = vadd.f32 0.0, %v3098
    %3100 = vmatmul.f32.gmra.mxu0 %v2870
    %v3101 = vpop.f32.mrf.mxu0
    %v3102 = vadd.f32 0.0, %v3101
    %3103 = vmatmul.f32.gmra.mxu0 %v2872
    %v3104 = vpop.f32.mrf.mxu0
    %v3105 = vadd.f32 0.0, %v3104
    %3106 = vmatmul.f32.gmra.mxu0 %v2874
    %v3107 = vpop.f32.mrf.mxu0
    %v3108 = vadd.f32 0.0, %v3107
    %3109 = vmatmul.f32.gmra.mxu0 %v2876
    %v3110 = vpop.f32.mrf.mxu0
    %v3111 = vadd.f32 0.0, %v3110
    %3112 = vmatmul.f32.gmra.mxu0 %v2878
    %v3113 = vpop.f32.mrf.mxu0
    %v3114 = vadd.f32 0.0, %v3113
    %3115 = vmatmul.f32.gmra.mxu0 %v2880
    %v3116 = vpop.f32.mrf.mxu0
    %v3117 = vadd.f32 0.0, %v3116
    %3118 = vmatmul.f32.gmra.mxu0 %v2882
    %v3119 = vpop.f32.mrf.mxu0
    %v3120 = vadd.f32 0.0, %v3119
    %3121 = vmatmul.f32.gmra.mxu0 %v2884
    %v3122 = vpop.f32.mrf.mxu0
    %v3123 = vadd.f32 0.0, %v3122
    %3124 = vmatmul.f32.gmra.mxu0 %v2886
    %v3125 = vpop.f32.mrf.mxu0
    %v3126 = vadd.f32 0.0, %v3125
    %3127 = vmatmul.f32.gmra.mxu0 %v2888
    %v3128 = vpop.f32.mrf.mxu0
    %v3129 = vadd.f32 0.0, %v3128
    %3130 = vdwg.mxu0
    %3131 = vmatpush.msra.mxu0 %v2921
    %3132 = vmatpush.msra.mxu0 %v2920
    %3133 = vmatpush.msra.mxu0 %v2919
    %3134 = vmatpush.msra.mxu0 %v2918
    %3135 = vmatpush.msra.mxu0 %v2917
    %3136 = vmatpush.msra.mxu0 %v2916
    %3137 = vmatpush.msra.mxu0 %v2915
    %3138 = vmatpush.msra.mxu0 %v2914
    %3139 = vmatpush.msra.mxu0 %v2913
    %3140 = vmatpush.msra.mxu0 %v2912
    %3141 = vmatpush.msra.mxu0 %v2911
    %3142 = vmatpush.msra.mxu0 %v2910
    %3143 = vmatpush.msra.mxu0 %v2909
    %3144 = vmatpush.msra.mxu0 %v2908
    %3145 = vmatpush.msra.mxu0 %v2907
    %3146 = vmatpush.msra.mxu0 %v2906
    %3147 = vmatmul.f32.gmra.mxu0 %v2763
    %v3148 = vpop.f32.mrf.mxu0
    %v3149 = vadd.f32 %v2940, %v3148
    %3150 = vmatmul.f32.gmra.mxu0 %v2765
    %v3151 = vpop.f32.mrf.mxu0
    %v3152 = vadd.f32 %v2943, %v3151
    %3153 = vmatmul.f32.gmra.mxu0 %v2767
    %v3154 = vpop.f32.mrf.mxu0
    %v3155 = vadd.f32 %v2946, %v3154
    %3156 = vmatmul.f32.gmra.mxu0 %v2769
    %v3157 = vpop.f32.mrf.mxu0
    %v3158 = vadd.f32 %v2949, %v3157
    %3159 = vmatmul.f32.gmra.mxu0 %v2771
    %v3160 = vpop.f32.mrf.mxu0
    %v3161 = vadd.f32 %v2952, %v3160
    %3162 = vmatmul.f32.gmra.mxu0 %v2773
    %v3163 = vpop.f32.mrf.mxu0
    %v3164 = vadd.f32 %v2955, %v3163
    %3165 = vmatmul.f32.gmra.mxu0 %v2775
    %v3166 = vpop.f32.mrf.mxu0
    %v3167 = vadd.f32 %v2958, %v3166
    %3168 = vmatmul.f32.gmra.mxu0 %v2777
    %v3169 = vpop.f32.mrf.mxu0
    %v3170 = vadd.f32 %v2961, %v3169
    %3171 = vmatmul.f32.gmra.mxu0 %v2779
    %v3172 = vpop.f32.mrf.mxu0
    %v3173 = vadd.f32 %v2964, %v3172
    %3174 = vmatmul.f32.gmra.mxu0 %v2781
    %v3175 = vpop.f32.mrf.mxu0
    %v3176 = vadd.f32 %v2967, %v3175
    %3177 = vmatmul.f32.gmra.mxu0 %v2783
    %v3178 = vpop.f32.mrf.mxu0
    %v3179 = vadd.f32 %v2970, %v3178
    %3180 = vmatmul.f32.gmra.mxu0 %v2785
    %v3181 = vpop.f32.mrf.mxu0
    %v3182 = vadd.f32 %v2973, %v3181
    %3183 = vmatmul.f32.gmra.mxu0 %v2787
    %v3184 = vpop.f32.mrf.mxu0
    %v3185 = vadd.f32 %v2976, %v3184
    %3186 = vmatmul.f32.gmra.mxu0 %v2789
    %v3187 = vpop.f32.mrf.mxu0
    %v3188 = vadd.f32 %v2979, %v3187
    %3189 = vmatmul.f32.gmra.mxu0 %v2791
    %v3190 = vpop.f32.mrf.mxu0
    %v3191 = vadd.f32 %v2982, %v3190
    %3192 = vmatmul.f32.gmra.mxu0 %v2793
    %v3193 = vpop.f32.mrf.mxu0
    %v3194 = vadd.f32 %v2985, %v3193
    %3195 = vmatmul.f32.gmra.mxu0 %v2795
    %v3196 = vpop.f32.mrf.mxu0
    %v3197 = vadd.f32 %v2988, %v3196
    %3198 = vmatmul.f32.gmra.mxu0 %v2797
    %v3199 = vpop.f32.mrf.mxu0
    %v3200 = vadd.f32 %v2991, %v3199
    %3201 = vmatmul.f32.gmra.mxu0 %v2799
    %v3202 = vpop.f32.mrf.mxu0
    %v3203 = vadd.f32 %v2994, %v3202
    %3204 = vmatmul.f32.gmra.mxu0 %v2801
    %v3205 = vpop.f32.mrf.mxu0
    %v3206 = vadd.f32 %v2997, %v3205
    %3207 = vmatmul.f32.gmra.mxu0 %v2803
    %v3208 = vpop.f32.mrf.mxu0
    %v3209 = vadd.f32 %v3000, %v3208
    %3210 = vmatmul.f32.gmra.mxu0 %v2805
    %v3211 = vpop.f32.mrf.mxu0
    %v3212 = vadd.f32 %v3003, %v3211
    %3213 = vmatmul.f32.gmra.mxu0 %v2807
    %v3214 = vpop.f32.mrf.mxu0
    %v3215 = vadd.f32 %v3006, %v3214
    %3216 = vmatmul.f32.gmra.mxu0 %v2809
    %v3217 = vpop.f32.mrf.mxu0
    %v3218 = vadd.f32 %v3009, %v3217
    %3219 = vmatmul.f32.gmra.mxu0 %v2811
    %v3220 = vpop.f32.mrf.mxu0
    %v3221 = vadd.f32 %v3012, %v3220
    %3222 = vmatmul.f32.gmra.mxu0 %v2813
    %v3223 = vpop.f32.mrf.mxu0
    %v3224 = vadd.f32 %v3015, %v3223
    %3225 = vmatmul.f32.gmra.mxu0 %v2815
    %v3226 = vpop.f32.mrf.mxu0
    %v3227 = vadd.f32 %v3018, %v3226
    %3228 = vmatmul.f32.gmra.mxu0 %v2817
    %v3229 = vpop.f32.mrf.mxu0
    %v3230 = vadd.f32 %v3021, %v3229
    %3231 = vmatmul.f32.gmra.mxu0 %v2819
    %v3232 = vpop.f32.mrf.mxu0
    %v3233 = vadd.f32 %v3024, %v3232
    %3234 = vmatmul.f32.gmra.mxu0 %v2821
    %v3235 = vpop.f32.mrf.mxu0
    %v3236 = vadd.f32 %v3027, %v3235
    %3237 = vmatmul.f32.gmra.mxu0 %v2823
    %v3238 = vpop.f32.mrf.mxu0
    %v3239 = vadd.f32 %v3030, %v3238
    %3240 = vmatmul.f32.gmra.mxu0 %v2825
    %v3241 = vpop.f32.mrf.mxu0
    %v3242 = vadd.f32 %v3033, %v3241
    %3243 = vmatmul.f32.gmra.mxu0 %v2827
    %v3244 = vpop.f32.mrf.mxu0
    %v3245 = vadd.f32 %v3036, %v3244
    %3246 = vmatmul.f32.gmra.mxu0 %v2829
    %v3247 = vpop.f32.mrf.mxu0
    %v3248 = vadd.f32 %v3039, %v3247
    %3249 = vmatmul.f32.gmra.mxu0 %v2831
    %v3250 = vpop.f32.mrf.mxu0
    %v3251 = vadd.f32 %v3042, %v3250
    %3252 = vmatmul.f32.gmra.mxu0 %v2833
    %v3253 = vpop.f32.mrf.mxu0
    %v3254 = vadd.f32 %v3045, %v3253
    %3255 = vmatmul.f32.gmra.mxu0 %v2835
    %v3256 = vpop.f32.mrf.mxu0
    %v3257 = vadd.f32 %v3048, %v3256
    %3258 = vmatmul.f32.gmra.mxu0 %v2837
    %v3259 = vpop.f32.mrf.mxu0
    %v3260 = vadd.f32 %v3051, %v3259
    %3261 = vmatmul.f32.gmra.mxu0 %v2839
    %v3262 = vpop.f32.mrf.mxu0
    %v3263 = vadd.f32 %v3054, %v3262
    %3264 = vmatmul.f32.gmra.mxu0 %v2841
    %v3265 = vpop.f32.mrf.mxu0
    %v3266 = vadd.f32 %v3057, %v3265
    %3267 = vmatmul.f32.gmra.mxu0 %v2843
    %v3268 = vpop.f32.mrf.mxu0
    %v3269 = vadd.f32 %v3060, %v3268
    %3270 = vmatmul.f32.gmra.mxu0 %v2845
    %v3271 = vpop.f32.mrf.mxu0
    %v3272 = vadd.f32 %v3063, %v3271
    %3273 = vmatmul.f32.gmra.mxu0 %v2847
    %v3274 = vpop.f32.mrf.mxu0
    %v3275 = vadd.f32 %v3066, %v3274
    %3276 = vmatmul.f32.gmra.mxu0 %v2849
    %v3277 = vpop.f32.mrf.mxu0
    %v3278 = vadd.f32 %v3069, %v3277
    %3279 = vmatmul.f32.gmra.mxu0 %v2851
    %v3280 = vpop.f32.mrf.mxu0
    %v3281 = vadd.f32 %v3072, %v3280
    %3282 = vmatmul.f32.gmra.mxu0 %v2853
    %v3283 = vpop.f32.mrf.mxu0
    %v3284 = vadd.f32 %v3075, %v3283
    %3285 = vmatmul.f32.gmra.mxu0 %v2855
    %v3286 = vpop.f32.mrf.mxu0
    %v3287 = vadd.f32 %v3078, %v3286
    %3288 = vmatmul.f32.gmra.mxu0 %v2857
    %v3289 = vpop.f32.mrf.mxu0
    %v3290 = vadd.f32 %v3081, %v3289
    %3291 = vmatmul.f32.gmra.mxu0 %v2859
    %v3292 = vpop.f32.mrf.mxu0
    %v3293 = vadd.f32 %v3084, %v3292
    %3294 = vmatmul.f32.gmra.mxu0 %v2861
    %v3295 = vpop.f32.mrf.mxu0
    %v3296 = vadd.f32 %v3087, %v3295
    %3297 = vmatmul.f32.gmra.mxu0 %v2863
    %v3298 = vpop.f32.mrf.mxu0
    %v3299 = vadd.f32 %v3090, %v3298
    %3300 = vmatmul.f32.gmra.mxu0 %v2865
    %v3301 = vpop.f32.mrf.mxu0
    %v3302 = vadd.f32 %v3093, %v3301
    %3303 = vmatmul.f32.gmra.mxu0 %v2867
    %v3304 = vpop.f32.mrf.mxu0
    %v3305 = vadd.f32 %v3096, %v3304
    %3306 = vmatmul.f32.gmra.mxu0 %v2869
    %v3307 = vpop.f32.mrf.mxu0
    %v3308 = vadd.f32 %v3099, %v3307
    %3309 = vmatmul.f32.gmra.mxu0 %v2871
    %v3310 = vpop.f32.mrf.mxu0
    %v3311 = vadd.f32 %v3102, %v3310
    %3312 = vmatmul.f32.gmra.mxu0 %v2873
    %v3313 = vpop.f32.mrf.mxu0
    %v3314 = vadd.f32 %v3105, %v3313
    %3315 = vmatmul.f32.gmra.mxu0 %v2875
    %v3316 = vpop.f32.mrf.mxu0
    %v3317 = vadd.f32 %v3108, %v3316
    %3318 = vmatmul.f32.gmra.mxu0 %v2877
    %v3319 = vpop.f32.mrf.mxu0
    %v3320 = vadd.f32 %v3111, %v3319
    %3321 = vmatmul.f32.gmra.mxu0 %v2879
    %v3322 = vpop.f32.mrf.mxu0
    %v3323 = vadd.f32 %v3114, %v3322
    %3324 = vmatmul.f32.gmra.mxu0 %v2881
    %v3325 = vpop.f32.mrf.mxu0
    %v3326 = vadd.f32 %v3117, %v3325
    %3327 = vmatmul.f32.gmra.mxu0 %v2883
    %v3328 = vpop.f32.mrf.mxu0
    %v3329 = vadd.f32 %v3120, %v3328
    %3330 = vmatmul.f32.gmra.mxu0 %v2885
    %v3331 = vpop.f32.mrf.mxu0
    %v3332 = vadd.f32 %v3123, %v3331
    %3333 = vmatmul.f32.gmra.mxu0 %v2887
    %v3334 = vpop.f32.mrf.mxu0
    %v3335 = vadd.f32 %v3126, %v3334
    %3336 = vmatmul.f32.gmra.mxu0 %v2889
    %v3337 = vpop.f32.mrf.mxu0
    %v3338 = vadd.f32 %v3129, %v3337
    %3339 = vdwg.mxu0
    %3340 = vst.msk [vmem:[%s4] sm:$0xff] %vm93, %v3149
    %3341 = vst.msk [vmem:[%s4 + $0x8] sm:$0xff] %vm93, %v3152
    %3342 = vst.msk [vmem:[%s4 + $0x10] sm:$0xff] %vm93, %v3155
    %3343 = vst.msk [vmem:[%s4 + $0x18] sm:$0xff] %vm93, %v3158
    %3344 = vst.msk [vmem:[%s4 + $0x20] sm:$0xff] %vm93, %v3161
    %3345 = vst.msk [vmem:[%s4 + $0x28] sm:$0xff] %vm93, %v3164
    %3346 = vst.msk [vmem:[%s4 + $0x30] sm:$0xff] %vm93, %v3167
    %3347 = vst.msk [vmem:[%s4 + $0x38] sm:$0xff] %vm93, %v3170
    %3348 = vst.msk [vmem:[%s4 + $0x40] sm:$0xff] %vm93, %v3173
    %3349 = vst.msk [vmem:[%s4 + $0x48] sm:$0xff] %vm93, %v3176
    %3350 = vst.msk [vmem:[%s4 + $0x50] sm:$0xff] %vm93, %v3179
    %3351 = vst.msk [vmem:[%s4 + $0x58] sm:$0xff] %vm93, %v3182
    %3352 = vst.msk [vmem:[%s4 + $0x60] sm:$0xff] %vm93, %v3185
    %3353 = vst.msk [vmem:[%s4 + $0x68] sm:$0xff] %vm93, %v3188
    %3354 = vst.msk [vmem:[%s4 + $0x70] sm:$0xff] %vm93, %v3191
    %3355 = vst.msk [vmem:[%s4 + $0x78] sm:$0xff] %vm93, %v3194
    %3356 = vst.msk [vmem:[%s4 + $0x80] sm:$0xff] %vm93, %v3197
    %3357 = vst.msk [vmem:[%s4 + $0x88] sm:$0xff] %vm93, %v3200
    %3358 = vst.msk [vmem:[%s4 + $0x90] sm:$0xff] %vm93, %v3203
    %3359 = vst.msk [vmem:[%s4 + $0x98] sm:$0xff] %vm93, %v3206
    %3360 = vst.msk [vmem:[%s4 + $0xa0] sm:$0xff] %vm93, %v3209
    %3361 = vst.msk [vmem:[%s4 + $0xa8] sm:$0xff] %vm93, %v3212
    %3362 = vst.msk [vmem:[%s4 + $0xb0] sm:$0xff] %vm93, %v3215
    %3363 = vst.msk [vmem:[%s4 + $0xb8] sm:$0xff] %vm93, %v3218
    %3364 = vst.msk [vmem:[%s4 + $0xc0] sm:$0xff] %vm93, %v3221
    %3365 = vst.msk [vmem:[%s4 + $0xc8] sm:$0xff] %vm93, %v3224
    %3366 = vst.msk [vmem:[%s4 + $0xd0] sm:$0xff] %vm93, %v3227
    %3367 = vst.msk [vmem:[%s4 + $0xd8] sm:$0xff] %vm93, %v3230
    %3368 = vst.msk [vmem:[%s4 + $0xe0] sm:$0xff] %vm93, %v3233
    %3369 = vst.msk [vmem:[%s4 + $0xe8] sm:$0xff] %vm93, %v3236
    %3370 = vst.msk [vmem:[%s4 + $0xf0] sm:$0xff] %vm93, %v3239
    %3371 = vst.msk [vmem:[%s4 + $0xf8] sm:$0xff] %vm93, %v3242
    %3372 = vst.msk [vmem:[%s4 + $0x100] sm:$0xff] %vm93, %v3245
    %3373 = vst.msk [vmem:[%s4 + $0x108] sm:$0xff] %vm93, %v3248
    %3374 = vst.msk [vmem:[%s4 + $0x110] sm:$0xff] %vm93, %v3251
    %3375 = vst.msk [vmem:[%s4 + $0x118] sm:$0xff] %vm93, %v3254
    %3376 = vst.msk [vmem:[%s4 + $0x120] sm:$0xff] %vm93, %v3257
    %3377 = vst.msk [vmem:[%s4 + $0x128] sm:$0xff] %vm93, %v3260
    %3378 = vst.msk [vmem:[%s4 + $0x130] sm:$0xff] %vm93, %v3263
    %3379 = vst.msk [vmem:[%s4 + $0x138] sm:$0xff] %vm93, %v3266
    %3380 = vst.msk [vmem:[%s4 + $0x140] sm:$0xff] %vm93, %v3269
    %3381 = vst.msk [vmem:[%s4 + $0x148] sm:$0xff] %vm93, %v3272
    %3382 = vst.msk [vmem:[%s4 + $0x150] sm:$0xff] %vm93, %v3275
    %3383 = vst.msk [vmem:[%s4 + $0x158] sm:$0xff] %vm93, %v3278
    %3384 = vst.msk [vmem:[%s4 + $0x160] sm:$0xff] %vm93, %v3281
    %3385 = vst.msk [vmem:[%s4 + $0x168] sm:$0xff] %vm93, %v3284
    %3386 = vst.msk [vmem:[%s4 + $0x170] sm:$0xff] %vm93, %v3287
    %3387 = vst.msk [vmem:[%s4 + $0x178] sm:$0xff] %vm93, %v3290
    %3388 = vst.msk [vmem:[%s4 + $0x180] sm:$0xff] %vm93, %v3293
    %3389 = vst.msk [vmem:[%s4 + $0x188] sm:$0xff] %vm93, %v3296
    %3390 = vst.msk [vmem:[%s4 + $0x190] sm:$0xff] %vm93, %v3299
    %3391 = vst.msk [vmem:[%s4 + $0x198] sm:$0xff] %vm93, %v3302
    %3392 = vst.msk [vmem:[%s4 + $0x1a0] sm:$0xff] %vm93, %v3305
    %3393 = vst.msk [vmem:[%s4 + $0x1a8] sm:$0xff] %vm93, %v3308
    %3394 = vst.msk [vmem:[%s4 + $0x1b0] sm:$0xff] %vm93, %v3311
    %3395 = vst.msk [vmem:[%s4 + $0x1b8] sm:$0xff] %vm93, %v3314
    %3396 = vst.msk [vmem:[%s4 + $0x1c0] sm:$0xff] %vm93, %v3317
    %3397 = vst.msk [vmem:[%s4 + $0x1c8] sm:$0xff] %vm93, %v3320
    %3398 = vst.msk [vmem:[%s4 + $0x1d0] sm:$0xff] %vm93, %v3323
    %3399 = vst.msk [vmem:[%s4 + $0x1d8] sm:$0xff] %vm93, %v3326
    %3400 = vst.msk [vmem:[%s4 + $0x1e0] sm:$0xff] %vm93, %v3329
    %3401 = vst.msk [vmem:[%s4 + $0x1e8] sm:$0xff] %vm93, %v3332
    %3402 = vst.msk [vmem:[%s4 + $0x1f0] sm:$0xff] %vm93, %v3335
    %3403 = vst.msk [vmem:[%s4 + $0x1f8] sm:$0xff] %vm93, %v3338
    %p3404 = scmp.eq.s32.totalorder 0, 0
    // Predicated region
    $region18: #{tpu_custom_call.1} parent=1 // pred_check
      %p3405 = pneg %p3404
    $region19: #{tpu_custom_call.1} parent=1 // pred_check_branch
      %3407 = sbr.rel (%p3405) target = $region21
    $region20: #{tpu_custom_call.1} parent=1 // pred_region
      %vm3408 = vcmask 0
      %3409 = vst.msk [vmem:[#allocation2] sm:$0x1] %vm3408, 0.0
    $region21: #{tpu_custom_call.1} parent=1 // pred_fallthru
      _
    %v3410 = vsub.f32 %v3149, %v21
    %v3411 = vsub.f32 %v3152, %v22
    %v3412 = vsub.f32 %v3155, %v23
    %v3413 = vsub.f32 %v3158, %v24
    %v3414 = vsub.f32 %v3161, %v25
    %v3415 = vsub.f32 %v3164, %v26
    %v3416 = vsub.f32 %v3167, %v27
    %v3417 = vsub.f32 %v3170, %v28
    %v3418 = vsub.f32 %v3173, %v29
    %v3419 = vsub.f32 %v3176, %v30
    %v3420 = vsub.f32 %v3179, %v31
    %v3421 = vsub.f32 %v3182, %v32
    %v3422 = vsub.f32 %v3185, %v33
    %v3423 = vsub.f32 %v3188, %v34
    %v3424 = vsub.f32 %v3191, %v35
    %v3425 = vsub.f32 %v3194, %v36
    %v3426 = vsub.f32 %v3197, %v37
    %v3427 = vsub.f32 %v3200, %v38
    %v3428 = vsub.f32 %v3203, %v39
    %v3429 = vsub.f32 %v3206, %v40
    %v3430 = vsub.f32 %v3209, %v41
    %v3431 = vsub.f32 %v3212, %v42
    %v3432 = vsub.f32 %v3215, %v43
    %v3433 = vsub.f32 %v3218, %v44
    %v3434 = vsub.f32 %v3221, %v45
    %v3435 = vsub.f32 %v3224, %v46
    %v3436 = vsub.f32 %v3227, %v47
    %v3437 = vsub.f32 %v3230, %v48
    %v3438 = vsub.f32 %v3233, %v49
    %v3439 = vsub.f32 %v3236, %v50
    %v3440 = vsub.f32 %v3239, %v51
    %v3441 = vsub.f32 %v3242, %v52
    %v3442 = vsub.f32 %v3245, %v53
    %v3443 = vsub.f32 %v3248, %v54
    %v3444 = vsub.f32 %v3251, %v55
    %v3445 = vsub.f32 %v3254, %v56
    %v3446 = vsub.f32 %v3257, %v57
    %v3447 = vsub.f32 %v3260, %v58
    %v3448 = vsub.f32 %v3263, %v59
    %v3449 = vsub.f32 %v3266, %v60
    %v3450 = vsub.f32 %v3269, %v61
    %v3451 = vsub.f32 %v3272, %v62
    %v3452 = vsub.f32 %v3275, %v63
    %v3453 = vsub.f32 %v3278, %v64
    %v3454 = vsub.f32 %v3281, %v65
    %v3455 = vsub.f32 %v3284, %v66
    %v3456 = vsub.f32 %v3287, %v67
    %v3457 = vsub.f32 %v3290, %v68
    %v3458 = vsub.f32 %v3293, %v69
    %v3459 = vsub.f32 %v3296, %v70
    %v3460 = vsub.f32 %v3299, %v71
    %v3461 = vsub.f32 %v3302, %v72
    %v3462 = vsub.f32 %v3305, %v73
    %v3463 = vsub.f32 %v3308, %v74
    %v3464 = vsub.f32 %v3311, %v75
    %v3465 = vsub.f32 %v3314, %v76
    %v3466 = vsub.f32 %v3317, %v77
    %v3467 = vsub.f32 %v3320, %v78
    %v3468 = vsub.f32 %v3323, %v79
    %v3469 = vsub.f32 %v3326, %v80
    %v3470 = vsub.f32 %v3329, %v81
    %v3471 = vsub.f32 %v3332, %v82
    %v3472 = vsub.f32 %v3335, %v83
    %v3473 = vsub.f32 %v3338, %v84
    %v3474 = vld [vmem:[#allocation2] sm:$0x1]
    %v3475 = vmul.f32 %v3410, %v3410
    %v3476 = vmul.f32 %v3411, %v3411
    %v3477 = vmul.f32 %v3412, %v3412
    %v3478 = vmul.f32 %v3413, %v3413
    %v3479 = vmul.f32 %v3414, %v3414
    %v3480 = vmul.f32 %v3415, %v3415
    %v3481 = vmul.f32 %v3416, %v3416
    %v3482 = vmul.f32 %v3417, %v3417
    %v3483 = vmul.f32 %v3418, %v3418
    %v3484 = vmul.f32 %v3419, %v3419
    %v3485 = vmul.f32 %v3420, %v3420
    %v3486 = vmul.f32 %v3421, %v3421
    %v3487 = vmul.f32 %v3422, %v3422
    %v3488 = vmul.f32 %v3423, %v3423
    %v3489 = vmul.f32 %v3424, %v3424
    %v3490 = vmul.f32 %v3425, %v3425
    %v3491 = vmul.f32 %v3426, %v3426
    %v3492 = vmul.f32 %v3427, %v3427
    %v3493 = vmul.f32 %v3428, %v3428
    %v3494 = vmul.f32 %v3429, %v3429
    %v3495 = vmul.f32 %v3430, %v3430
    %v3496 = vmul.f32 %v3431, %v3431
    %v3497 = vmul.f32 %v3432, %v3432
    %v3498 = vmul.f32 %v3433, %v3433
    %v3499 = vmul.f32 %v3434, %v3434
    %v3500 = vmul.f32 %v3435, %v3435
    %v3501 = vmul.f32 %v3436, %v3436
    %v3502 = vmul.f32 %v3437, %v3437
    %v3503 = vmul.f32 %v3438, %v3438
    %v3504 = vmul.f32 %v3439, %v3439
    %v3505 = vmul.f32 %v3440, %v3440
    %v3506 = vmul.f32 %v3441, %v3441
    %v3507 = vmul.f32 %v3442, %v3442
    %v3508 = vmul.f32 %v3443, %v3443
    %v3509 = vmul.f32 %v3444, %v3444
    %v3510 = vmul.f32 %v3445, %v3445
    %v3511 = vmul.f32 %v3446, %v3446
    %v3512 = vmul.f32 %v3447, %v3447
    %v3513 = vmul.f32 %v3448, %v3448
    %v3514 = vmul.f32 %v3449, %v3449
    %v3515 = vmul.f32 %v3450, %v3450
    %v3516 = vmul.f32 %v3451, %v3451
    %v3517 = vmul.f32 %v3452, %v3452
    %v3518 = vmul.f32 %v3453, %v3453
    %v3519 = vmul.f32 %v3454, %v3454
    %v3520 = vmul.f32 %v3455, %v3455
    %v3521 = vmul.f32 %v3456, %v3456
    %v3522 = vmul.f32 %v3457, %v3457
    %v3523 = vmul.f32 %v3458, %v3458
    %v3524 = vmul.f32 %v3459, %v3459
    %v3525 = vmul.f32 %v3460, %v3460
    %v3526 = vmul.f32 %v3461, %v3461
    %v3527 = vmul.f32 %v3462, %v3462
    %v3528 = vmul.f32 %v3463, %v3463
    %v3529 = vmul.f32 %v3464, %v3464
    %v3530 = vmul.f32 %v3465, %v3465
    %v3531 = vmul.f32 %v3466, %v3466
    %v3532 = vmul.f32 %v3467, %v3467
    %v3533 = vmul.f32 %v3468, %v3468
    %v3534 = vmul.f32 %v3469, %v3469
    %v3535 = vmul.f32 %v3470, %v3470
    %v3536 = vmul.f32 %v3471, %v3471
    %v3537 = vmul.f32 %v3472, %v3472
    %v3538 = vmul.f32 %v3473, %v3473
    %v3539 = vsel %vm93, %v3475, 0.0
    %v3540 = vsel %vm93, %v3476, 0.0
    %v3541 = vadd.f32 %v3539, %v3540
    %v3542 = vsel %vm93, %v3477, 0.0
    %v3543 = vadd.f32 %v3541, %v3542
    %v3544 = vsel %vm93, %v3478, 0.0
    %v3545 = vadd.f32 %v3543, %v3544
    %v3546 = vsel %vm93, %v3479, 0.0
    %v3547 = vadd.f32 %v3545, %v3546
    %v3548 = vsel %vm93, %v3480, 0.0
    %v3549 = vadd.f32 %v3547, %v3548
    %v3550 = vsel %vm93, %v3481, 0.0
    %v3551 = vadd.f32 %v3549, %v3550
    %v3552 = vsel %vm93, %v3482, 0.0
    %v3553 = vadd.f32 %v3551, %v3552
    %v3554 = vsel %vm93, %v3483, 0.0
    %v3555 = vadd.f32 %v3553, %v3554
    %v3556 = vsel %vm93, %v3484, 0.0
    %v3557 = vadd.f32 %v3555, %v3556
    %v3558 = vsel %vm93, %v3485, 0.0
    %v3559 = vadd.f32 %v3557, %v3558
    %v3560 = vsel %vm93, %v3486, 0.0
    %v3561 = vadd.f32 %v3559, %v3560
    %v3562 = vsel %vm93, %v3487, 0.0
    %v3563 = vadd.f32 %v3561, %v3562
    %v3564 = vsel %vm93, %v3488, 0.0
    %v3565 = vadd.f32 %v3563, %v3564
    %v3566 = vsel %vm93, %v3489, 0.0
    %v3567 = vadd.f32 %v3565, %v3566
    %v3568 = vsel %vm93, %v3490, 0.0
    %v3569 = vadd.f32 %v3567, %v3568
    %v3570 = vsel %vm93, %v3491, 0.0
    %v3571 = vadd.f32 %v3569, %v3570
    %v3572 = vsel %vm93, %v3492, 0.0
    %v3573 = vadd.f32 %v3571, %v3572
    %v3574 = vsel %vm93, %v3493, 0.0
    %v3575 = vadd.f32 %v3573, %v3574
    %v3576 = vsel %vm93, %v3494, 0.0
    %v3577 = vadd.f32 %v3575, %v3576
    %v3578 = vsel %vm93, %v3495, 0.0
    %v3579 = vadd.f32 %v3577, %v3578
    %v3580 = vsel %vm93, %v3496, 0.0
    %v3581 = vadd.f32 %v3579, %v3580
    %v3582 = vsel %vm93, %v3497, 0.0
    %v3583 = vadd.f32 %v3581, %v3582
    %v3584 = vsel %vm93, %v3498, 0.0
    %v3585 = vadd.f32 %v3583, %v3584
    %v3586 = vsel %vm93, %v3499, 0.0
    %v3587 = vadd.f32 %v3585, %v3586
    %v3588 = vsel %vm93, %v3500, 0.0
    %v3589 = vadd.f32 %v3587, %v3588
    %v3590 = vsel %vm93, %v3501, 0.0
    %v3591 = vadd.f32 %v3589, %v3590
    %v3592 = vsel %vm93, %v3502, 0.0
    %v3593 = vadd.f32 %v3591, %v3592
    %v3594 = vsel %vm93, %v3503, 0.0
    %v3595 = vadd.f32 %v3593, %v3594
    %v3596 = vsel %vm93, %v3504, 0.0
    %v3597 = vadd.f32 %v3595, %v3596
    %v3598 = vsel %vm93, %v3505, 0.0
    %v3599 = vadd.f32 %v3597, %v3598
    %v3600 = vsel %vm93, %v3506, 0.0
    %v3601 = vadd.f32 %v3599, %v3600
    %v3602 = vsel %vm93, %v3507, 0.0
    %v3603 = vadd.f32 %v3601, %v3602
    %v3604 = vsel %vm93, %v3508, 0.0
    %v3605 = vadd.f32 %v3603, %v3604
    %v3606 = vsel %vm93, %v3509, 0.0
    %v3607 = vadd.f32 %v3605, %v3606
    %v3608 = vsel %vm93, %v3510, 0.0
    %v3609 = vadd.f32 %v3607, %v3608
    %v3610 = vsel %vm93, %v3511, 0.0
    %v3611 = vadd.f32 %v3609, %v3610
    %v3612 = vsel %vm93, %v3512, 0.0
    %v3613 = vadd.f32 %v3611, %v3612
    %v3614 = vsel %vm93, %v3513, 0.0
    %v3615 = vadd.f32 %v3613, %v3614
    %v3616 = vsel %vm93, %v3514, 0.0
    %v3617 = vadd.f32 %v3615, %v3616
    %v3618 = vsel %vm93, %v3515, 0.0
    %v3619 = vadd.f32 %v3617, %v3618
    %v3620 = vsel %vm93, %v3516, 0.0
    %v3621 = vadd.f32 %v3619, %v3620
    %v3622 = vsel %vm93, %v3517, 0.0
    %v3623 = vadd.f32 %v3621, %v3622
    %v3624 = vsel %vm93, %v3518, 0.0
    %v3625 = vadd.f32 %v3623, %v3624
    %v3626 = vsel %vm93, %v3519, 0.0
    %v3627 = vadd.f32 %v3625, %v3626
    %v3628 = vsel %vm93, %v3520, 0.0
    %v3629 = vadd.f32 %v3627, %v3628
    %v3630 = vsel %vm93, %v3521, 0.0
    %v3631 = vadd.f32 %v3629, %v3630
    %v3632 = vsel %vm93, %v3522, 0.0
    %v3633 = vadd.f32 %v3631, %v3632
    %v3634 = vsel %vm93, %v3523, 0.0
    %v3635 = vadd.f32 %v3633, %v3634
    %v3636 = vsel %vm93, %v3524, 0.0
    %v3637 = vadd.f32 %v3635, %v3636
    %v3638 = vsel %vm93, %v3525, 0.0
    %v3639 = vadd.f32 %v3637, %v3638
    %v3640 = vsel %vm93, %v3526, 0.0
    %v3641 = vadd.f32 %v3639, %v3640
    %v3642 = vsel %vm93, %v3527, 0.0
    %v3643 = vadd.f32 %v3641, %v3642
    %v3644 = vsel %vm93, %v3528, 0.0
    %v3645 = vadd.f32 %v3643, %v3644
    %v3646 = vsel %vm93, %v3529, 0.0
    %v3647 = vadd.f32 %v3645, %v3646
    %v3648 = vsel %vm93, %v3530, 0.0
    %v3649 = vadd.f32 %v3647, %v3648
    %v3650 = vsel %vm93, %v3531, 0.0
    %v3651 = vadd.f32 %v3649, %v3650
    %v3652 = vsel %vm93, %v3532, 0.0
    %v3653 = vadd.f32 %v3651, %v3652
    %v3654 = vsel %vm93, %v3533, 0.0
    %v3655 = vadd.f32 %v3653, %v3654
    %v3656 = vsel %vm93, %v3534, 0.0
    %v3657 = vadd.f32 %v3655, %v3656
    %v3658 = vsel %vm93, %v3535, 0.0
    %v3659 = vadd.f32 %v3657, %v3658
    %v3660 = vsel %vm93, %v3536, 0.0
    %v3661 = vadd.f32 %v3659, %v3660
    %v3662 = vsel %vm93, %v3537, 0.0
    %v3663 = vadd.f32 %v3661, %v3662
    %v3664 = vsel %vm93, %v3538, 0.0
    %v3665 = vadd.f32 %v3663, %v3664
    %3666 = vadd.xlane.f32.xlu0 %v3665
    %v3667 = vpop.xlane.xlu0 %3666
    %v3668 = vrot.slane %v3667, 4
    %v3669 = vadd.f32 %v3667, %v3668
    %v3670 = vrot.slane %v3669, 2
    %v3671 = vadd.f32 %v3669, %v3670
    %v3672 = vrot.slane %v3671, 1
    %v3673 = vadd.f32 %v3671, %v3672
    %s3674 = vtos %v3673
    %v3675 = vstv %s3674
    %v3676 = vadd.f32 %v3474, %v3675
    %vm3677 = vcmask 0
    %3678 = vst.msk [vmem:[#allocation2] sm:$0x1] %vm3677, %v3676
    // Predicated region
    $region22: #{tpu_custom_call.1} parent=1 // pred_check
      %p3679 = pneg %p3404
    $region23: #{tpu_custom_call.1} parent=1 // pred_check_branch
      %3681 = sbr.rel (%p3679) target = $region25
    $region24: #{tpu_custom_call.1} parent=1 // pred_region
      %v3682 = vld [vmem:[#allocation2] sm:$0x1]
      %v3683 = vmul.f32 %v3682, 7.6293945e-05
      %3684 = vst.msk [vmem:[#allocation2] sm:$0x1] %vm3677, %v3683
    $region25: #{tpu_custom_call.1} parent=1 // pred_fallthru
      _
    // Predicated region
    $region26: #{tpu_custom_call.1} parent=1 // pred_check
      _
    $region27: #{tpu_custom_call.1} parent=1 // pred_check_branch
      %3686 = sbr.rel (0) target = $region29
    $region28: #{tpu_custom_call.1} parent=1 // pred_region
      _
    $region29: #{tpu_custom_call.1} parent=1 // pred_fallthru
      _
    // Predicated region
    $region30: #{tpu_custom_call.1} parent=1 // pred_check
      _
    $region31: #{tpu_custom_call.1} parent=1 // pred_check_branch
      %3688 = sbr.rel (0) target = $region33
    $region32: #{tpu_custom_call.1} parent=1 // pred_region
      _
    $region33: #{tpu_custom_call.1} parent=1 // pred_fallthru
      _
    // Predicated region
    $region34: #{tpu_custom_call.1} parent=1 // pred_check
      _
    $region35: #{tpu_custom_call.1} parent=1 // pred_check_branch
      %3690 = sbr.rel (0) target = $region37
    $region36: #{tpu_custom_call.1} parent=1 // pred_region
      %3692 = vsyncadd [#allocation3], 0
      %s3694 = sshll.u32 [#allocation2], 4
      %s3695 = int_to_ptr.vmem [resolvable:$true] %s3694
      %s3696 = sshll.u32 %s6, 4
      %s3697 = int_to_ptr.hbm [resolvable:$true] %s3696
      %3699 = dma.vmem_to_hbm [thread:$0]  %s3695, 16, %s3697, [#allocation3]
    $region37: #{tpu_custom_call.1} parent=1 // pred_fallthru
      _
    // Predicated region
    $region38: #{tpu_custom_call.1} parent=1 // pred_check
      _
    $region39: #{tpu_custom_call.1} parent=1 // pred_check_branch
      %3701 = sbr.rel (0) target = $region41
    $region40: #{tpu_custom_call.1} parent=1 // pred_region
      _
    $region41: #{tpu_custom_call.1} parent=1 // pred_fallthru
      _
    // Predicated region
    $region42: #{tpu_custom_call.1} parent=1 // pred_check
      _
    $region43: #{tpu_custom_call.1} parent=1 // pred_check_branch
      %3703 = sbr.rel (0) target = $region45
    $region44: #{tpu_custom_call.1} parent=1 // pred_region
      _
    $region45: #{tpu_custom_call.1} parent=1 // pred_fallthru
      _
    // Predicated region
    $region46: #{tpu_custom_call.1} parent=1 // pred_check
      _
    $region47: #{tpu_custom_call.1} parent=1 // pred_check_branch
      %3705 = sbr.rel (0) target = $region49
    $region48: #{tpu_custom_call.1} parent=1 // pred_region
      %3707 = dma.done [#allocation3], 16
    $region49: #{tpu_custom_call.1} parent=1 // pred_fallthru
      _
    %3708 = vsyncpa [#allocation3], 1

</llo_original>
